<compile_context>
chip_gen: v7x
topology: tpu7x:2x2x1
jax: 0.10.0
libtpu: 0.0.40
codegen_flags: <defaults>
</compile_context>

<pallas_src>
import math
from functools import partial

import jax
import jax.numpy as jnp
from jax.experimental import pallas as pl
from jax.experimental.pallas import tpu as pltpu

LN_EPS = 1e-5  # PyTorch layer_norm_eps default


def _layernorm(x, w, b):
    mean = jnp.mean(x, axis=-1, keepdims=True)
    var = jnp.mean((x - mean) ** 2, axis=-1, keepdims=True)
    return (x - mean) * jax.lax.rsqrt(var + LN_EPS) * w + b


# ---------------------------------------------------------------------------
# Fused kernel: grid axis = encoder layer index.
#   step 0   : input_fc + positional encoding -> VMEM-resident activation
#   step l   : TransformerEncoderLayer l (post-norm, ReLU FFN, dropout = id)
#   last step: take last token, fc_out -> (B, O) output
# ---------------------------------------------------------------------------
def fused_transformer_kernel(
        x_ref, win_ref, bin_ref, pe_ref,
        wqkv_ref, bqkv_ref, wo_ref, bo_ref,
        ln1w_ref, ln1b_ref, ln2w_ref, ln2b_ref,
        w1_ref, b1_ref, w2_ref, b2_ref,
        wout_ref, bout_ref,
        o_ref,
        h_ref,                      # VMEM scratch: resident (B, S, D) f32
        *, num_heads):
    l = pl.program_id(0)
    num_layers = pl.num_programs(0)
    B, S, D = h_ref.shape
    H = num_heads
    Dh = D // H
    N = B * S
    scale = 1.0 / math.sqrt(Dh)
    bf16 = jnp.bfloat16

    # ---- prologue (layer 0 only): input projection + positional encoding ----
    @pl.when(l == 0)
    def _():
        xin = x_ref[...].reshape(N, x_ref.shape[-1]).astype(bf16)
        y = jnp.einsum("ni,di->nd", xin, win_ref[...],
                       preferred_element_type=jnp.float32) + bin_ref[...]
        h_ref[...] = y.reshape(B, S, D) + pe_ref[...][None, :, :]

    # ---- encoder layer l ----------------------------------------------------
    x = h_ref[...]                              # (B, S, D) f32
    x_flat = x.reshape(N, D)
    xb = x_flat.astype(bf16)

    wq_all = wqkv_ref[0]                        # (H, Dh, D) bf16
    wk_all = wqkv_ref[1]
    wv_all = wqkv_ref[2]
    bq_all = bqkv_ref[0]                        # (H, 1, Dh) f32
    bk_all = bqkv_ref[1]
    bv_all = bqkv_ref[2]
    wo_all = wo_ref[...]                        # (H, D, Dh) bf16

    # Multi-head self-attention. Per-head weights are indexed on a LEADING
    # axis (layout-free); head outputs are accumulated through the output
    # projection so there is no lane-dim slicing and no concatenate.
    attn_out = jnp.broadcast_to(bo_ref[...], (N, D))        # start from bias
    for h in range(H):
        qh = jnp.einsum("ne,de->nd", xb, wq_all[h],
                        preferred_element_type=jnp.float32) + bq_all[h]
        kh = jnp.einsum("ne,de->nd", xb, wk_all[h],
                        preferred_element_type=jnp.float32) + bk_all[h]
        vh = jnp.einsum("ne,de->nd", xb, wv_all[h],
                        preferred_element_type=jnp.float32) + bv_all[h]
        qh = qh.reshape(B, S, Dh)
        kh = kh.reshape(B, S, Dh)
        vh = vh.reshape(B, S, Dh)

        s = jnp.einsum("bqd,bkd->bqk", qh.astype(bf16), kh.astype(bf16),
                       preferred_element_type=jnp.float32) * scale
        s = s - jnp.max(s, axis=-1, keepdims=True)
        p = jnp.exp(s)
        inv = pl.reciprocal(jnp.sum(p, axis=-1, keepdims=True), approx=True)
        attn = p * inv

        ctx = jnp.einsum("bqk,bkd->bqd", attn.astype(bf16), vh.astype(bf16),
                         preferred_element_type=jnp.float32)
        attn_out = attn_out + jnp.einsum(
            "nd,ed->ne", ctx.reshape(N, Dh).astype(bf16), wo_all[h],
            preferred_element_type=jnp.float32)

    # residual + LayerNorm 1 (norm_first=False), f32 math
    h1 = _layernorm(x_flat + attn_out, ln1w_ref[...], ln1b_ref[...])

    # feed-forward: Linear(D->dff) -> ReLU -> Linear(dff->D)
    ff = jnp.einsum("nd,fd->nf", h1.astype(bf16), w1_ref[...],
                    preferred_element_type=jnp.float32) + b1_ref[...]
    ff = jnp.maximum(ff, 0.0)
    ff = jnp.einsum("nf,df->nd", ff.astype(bf16), w2_ref[...],
                    preferred_element_type=jnp.float32) + b2_ref[...]

    # residual + LayerNorm 2
    h2 = _layernorm(h1 + ff, ln2w_ref[...], ln2b_ref[...])
    h_ref[...] = h2.reshape(B, S, D)

    # ---- epilogue (last layer only): last-token output projection ----------
    @pl.when(l == num_layers - 1)
    def _():
        last = h_ref[:, S - 1, :]                # (B, D)
        o_ref[...] = jnp.einsum("bd,od->bo", last.astype(bf16), wout_ref[...],
                                preferred_element_type=jnp.float32) + bout_ref[...]


# ---------------------------------------------------------------------------
# Parameter construction (deterministic, synthetic; PyTorch-native shapes)
# ---------------------------------------------------------------------------
def make_positional_encoding(d_model, max_len=500):
    # Matches the spec module: div_term uses -(10.0 / d_model).
    position = jnp.arange(max_len, dtype=jnp.float32)[:, None]
    div_term = jnp.exp(jnp.arange(0, d_model, 2, dtype=jnp.float32)
                       * -(10.0 / d_model))
    pe = jnp.zeros((max_len, d_model), jnp.float32)
    pe = pe.at[:, 0::2].set(jnp.sin(position * div_term))
    pe = pe.at[:, 1::2].set(jnp.cos(position * div_term))
    return pe  # (max_len, d_model)


def init_params(key, input_dim, model_dim, num_heads, num_layers, output_dim,
                dim_feedforward=2048):
    def nrm(k, shape):
        return (0.02 * jax.random.normal(k, shape)).astype(jnp.float32)

    keys = jax.random.split(key, 4 + num_layers)
    params = {
        "input_fc_w": nrm(keys[0], (model_dim, input_dim)),
        "input_fc_b": nrm(keys[1], (model_dim,)),
        "fc_out_w": nrm(keys[2], (output_dim, model_dim)),
        "fc_out_b": nrm(keys[3], (output_dim,)),
        "pe": make_positional_encoding(model_dim),
        "layers": [],
    }
    for l in range(num_layers):
        lk = jax.random.split(keys[4 + l], 8)
        params["layers"].append({
            "wqkv": nrm(lk[0], (3 * model_dim, model_dim)),
            "bqkv": nrm(lk[1], (3 * model_dim,)),
            "wo": nrm(lk[2], (model_dim, model_dim)),
            "bo": nrm(lk[3], (model_dim,)),
            "ln1w": jnp.ones((model_dim,), jnp.float32),
            "ln1b": jnp.zeros((model_dim,), jnp.float32),
            "ln2w": jnp.ones((model_dim,), jnp.float32),
            "ln2b": jnp.zeros((model_dim,), jnp.float32),
            "w1": nrm(lk[4], (dim_feedforward, model_dim)),
            "b1": nrm(lk[5], (dim_feedforward,)),
            "w2": nrm(lk[6], (model_dim, dim_feedforward)),
            "b2": nrm(lk[7], (model_dim,)),
        })
    return params


# ---------------------------------------------------------------------------
# Forward pass: pure reshape/cast packing on host + ONE fused pallas_call
# ---------------------------------------------------------------------------
def simple_transformer_forward(x, params, num_heads):
    B, S, In = x.shape
    D = params["input_fc_w"].shape[0]
    O = params["fc_out_w"].shape[0]
    L = len(params["layers"])
    H = num_heads
    Dh = D // H
    dff = params["layers"][0]["w1"].shape[0]
    N = B * S

    def stack(name):
        return jnp.stack([lyr[name] for lyr in params["layers"]], axis=0)

    # Stacked, layer-indexed weights (bf16 for MXU operands, f32 for the rest).
    wqkv = stack("wqkv").reshape(L, 3, H, Dh, D).astype(jnp.bfloat16)
    bqkv = stack("bqkv").reshape(L, 3, H, 1, Dh)
    wo = stack("wo").reshape(L, D, H, Dh).transpose(0, 2, 1, 3).astype(jnp.bfloat16)
    bo = stack("bo").reshape(L, 1, D)
    ln1w = stack("ln1w").reshape(L, 1, D)
    ln1b = stack("ln1b").reshape(L, 1, D)
    ln2w = stack("ln2w").reshape(L, 1, D)
    ln2b = stack("ln2b").reshape(L, 1, D)
    w1 = stack("w1").astype(jnp.bfloat16)               # (L, dff, D)
    b1 = stack("b1").reshape(L, 1, dff)
    w2 = stack("w2").astype(jnp.bfloat16)               # (L, D, dff)
    b2 = stack("b2").reshape(L, 1, D)

    win = params["input_fc_w"].astype(jnp.bfloat16)      # (D, In)
    bin_ = params["input_fc_b"].reshape(1, D)
    wout = params["fc_out_w"].astype(jnp.bfloat16)       # (O, D)
    bout = params["fc_out_b"].reshape(1, O)
    pe = params["pe"][:S]                                # (S, D)

    const_args = (x, win, bin_, pe)
    layer_args = (wqkv, bqkv, wo, bo, ln1w, ln1b, ln2w, ln2b, w1, b1, w2, b2)
    tail_args = (wout, bout)

    def const_spec(a):
        nd = a.ndim
        return pl.BlockSpec(a.shape, lambda l, nd=nd: (0,) * nd)

    def layer_spec(a):
        nd = a.ndim
        return pl.BlockSpec((None,) + tuple(a.shape[1:]),
                            lambda l, nd=nd: (l,) + (0,) * (nd - 1))

    in_specs = ([const_spec(a) for a in const_args]
                + [layer_spec(a) for a in layer_args]
                + [const_spec(a) for a in tail_args])

    flops = (L * (2 * N * D * 3 * D          # qkv projections
                  + 4 * B * H * S * S * Dh   # scores + context
                  + 2 * N * D * D            # output projection
                  + 4 * N * D * dff)         # FFN
             + 2 * N * In * D + 2 * B * D * O)
    bytes_accessed = int(sum(a.size * a.dtype.itemsize
                             for a in const_args + layer_args + tail_args)
                         + B * O * 4)
    cost = pl.CostEstimate(flops=int(flops),
                           transcendentals=int(L * B * H * S * S),
                           bytes_accessed=bytes_accessed)

    out = pl.pallas_call(
        partial(fused_transformer_kernel, num_heads=num_heads),
        grid=(L,),
        out_shape=jax.ShapeDtypeStruct((B, O), jnp.float32),
        in_specs=in_specs,
        out_specs=pl.BlockSpec((B, O), lambda l: (0, 0)),
        scratch_shapes=[pltpu.VMEM((B, S, D), jnp.float32)],
        compiler_params=pltpu.CompilerParams(
            dimension_semantics=("arbitrary",),
            vmem_limit_bytes=32 * 1024 * 1024,
        ),
        cost_estimate=cost,
    )(*const_args, *layer_args, *tail_args)
    return out


if __name__ == "__main__":
    # Small shapes consistent with the module's forward:
    #   x: (batch=2, seq=8, input_dim=16); model_dim=32, heads=4, layers=2, out=4
    B, S, INPUT_DIM = 2, 8, 16
    MODEL_DIM, NUM_HEADS, NUM_LAYERS, OUTPUT_DIM = 32, 4, 2, 4

    key = jax.random.PRNGKey(0)
    pkey, xkey = jax.random.split(key)
    params = init_params(pkey, INPUT_DIM, MODEL_DIM, NUM_HEADS, NUM_LAYERS,
                         OUTPUT_DIM)
    x = jax.random.normal(xkey, (B, S, INPUT_DIM), dtype=jnp.float32)

    out = simple_transformer_forward(x, params, NUM_HEADS)
    out = jax.block_until_ready(out)
    assert out.shape == (B, OUTPUT_DIM), out.shape
    # TODO(synk): dropout inside TransformerEncoderLayer is treated as identity
    # (eval-mode semantics); training-mode dropout is not reproduced.
    print("KERNEL_OK")
</pallas_src>

<mosaic_0001>
module attributes {stable_mosaic.version = 11 : i64} {
  func.func @fused_transformer_kernel(%arg0: i32, %arg1: memref<2x8x16xf32, #tpu.memory_space<vmem>>, %arg2: memref<32x16xbf16, #tpu.memory_space<vmem>>, %arg3: memref<1x32xf32, #tpu.memory_space<vmem>>, %arg4: memref<8x32xf32, #tpu.memory_space<vmem>>, %arg5: memref<1x3x4x8x32xbf16, #tpu.memory_space<vmem>>, %arg6: memref<1x3x4x1x8xf32, #tpu.memory_space<vmem>>, %arg7: memref<1x4x32x8xbf16, #tpu.memory_space<vmem>>, %arg8: memref<1x1x32xf32, #tpu.memory_space<vmem>>, %arg9: memref<1x1x32xf32, #tpu.memory_space<vmem>>, %arg10: memref<1x1x32xf32, #tpu.memory_space<vmem>>, %arg11: memref<1x1x32xf32, #tpu.memory_space<vmem>>, %arg12: memref<1x1x32xf32, #tpu.memory_space<vmem>>, %arg13: memref<1x2048x32xbf16, #tpu.memory_space<vmem>>, %arg14: memref<1x1x2048xf32, #tpu.memory_space<vmem>>, %arg15: memref<1x32x2048xbf16, #tpu.memory_space<vmem>>, %arg16: memref<1x1x32xf32, #tpu.memory_space<vmem>>, %arg17: memref<4x32xbf16, #tpu.memory_space<vmem>>, %arg18: memref<1x4xf32, #tpu.memory_space<vmem>>, %arg19: memref<2x4xf32, #tpu.memory_space<vmem>>, %arg20: memref<2x8x32xf32, #tpu.memory_space<vmem>>) attributes {dimension_semantics = [#tpu.dimension_semantics<arbitrary>], iteration_bounds = array<i64: 2>, scalar_prefetch = 0 : i64, scratch_operands = 1 : i64, tpu.core_type = #tpu.core_type<tc>, window_params = [{pipeline_mode = #tpu.pipeline_mode<synchronous>, transform_indices = @transform_0, window_bounds = array<i64: 2, 8, 16>}, {pipeline_mode = #tpu.pipeline_mode<synchronous>, transform_indices = @transform_1, window_bounds = array<i64: 32, 16>}, {pipeline_mode = #tpu.pipeline_mode<synchronous>, transform_indices = @transform_2, window_bounds = array<i64: 1, 32>}, {pipeline_mode = #tpu.pipeline_mode<synchronous>, transform_indices = @transform_3, window_bounds = array<i64: 8, 32>}, {transform_indices = @transform_4, window_bounds = array<i64: 1, 3, 4, 8, 32>}, {transform_indices = @transform_5, window_bounds = array<i64: 1, 3, 4, 1, 8>}, {transform_indices = @transform_6, window_bounds = array<i64: 1, 4, 32, 8>}, {transform_indices = @transform_7, window_bounds = array<i64: 1, 1, 32>}, {transform_indices = @transform_8, window_bounds = array<i64: 1, 1, 32>}, {transform_indices = @transform_9, window_bounds = array<i64: 1, 1, 32>}, {transform_indices = @transform_10, window_bounds = array<i64: 1, 1, 32>}, {transform_indices = @transform_11, window_bounds = array<i64: 1, 1, 32>}, {transform_indices = @transform_12, window_bounds = array<i64: 1, 2048, 32>}, {transform_indices = @transform_13, window_bounds = array<i64: 1, 1, 2048>}, {transform_indices = @transform_14, window_bounds = array<i64: 1, 32, 2048>}, {transform_indices = @transform_15, window_bounds = array<i64: 1, 1, 32>}, {pipeline_mode = #tpu.pipeline_mode<synchronous>, transform_indices = @transform_16, window_bounds = array<i64: 4, 32>}, {pipeline_mode = #tpu.pipeline_mode<synchronous>, transform_indices = @transform_17, window_bounds = array<i64: 1, 4>}, {pipeline_mode = #tpu.pipeline_mode<synchronous>, transform_indices = @transform_18, window_bounds = array<i64: 2, 4>}]} {
    %c0_i32 = arith.constant 0 : i32
    %0 = arith.cmpi eq, %arg0, %c0_i32 : i32
    %1 = arith.extui %0 : i1 to i32
    %c0_i32_0 = arith.constant 0 : i32
    %2 = arith.cmpi ne, %1, %c0_i32_0 : i32
    scf.if %2 {
      %c0_114 = arith.constant 0 : index
      %c0_115 = arith.constant 0 : index
      %c0_116 = arith.constant 0 : index
      %293 = vector.load %arg1[%c0_114, %c0_115, %c0_116] : memref<2x8x16xf32, #tpu.memory_space<vmem>>, vector<2x8x16xf32>
      %294 = vector.shape_cast %293 : vector<2x8x16xf32> to vector<16x16xf32>
      %295 = arith.truncf %294 : vector<16x16xf32> to vector<16x16xbf16>
      %c0_117 = arith.constant 0 : index
      %c0_118 = arith.constant 0 : index
      %296 = vector.load %arg2[%c0_117, %c0_118] : memref<32x16xbf16, #tpu.memory_space<vmem>>, vector<32x16xbf16>
      "tpu.trace_start"() <{level = 10 : i32, message = "ni,di->nd"}> : () -> ()
      %cst_119 = arith.constant dense<0.000000e+00> : vector<16x32xf32>
      %297 = tpu.matmul %295, %296, %cst_119 {dimension_numbers = #tpu.dot_dimension_numbers<[1], [1], [0], [0], [0, 0, 1, 0], [], []>} : vector<16x16xbf16>, vector<32x16xbf16>, vector<16x32xf32> -> vector<16x32xf32>
      "tpu.trace_stop"() : () -> ()
      %c0_120 = arith.constant 0 : index
      %c0_121 = arith.constant 0 : index
      %298 = vector.load %arg3[%c0_120, %c0_121] : memref<1x32xf32, #tpu.memory_space<vmem>>, vector<1x32xf32>
      %299 = vector.broadcast %298 : vector<1x32xf32> to vector<16x32xf32>
      %300 = arith.addf %297, %299 : vector<16x32xf32>
      %301 = vector.shape_cast %300 : vector<16x32xf32> to vector<2x8x32xf32>
      %c0_122 = arith.constant 0 : index
      %c0_123 = arith.constant 0 : index
      %302 = vector.load %arg4[%c0_122, %c0_123] : memref<8x32xf32, #tpu.memory_space<vmem>>, vector<8x32xf32>
      %303 = vector.shape_cast %302 : vector<8x32xf32> to vector<1x8x32xf32>
      %304 = vector.broadcast %303 : vector<1x8x32xf32> to vector<2x8x32xf32>
      %305 = arith.addf %301, %304 : vector<2x8x32xf32>
      %c0_124 = arith.constant 0 : index
      %c0_125 = arith.constant 0 : index
      %c0_126 = arith.constant 0 : index
      %306 = vector.load %arg20[%c0_124, %c0_125, %c0_126] : memref<2x8x32xf32, #tpu.memory_space<vmem>>, vector<2x8x32xf32>
      tpu.vector_store %arg20[%c0_124, %c0_125, %c0_126], %305 {strides = array<i32>} : memref<2x8x32xf32, #tpu.memory_space<vmem>>, vector<2x8x32xf32>,
    } else {
    }
    %c0 = arith.constant 0 : index
    %c0_1 = arith.constant 0 : index
    %c0_2 = arith.constant 0 : index
    %3 = vector.load %arg20[%c0, %c0_1, %c0_2] : memref<2x8x32xf32, #tpu.memory_space<vmem>>, vector<2x8x32xf32>
    %4 = vector.shape_cast %3 : vector<2x8x32xf32> to vector<16x32xf32>
    %5 = arith.truncf %4 : vector<16x32xf32> to vector<16x32xbf16>
    %c0_3 = arith.constant 0 : index
    %c0_4 = arith.constant 0 : index
    %c0_5 = arith.constant 0 : index
    %c0_6 = arith.constant 0 : index
    %c0_7 = arith.constant 0 : index
    %6 = vector.load %arg5[%c0_3, %c0_4, %c0_5, %c0_6, %c0_7] : memref<1x3x4x8x32xbf16, #tpu.memory_space<vmem>>, vector<1x1x4x8x32xbf16>
    %7 = vector.shape_cast %6 : vector<1x1x4x8x32xbf16> to vector<4x8x32xbf16>
    %c0_8 = arith.constant 0 : index
    %c1 = arith.constant 1 : index
    %c0_9 = arith.constant 0 : index
    %c0_10 = arith.constant 0 : index
    %c0_11 = arith.constant 0 : index
    %8 = vector.load %arg5[%c0_8, %c1, %c0_9, %c0_10, %c0_11] : memref<1x3x4x8x32xbf16, #tpu.memory_space<vmem>>, vector<1x1x4x8x32xbf16>
    %9 = vector.shape_cast %8 : vector<1x1x4x8x32xbf16> to vector<4x8x32xbf16>
    %c0_12 = arith.constant 0 : index
    %c2 = arith.constant 2 : index
    %c0_13 = arith.constant 0 : index
    %c0_14 = arith.constant 0 : index
    %c0_15 = arith.constant 0 : index
    %10 = vector.load %arg5[%c0_12, %c2, %c0_13, %c0_14, %c0_15] : memref<1x3x4x8x32xbf16, #tpu.memory_space<vmem>>, vector<1x1x4x8x32xbf16>
    %11 = vector.shape_cast %10 : vector<1x1x4x8x32xbf16> to vector<4x8x32xbf16>
    %c0_16 = arith.constant 0 : index
    %c0_17 = arith.constant 0 : index
    %c0_18 = arith.constant 0 : index
    %c0_19 = arith.constant 0 : index
    %c0_20 = arith.constant 0 : index
    %12 = vector.load %arg6[%c0_16, %c0_17, %c0_18, %c0_19, %c0_20] : memref<1x3x4x1x8xf32, #tpu.memory_space<vmem>>, vector<1x1x4x1x8xf32>
    %13 = vector.shape_cast %12 : vector<1x1x4x1x8xf32> to vector<4x1x8xf32>
    %c0_21 = arith.constant 0 : index
    %c1_22 = arith.constant 1 : index
    %c0_23 = arith.constant 0 : index
    %c0_24 = arith.constant 0 : index
    %c0_25 = arith.constant 0 : index
    %14 = vector.load %arg6[%c0_21, %c1_22, %c0_23, %c0_24, %c0_25] : memref<1x3x4x1x8xf32, #tpu.memory_space<vmem>>, vector<1x1x4x1x8xf32>
    %15 = vector.shape_cast %14 : vector<1x1x4x1x8xf32> to vector<4x1x8xf32>
    %c0_26 = arith.constant 0 : index
    %c2_27 = arith.constant 2 : index
    %c0_28 = arith.constant 0 : index
    %c0_29 = arith.constant 0 : index
    %c0_30 = arith.constant 0 : index
    %16 = vector.load %arg6[%c0_26, %c2_27, %c0_28, %c0_29, %c0_30] : memref<1x3x4x1x8xf32, #tpu.memory_space<vmem>>, vector<1x1x4x1x8xf32>
    %17 = vector.shape_cast %16 : vector<1x1x4x1x8xf32> to vector<4x1x8xf32>
    %c0_31 = arith.constant 0 : index
    %c0_32 = arith.constant 0 : index
    %c0_33 = arith.constant 0 : index
    %c0_34 = arith.constant 0 : index
    %18 = vector.load %arg7[%c0_31, %c0_32, %c0_33, %c0_34] : memref<1x4x32x8xbf16, #tpu.memory_space<vmem>>, vector<1x4x32x8xbf16>
    %19 = vector.shape_cast %18 : vector<1x4x32x8xbf16> to vector<4x32x8xbf16>
    %c0_35 = arith.constant 0 : index
    %c0_36 = arith.constant 0 : index
    %c0_37 = arith.constant 0 : index
    %20 = vector.load %arg8[%c0_35, %c0_36, %c0_37] : memref<1x1x32xf32, #tpu.memory_space<vmem>>, vector<1x1x32xf32>
    %21 = vector.shape_cast %20 : vector<1x1x32xf32> to vector<1x32xf32>
    %22 = vector.shape_cast %21 : vector<1x32xf32> to vector<1x32xf32>
    %23 = vector.broadcast %22 : vector<1x32xf32> to vector<16x32xf32>
    %24 = vector.extract_strided_slice %7 {offsets = [0, 0, 0], sizes = [1, 8, 32], strides = [1, 1, 1]} : vector<4x8x32xbf16> to vector<1x8x32xbf16>
    %25 = vector.shape_cast %24 : vector<1x8x32xbf16> to vector<8x32xbf16>
    "tpu.trace_start"() <{level = 10 : i32, message = "ne,de->nd"}> : () -> ()
    %cst = arith.constant dense<0.000000e+00> : vector<16x8xf32>
    %26 = tpu.matmul %5, %25, %cst {dimension_numbers = #tpu.dot_dimension_numbers<[1], [1], [0], [0], [0, 0, 1, 0], [], []>} : vector<16x32xbf16>, vector<8x32xbf16>, vector<16x8xf32> -> vector<16x8xf32>
    "tpu.trace_stop"() : () -> ()
    %27 = vector.extract_strided_slice %13 {offsets = [0, 0, 0], sizes = [1, 1, 8], strides = [1, 1, 1]} : vector<4x1x8xf32> to vector<1x1x8xf32>
    %28 = vector.shape_cast %27 : vector<1x1x8xf32> to vector<1x8xf32>
    %29 = vector.broadcast %28 : vector<1x8xf32> to vector<16x8xf32>
    %30 = arith.addf %26, %29 : vector<16x8xf32>
    %31 = vector.extract_strided_slice %9 {offsets = [0, 0, 0], sizes = [1, 8, 32], strides = [1, 1, 1]} : vector<4x8x32xbf16> to vector<1x8x32xbf16>
    %32 = vector.shape_cast %31 : vector<1x8x32xbf16> to vector<8x32xbf16>
    "tpu.trace_start"() <{level = 10 : i32, message = "ne,de->nd"}> : () -> ()
    %cst_38 = arith.constant dense<0.000000e+00> : vector<16x8xf32>
    %33 = tpu.matmul %5, %32, %cst_38 {dimension_numbers = #tpu.dot_dimension_numbers<[1], [1], [0], [0], [0, 0, 1, 0], [], []>} : vector<16x32xbf16>, vector<8x32xbf16>, vector<16x8xf32> -> vector<16x8xf32>
    "tpu.trace_stop"() : () -> ()
    %34 = vector.extract_strided_slice %15 {offsets = [0, 0, 0], sizes = [1, 1, 8], strides = [1, 1, 1]} : vector<4x1x8xf32> to vector<1x1x8xf32>
    %35 = vector.shape_cast %34 : vector<1x1x8xf32> to vector<1x8xf32>
    %36 = vector.broadcast %35 : vector<1x8xf32> to vector<16x8xf32>
    %37 = arith.addf %33, %36 : vector<16x8xf32>
    %38 = vector.extract_strided_slice %11 {offsets = [0, 0, 0], sizes = [1, 8, 32], strides = [1, 1, 1]} : vector<4x8x32xbf16> to vector<1x8x32xbf16>
    %39 = vector.shape_cast %38 : vector<1x8x32xbf16> to vector<8x32xbf16>
    "tpu.trace_start"() <{level = 10 : i32, message = "ne,de->nd"}> : () -> ()
    %cst_39 = arith.constant dense<0.000000e+00> : vector<16x8xf32>
    %40 = tpu.matmul %5, %39, %cst_39 {dimension_numbers = #tpu.dot_dimension_numbers<[1], [1], [0], [0], [0, 0, 1, 0], [], []>} : vector<16x32xbf16>, vector<8x32xbf16>, vector<16x8xf32> -> vector<16x8xf32>
    "tpu.trace_stop"() : () -> ()
    %41 = vector.extract_strided_slice %17 {offsets = [0, 0, 0], sizes = [1, 1, 8], strides = [1, 1, 1]} : vector<4x1x8xf32> to vector<1x1x8xf32>
    %42 = vector.shape_cast %41 : vector<1x1x8xf32> to vector<1x8xf32>
    %43 = vector.broadcast %42 : vector<1x8xf32> to vector<16x8xf32>
    %44 = arith.addf %40, %43 : vector<16x8xf32>
    %45 = vector.shape_cast %30 : vector<16x8xf32> to vector<2x8x8xf32>
    %46 = vector.shape_cast %37 : vector<16x8xf32> to vector<2x8x8xf32>
    %47 = vector.shape_cast %44 : vector<16x8xf32> to vector<2x8x8xf32>
    %48 = arith.truncf %45 : vector<2x8x8xf32> to vector<2x8x8xbf16>
    %49 = arith.truncf %46 : vector<2x8x8xf32> to vector<2x8x8xbf16>
    "tpu.trace_start"() <{level = 10 : i32, message = "bqd,bkd->bqk"}> : () -> ()
    %cst_40 = arith.constant dense<0.000000e+00> : vector<2x8x8xf32>
    %50 = tpu.matmul %48, %49, %cst_40 {dimension_numbers = #tpu.dot_dimension_numbers<[2], [2], [1], [1], [0, 0, 0, 1, 1, 1], [0], [0]>} : vector<2x8x8xbf16>, vector<2x8x8xbf16>, vector<2x8x8xf32> -> vector<2x8x8xf32>
    "tpu.trace_stop"() : () -> ()
    %cst_41 = arith.constant 0.353553385 : f32
    %51 = vector.broadcast %cst_41 : f32 to vector<2x8x8xf32>
    %52 = arith.mulf %50, %51 : vector<2x8x8xf32>
    %cst_42 = arith.constant dense<0xFF800000> : vector<2x8xf32>
    %53 = vector.multi_reduction <maximumf>, %52, %cst_42 [2] : vector<2x8x8xf32> to vector<2x8xf32>
    %54 = vector.shape_cast %53 : vector<2x8xf32> to vector<2x8x1xf32>
    %55 = vector.broadcast %54 : vector<2x8x1xf32> to vector<2x8x8xf32>
    %56 = arith.subf %52, %55 : vector<2x8x8xf32>
    %57 = math.exp %56 : vector<2x8x8xf32>
    %cst_43 = arith.constant dense<0.000000e+00> : vector<2x8xf32>
    %58 = vector.multi_reduction <add>, %57, %cst_43 [2] : vector<2x8x8xf32> to vector<2x8xf32>
    %59 = vector.shape_cast %58 : vector<2x8xf32> to vector<2x8x1xf32>
    %60 = tpu.reciprocal %59 {approx = true} : vector<2x8x1xf32> -> vector<2x8x1xf32>
    %61 = vector.broadcast %60 : vector<2x8x1xf32> to vector<2x8x8xf32>
    %62 = arith.mulf %57, %61 : vector<2x8x8xf32>
    %63 = arith.truncf %62 : vector<2x8x8xf32> to vector<2x8x8xbf16>
    %64 = arith.truncf %47 : vector<2x8x8xf32> to vector<2x8x8xbf16>
    "tpu.trace_start"() <{level = 10 : i32, message = "bqk,bkd->bqd"}> : () -> ()
    %cst_44 = arith.constant dense<0.000000e+00> : vector<2x8x8xf32>
    %65 = tpu.matmul %63, %64, %cst_44 {dimension_numbers = #tpu.dot_dimension_numbers<[2], [1], [1], [2], [0, 0, 0, 1, 1, 2], [0], [0]>} : vector<2x8x8xbf16>, vector<2x8x8xbf16>, vector<2x8x8xf32> -> vector<2x8x8xf32>
    "tpu.trace_stop"() : () -> ()
    %66 = vector.shape_cast %65 : vector<2x8x8xf32> to vector<16x8xf32>
    %67 = arith.truncf %66 : vector<16x8xf32> to vector<16x8xbf16>
    %68 = vector.extract_strided_slice %19 {offsets = [0, 0, 0], sizes = [1, 32, 8], strides = [1, 1, 1]} : vector<4x32x8xbf16> to vector<1x32x8xbf16>
    %69 = vector.shape_cast %68 : vector<1x32x8xbf16> to vector<32x8xbf16>
    "tpu.trace_start"() <{level = 10 : i32, message = "nd,ed->ne"}> : () -> ()
    %cst_45 = arith.constant dense<0.000000e+00> : vector<16x32xf32>
    %70 = tpu.matmul %67, %69, %cst_45 {dimension_numbers = #tpu.dot_dimension_numbers<[1], [1], [0], [0], [0, 0, 1, 0], [], []>} : vector<16x8xbf16>, vector<32x8xbf16>, vector<16x32xf32> -> vector<16x32xf32>
    "tpu.trace_stop"() : () -> ()
    %71 = arith.addf %23, %70 : vector<16x32xf32>
    %72 = vector.extract_strided_slice %7 {offsets = [1, 0, 0], sizes = [1, 8, 32], strides = [1, 1, 1]} : vector<4x8x32xbf16> to vector<1x8x32xbf16>
    %73 = vector.shape_cast %72 : vector<1x8x32xbf16> to vector<8x32xbf16>
    "tpu.trace_start"() <{level = 10 : i32, message = "ne,de->nd"}> : () -> ()
    %cst_46 = arith.constant dense<0.000000e+00> : vector<16x8xf32>
    %74 = tpu.matmul %5, %73, %cst_46 {dimension_numbers = #tpu.dot_dimension_numbers<[1], [1], [0], [0], [0, 0, 1, 0], [], []>} : vector<16x32xbf16>, vector<8x32xbf16>, vector<16x8xf32> -> vector<16x8xf32>
    "tpu.trace_stop"() : () -> ()
    %75 = vector.extract_strided_slice %13 {offsets = [1, 0, 0], sizes = [1, 1, 8], strides = [1, 1, 1]} : vector<4x1x8xf32> to vector<1x1x8xf32>
    %76 = vector.shape_cast %75 : vector<1x1x8xf32> to vector<1x8xf32>
    %77 = vector.broadcast %76 : vector<1x8xf32> to vector<16x8xf32>
    %78 = arith.addf %74, %77 : vector<16x8xf32>
    %79 = vector.extract_strided_slice %9 {offsets = [1, 0, 0], sizes = [1, 8, 32], strides = [1, 1, 1]} : vector<4x8x32xbf16> to vector<1x8x32xbf16>
    %80 = vector.shape_cast %79 : vector<1x8x32xbf16> to vector<8x32xbf16>
    "tpu.trace_start"() <{level = 10 : i32, message = "ne,de->nd"}> : () -> ()
    %cst_47 = arith.constant dense<0.000000e+00> : vector<16x8xf32>
    %81 = tpu.matmul %5, %80, %cst_47 {dimension_numbers = #tpu.dot_dimension_numbers<[1], [1], [0], [0], [0, 0, 1, 0], [], []>} : vector<16x32xbf16>, vector<8x32xbf16>, vector<16x8xf32> -> vector<16x8xf32>
    "tpu.trace_stop"() : () -> ()
    %82 = vector.extract_strided_slice %15 {offsets = [1, 0, 0], sizes = [1, 1, 8], strides = [1, 1, 1]} : vector<4x1x8xf32> to vector<1x1x8xf32>
    %83 = vector.shape_cast %82 : vector<1x1x8xf32> to vector<1x8xf32>
    %84 = vector.broadcast %83 : vector<1x8xf32> to vector<16x8xf32>
    %85 = arith.addf %81, %84 : vector<16x8xf32>
    %86 = vector.extract_strided_slice %11 {offsets = [1, 0, 0], sizes = [1, 8, 32], strides = [1, 1, 1]} : vector<4x8x32xbf16> to vector<1x8x32xbf16>
    %87 = vector.shape_cast %86 : vector<1x8x32xbf16> to vector<8x32xbf16>
    "tpu.trace_start"() <{level = 10 : i32, message = "ne,de->nd"}> : () -> ()
    %cst_48 = arith.constant dense<0.000000e+00> : vector<16x8xf32>
    %88 = tpu.matmul %5, %87, %cst_48 {dimension_numbers = #tpu.dot_dimension_numbers<[1], [1], [0], [0], [0, 0, 1, 0], [], []>} : vector<16x32xbf16>, vector<8x32xbf16>, vector<16x8xf32> -> vector<16x8xf32>
    "tpu.trace_stop"() : () -> ()
    %89 = vector.extract_strided_slice %17 {offsets = [1, 0, 0], sizes = [1, 1, 8], strides = [1, 1, 1]} : vector<4x1x8xf32> to vector<1x1x8xf32>
    %90 = vector.shape_cast %89 : vector<1x1x8xf32> to vector<1x8xf32>
    %91 = vector.broadcast %90 : vector<1x8xf32> to vector<16x8xf32>
    %92 = arith.addf %88, %91 : vector<16x8xf32>
    %93 = vector.shape_cast %78 : vector<16x8xf32> to vector<2x8x8xf32>
    %94 = vector.shape_cast %85 : vector<16x8xf32> to vector<2x8x8xf32>
    %95 = vector.shape_cast %92 : vector<16x8xf32> to vector<2x8x8xf32>
    %96 = arith.truncf %93 : vector<2x8x8xf32> to vector<2x8x8xbf16>
    %97 = arith.truncf %94 : vector<2x8x8xf32> to vector<2x8x8xbf16>
    "tpu.trace_start"() <{level = 10 : i32, message = "bqd,bkd->bqk"}> : () -> ()
    %cst_49 = arith.constant dense<0.000000e+00> : vector<2x8x8xf32>
    %98 = tpu.matmul %96, %97, %cst_49 {dimension_numbers = #tpu.dot_dimension_numbers<[2], [2], [1], [1], [0, 0, 0, 1, 1, 1], [0], [0]>} : vector<2x8x8xbf16>, vector<2x8x8xbf16>, vector<2x8x8xf32> -> vector<2x8x8xf32>
    "tpu.trace_stop"() : () -> ()
    %cst_50 = arith.constant 0.353553385 : f32
    %99 = vector.broadcast %cst_50 : f32 to vector<2x8x8xf32>
    %100 = arith.mulf %98, %99 : vector<2x8x8xf32>
    %cst_51 = arith.constant dense<0xFF800000> : vector<2x8xf32>
    %101 = vector.multi_reduction <maximumf>, %100, %cst_51 [2] : vector<2x8x8xf32> to vector<2x8xf32>
    %102 = vector.shape_cast %101 : vector<2x8xf32> to vector<2x8x1xf32>
    %103 = vector.broadcast %102 : vector<2x8x1xf32> to vector<2x8x8xf32>
    %104 = arith.subf %100, %103 : vector<2x8x8xf32>
    %105 = math.exp %104 : vector<2x8x8xf32>
    %cst_52 = arith.constant dense<0.000000e+00> : vector<2x8xf32>
    %106 = vector.multi_reduction <add>, %105, %cst_52 [2] : vector<2x8x8xf32> to vector<2x8xf32>
    %107 = vector.shape_cast %106 : vector<2x8xf32> to vector<2x8x1xf32>
    %108 = tpu.reciprocal %107 {approx = true} : vector<2x8x1xf32> -> vector<2x8x1xf32>
    %109 = vector.broadcast %108 : vector<2x8x1xf32> to vector<2x8x8xf32>
    %110 = arith.mulf %105, %109 : vector<2x8x8xf32>
    %111 = arith.truncf %110 : vector<2x8x8xf32> to vector<2x8x8xbf16>
    %112 = arith.truncf %95 : vector<2x8x8xf32> to vector<2x8x8xbf16>
    "tpu.trace_start"() <{level = 10 : i32, message = "bqk,bkd->bqd"}> : () -> ()
    %cst_53 = arith.constant dense<0.000000e+00> : vector<2x8x8xf32>
    %113 = tpu.matmul %111, %112, %cst_53 {dimension_numbers = #tpu.dot_dimension_numbers<[2], [1], [1], [2], [0, 0, 0, 1, 1, 2], [0], [0]>} : vector<2x8x8xbf16>, vector<2x8x8xbf16>, vector<2x8x8xf32> -> vector<2x8x8xf32>
    "tpu.trace_stop"() : () -> ()
    %114 = vector.shape_cast %113 : vector<2x8x8xf32> to vector<16x8xf32>
    %115 = arith.truncf %114 : vector<16x8xf32> to vector<16x8xbf16>
    %116 = vector.extract_strided_slice %19 {offsets = [1, 0, 0], sizes = [1, 32, 8], strides = [1, 1, 1]} : vector<4x32x8xbf16> to vector<1x32x8xbf16>
    %117 = vector.shape_cast %116 : vector<1x32x8xbf16> to vector<32x8xbf16>
    "tpu.trace_start"() <{level = 10 : i32, message = "nd,ed->ne"}> : () -> ()
    %cst_54 = arith.constant dense<0.000000e+00> : vector<16x32xf32>
    %118 = tpu.matmul %115, %117, %cst_54 {dimension_numbers = #tpu.dot_dimension_numbers<[1], [1], [0], [0], [0, 0, 1, 0], [], []>} : vector<16x8xbf16>, vector<32x8xbf16>, vector<16x32xf32> -> vector<16x32xf32>
    "tpu.trace_stop"() : () -> ()
    %119 = arith.addf %71, %118 : vector<16x32xf32>
    %120 = vector.extract_strided_slice %7 {offsets = [2, 0, 0], sizes = [1, 8, 32], strides = [1, 1, 1]} : vector<4x8x32xbf16> to vector<1x8x32xbf16>
    %121 = vector.shape_cast %120 : vector<1x8x32xbf16> to vector<8x32xbf16>
    "tpu.trace_start"() <{level = 10 : i32, message = "ne,de->nd"}> : () -> ()
    %cst_55 = arith.constant dense<0.000000e+00> : vector<16x8xf32>
    %122 = tpu.matmul %5, %121, %cst_55 {dimension_numbers = #tpu.dot_dimension_numbers<[1], [1], [0], [0], [0, 0, 1, 0], [], []>} : vector<16x32xbf16>, vector<8x32xbf16>, vector<16x8xf32> -> vector<16x8xf32>
    "tpu.trace_stop"() : () -> ()
    %123 = vector.extract_strided_slice %13 {offsets = [2, 0, 0], sizes = [1, 1, 8], strides = [1, 1, 1]} : vector<4x1x8xf32> to vector<1x1x8xf32>
    %124 = vector.shape_cast %123 : vector<1x1x8xf32> to vector<1x8xf32>
    %125 = vector.broadcast %124 : vector<1x8xf32> to vector<16x8xf32>
    %126 = arith.addf %122, %125 : vector<16x8xf32>
    %127 = vector.extract_strided_slice %9 {offsets = [2, 0, 0], sizes = [1, 8, 32], strides = [1, 1, 1]} : vector<4x8x32xbf16> to vector<1x8x32xbf16>
    %128 = vector.shape_cast %127 : vector<1x8x32xbf16> to vector<8x32xbf16>
    "tpu.trace_start"() <{level = 10 : i32, message = "ne,de->nd"}> : () -> ()
    %cst_56 = arith.constant dense<0.000000e+00> : vector<16x8xf32>
    %129 = tpu.matmul %5, %128, %cst_56 {dimension_numbers = #tpu.dot_dimension_numbers<[1], [1], [0], [0], [0, 0, 1, 0], [], []>} : vector<16x32xbf16>, vector<8x32xbf16>, vector<16x8xf32> -> vector<16x8xf32>
    "tpu.trace_stop"() : () -> ()
    %130 = vector.extract_strided_slice %15 {offsets = [2, 0, 0], sizes = [1, 1, 8], strides = [1, 1, 1]} : vector<4x1x8xf32> to vector<1x1x8xf32>
    %131 = vector.shape_cast %130 : vector<1x1x8xf32> to vector<1x8xf32>
    %132 = vector.broadcast %131 : vector<1x8xf32> to vector<16x8xf32>
    %133 = arith.addf %129, %132 : vector<16x8xf32>
    %134 = vector.extract_strided_slice %11 {offsets = [2, 0, 0], sizes = [1, 8, 32], strides = [1, 1, 1]} : vector<4x8x32xbf16> to vector<1x8x32xbf16>
    %135 = vector.shape_cast %134 : vector<1x8x32xbf16> to vector<8x32xbf16>
    "tpu.trace_start"() <{level = 10 : i32, message = "ne,de->nd"}> : () -> ()
    %cst_57 = arith.constant dense<0.000000e+00> : vector<16x8xf32>
    %136 = tpu.matmul %5, %135, %cst_57 {dimension_numbers = #tpu.dot_dimension_numbers<[1], [1], [0], [0], [0, 0, 1, 0], [], []>} : vector<16x32xbf16>, vector<8x32xbf16>, vector<16x8xf32> -> vector<16x8xf32>
    "tpu.trace_stop"() : () -> ()
    %137 = vector.extract_strided_slice %17 {offsets = [2, 0, 0], sizes = [1, 1, 8], strides = [1, 1, 1]} : vector<4x1x8xf32> to vector<1x1x8xf32>
    %138 = vector.shape_cast %137 : vector<1x1x8xf32> to vector<1x8xf32>
    %139 = vector.broadcast %138 : vector<1x8xf32> to vector<16x8xf32>
    %140 = arith.addf %136, %139 : vector<16x8xf32>
    %141 = vector.shape_cast %126 : vector<16x8xf32> to vector<2x8x8xf32>
    %142 = vector.shape_cast %133 : vector<16x8xf32> to vector<2x8x8xf32>
    %143 = vector.shape_cast %140 : vector<16x8xf32> to vector<2x8x8xf32>
    %144 = arith.truncf %141 : vector<2x8x8xf32> to vector<2x8x8xbf16>
    %145 = arith.truncf %142 : vector<2x8x8xf32> to vector<2x8x8xbf16>
    "tpu.trace_start"() <{level = 10 : i32, message = "bqd,bkd->bqk"}> : () -> ()
    %cst_58 = arith.constant dense<0.000000e+00> : vector<2x8x8xf32>
    %146 = tpu.matmul %144, %145, %cst_58 {dimension_numbers = #tpu.dot_dimension_numbers<[2], [2], [1], [1], [0, 0, 0, 1, 1, 1], [0], [0]>} : vector<2x8x8xbf16>, vector<2x8x8xbf16>, vector<2x8x8xf32> -> vector<2x8x8xf32>
    "tpu.trace_stop"() : () -> ()
    %cst_59 = arith.constant 0.353553385 : f32
    %147 = vector.broadcast %cst_59 : f32 to vector<2x8x8xf32>
    %148 = arith.mulf %146, %147 : vector<2x8x8xf32>
    %cst_60 = arith.constant dense<0xFF800000> : vector<2x8xf32>
    %149 = vector.multi_reduction <maximumf>, %148, %cst_60 [2] : vector<2x8x8xf32> to vector<2x8xf32>
    %150 = vector.shape_cast %149 : vector<2x8xf32> to vector<2x8x1xf32>
    %151 = vector.broadcast %150 : vector<2x8x1xf32> to vector<2x8x8xf32>
    %152 = arith.subf %148, %151 : vector<2x8x8xf32>
    %153 = math.exp %152 : vector<2x8x8xf32>
    %cst_61 = arith.constant dense<0.000000e+00> : vector<2x8xf32>
    %154 = vector.multi_reduction <add>, %153, %cst_61 [2] : vector<2x8x8xf32> to vector<2x8xf32>
    %155 = vector.shape_cast %154 : vector<2x8xf32> to vector<2x8x1xf32>
    %156 = tpu.reciprocal %155 {approx = true} : vector<2x8x1xf32> -> vector<2x8x1xf32>
    %157 = vector.broadcast %156 : vector<2x8x1xf32> to vector<2x8x8xf32>
    %158 = arith.mulf %153, %157 : vector<2x8x8xf32>
    %159 = arith.truncf %158 : vector<2x8x8xf32> to vector<2x8x8xbf16>
    %160 = arith.truncf %143 : vector<2x8x8xf32> to vector<2x8x8xbf16>
    "tpu.trace_start"() <{level = 10 : i32, message = "bqk,bkd->bqd"}> : () -> ()
    %cst_62 = arith.constant dense<0.000000e+00> : vector<2x8x8xf32>
    %161 = tpu.matmul %159, %160, %cst_62 {dimension_numbers = #tpu.dot_dimension_numbers<[2], [1], [1], [2], [0, 0, 0, 1, 1, 2], [0], [0]>} : vector<2x8x8xbf16>, vector<2x8x8xbf16>, vector<2x8x8xf32> -> vector<2x8x8xf32>
    "tpu.trace_stop"() : () -> ()
    %162 = vector.shape_cast %161 : vector<2x8x8xf32> to vector<16x8xf32>
    %163 = arith.truncf %162 : vector<16x8xf32> to vector<16x8xbf16>
    %164 = vector.extract_strided_slice %19 {offsets = [2, 0, 0], sizes = [1, 32, 8], strides = [1, 1, 1]} : vector<4x32x8xbf16> to vector<1x32x8xbf16>
    %165 = vector.shape_cast %164 : vector<1x32x8xbf16> to vector<32x8xbf16>
    "tpu.trace_start"() <{level = 10 : i32, message = "nd,ed->ne"}> : () -> ()
    %cst_63 = arith.constant dense<0.000000e+00> : vector<16x32xf32>
    %166 = tpu.matmul %163, %165, %cst_63 {dimension_numbers = #tpu.dot_dimension_numbers<[1], [1], [0], [0], [0, 0, 1, 0], [], []>} : vector<16x8xbf16>, vector<32x8xbf16>, vector<16x32xf32> -> vector<16x32xf32>
    "tpu.trace_stop"() : () -> ()
    %167 = arith.addf %119, %166 : vector<16x32xf32>
    %168 = vector.extract_strided_slice %7 {offsets = [3, 0, 0], sizes = [1, 8, 32], strides = [1, 1, 1]} : vector<4x8x32xbf16> to vector<1x8x32xbf16>
    %169 = vector.shape_cast %168 : vector<1x8x32xbf16> to vector<8x32xbf16>
    "tpu.trace_start"() <{level = 10 : i32, message = "ne,de->nd"}> : () -> ()
    %cst_64 = arith.constant dense<0.000000e+00> : vector<16x8xf32>
    %170 = tpu.matmul %5, %169, %cst_64 {dimension_numbers = #tpu.dot_dimension_numbers<[1], [1], [0], [0], [0, 0, 1, 0], [], []>} : vector<16x32xbf16>, vector<8x32xbf16>, vector<16x8xf32> -> vector<16x8xf32>
    "tpu.trace_stop"() : () -> ()
    %171 = vector.extract_strided_slice %13 {offsets = [3, 0, 0], sizes = [1, 1, 8], strides = [1, 1, 1]} : vector<4x1x8xf32> to vector<1x1x8xf32>
    %172 = vector.shape_cast %171 : vector<1x1x8xf32> to vector<1x8xf32>
    %173 = vector.broadcast %172 : vector<1x8xf32> to vector<16x8xf32>
    %174 = arith.addf %170, %173 : vector<16x8xf32>
    %175 = vector.extract_strided_slice %9 {offsets = [3, 0, 0], sizes = [1, 8, 32], strides = [1, 1, 1]} : vector<4x8x32xbf16> to vector<1x8x32xbf16>
    %176 = vector.shape_cast %175 : vector<1x8x32xbf16> to vector<8x32xbf16>
    "tpu.trace_start"() <{level = 10 : i32, message = "ne,de->nd"}> : () -> ()
    %cst_65 = arith.constant dense<0.000000e+00> : vector<16x8xf32>
    %177 = tpu.matmul %5, %176, %cst_65 {dimension_numbers = #tpu.dot_dimension_numbers<[1], [1], [0], [0], [0, 0, 1, 0], [], []>} : vector<16x32xbf16>, vector<8x32xbf16>, vector<16x8xf32> -> vector<16x8xf32>
    "tpu.trace_stop"() : () -> ()
    %178 = vector.extract_strided_slice %15 {offsets = [3, 0, 0], sizes = [1, 1, 8], strides = [1, 1, 1]} : vector<4x1x8xf32> to vector<1x1x8xf32>
    %179 = vector.shape_cast %178 : vector<1x1x8xf32> to vector<1x8xf32>
    %180 = vector.broadcast %179 : vector<1x8xf32> to vector<16x8xf32>
    %181 = arith.addf %177, %180 : vector<16x8xf32>
    %182 = vector.extract_strided_slice %11 {offsets = [3, 0, 0], sizes = [1, 8, 32], strides = [1, 1, 1]} : vector<4x8x32xbf16> to vector<1x8x32xbf16>
    %183 = vector.shape_cast %182 : vector<1x8x32xbf16> to vector<8x32xbf16>
    "tpu.trace_start"() <{level = 10 : i32, message = "ne,de->nd"}> : () -> ()
    %cst_66 = arith.constant dense<0.000000e+00> : vector<16x8xf32>
    %184 = tpu.matmul %5, %183, %cst_66 {dimension_numbers = #tpu.dot_dimension_numbers<[1], [1], [0], [0], [0, 0, 1, 0], [], []>} : vector<16x32xbf16>, vector<8x32xbf16>, vector<16x8xf32> -> vector<16x8xf32>
    "tpu.trace_stop"() : () -> ()
    %185 = vector.extract_strided_slice %17 {offsets = [3, 0, 0], sizes = [1, 1, 8], strides = [1, 1, 1]} : vector<4x1x8xf32> to vector<1x1x8xf32>
    %186 = vector.shape_cast %185 : vector<1x1x8xf32> to vector<1x8xf32>
    %187 = vector.broadcast %186 : vector<1x8xf32> to vector<16x8xf32>
    %188 = arith.addf %184, %187 : vector<16x8xf32>
    %189 = vector.shape_cast %174 : vector<16x8xf32> to vector<2x8x8xf32>
    %190 = vector.shape_cast %181 : vector<16x8xf32> to vector<2x8x8xf32>
    %191 = vector.shape_cast %188 : vector<16x8xf32> to vector<2x8x8xf32>
    %192 = arith.truncf %189 : vector<2x8x8xf32> to vector<2x8x8xbf16>
    %193 = arith.truncf %190 : vector<2x8x8xf32> to vector<2x8x8xbf16>
    "tpu.trace_start"() <{level = 10 : i32, message = "bqd,bkd->bqk"}> : () -> ()
    %cst_67 = arith.constant dense<0.000000e+00> : vector<2x8x8xf32>
    %194 = tpu.matmul %192, %193, %cst_67 {dimension_numbers = #tpu.dot_dimension_numbers<[2], [2], [1], [1], [0, 0, 0, 1, 1, 1], [0], [0]>} : vector<2x8x8xbf16>, vector<2x8x8xbf16>, vector<2x8x8xf32> -> vector<2x8x8xf32>
    "tpu.trace_stop"() : () -> ()
    %cst_68 = arith.constant 0.353553385 : f32
    %195 = vector.broadcast %cst_68 : f32 to vector<2x8x8xf32>
    %196 = arith.mulf %194, %195 : vector<2x8x8xf32>
    %cst_69 = arith.constant dense<0xFF800000> : vector<2x8xf32>
    %197 = vector.multi_reduction <maximumf>, %196, %cst_69 [2] : vector<2x8x8xf32> to vector<2x8xf32>
    %198 = vector.shape_cast %197 : vector<2x8xf32> to vector<2x8x1xf32>
    %199 = vector.broadcast %198 : vector<2x8x1xf32> to vector<2x8x8xf32>
    %200 = arith.subf %196, %199 : vector<2x8x8xf32>
    %201 = math.exp %200 : vector<2x8x8xf32>
    %cst_70 = arith.constant dense<0.000000e+00> : vector<2x8xf32>
    %202 = vector.multi_reduction <add>, %201, %cst_70 [2] : vector<2x8x8xf32> to vector<2x8xf32>
    %203 = vector.shape_cast %202 : vector<2x8xf32> to vector<2x8x1xf32>
    %204 = tpu.reciprocal %203 {approx = true} : vector<2x8x1xf32> -> vector<2x8x1xf32>
    %205 = vector.broadcast %204 : vector<2x8x1xf32> to vector<2x8x8xf32>
    %206 = arith.mulf %201, %205 : vector<2x8x8xf32>
    %207 = arith.truncf %206 : vector<2x8x8xf32> to vector<2x8x8xbf16>
    %208 = arith.truncf %191 : vector<2x8x8xf32> to vector<2x8x8xbf16>
    "tpu.trace_start"() <{level = 10 : i32, message = "bqk,bkd->bqd"}> : () -> ()
    %cst_71 = arith.constant dense<0.000000e+00> : vector<2x8x8xf32>
    %209 = tpu.matmul %207, %208, %cst_71 {dimension_numbers = #tpu.dot_dimension_numbers<[2], [1], [1], [2], [0, 0, 0, 1, 1, 2], [0], [0]>} : vector<2x8x8xbf16>, vector<2x8x8xbf16>, vector<2x8x8xf32> -> vector<2x8x8xf32>
    "tpu.trace_stop"() : () -> ()
    %210 = vector.shape_cast %209 : vector<2x8x8xf32> to vector<16x8xf32>
    %211 = arith.truncf %210 : vector<16x8xf32> to vector<16x8xbf16>
    %212 = vector.extract_strided_slice %19 {offsets = [3, 0, 0], sizes = [1, 32, 8], strides = [1, 1, 1]} : vector<4x32x8xbf16> to vector<1x32x8xbf16>
    %213 = vector.shape_cast %212 : vector<1x32x8xbf16> to vector<32x8xbf16>
    "tpu.trace_start"() <{level = 10 : i32, message = "nd,ed->ne"}> : () -> ()
    %cst_72 = arith.constant dense<0.000000e+00> : vector<16x32xf32>
    %214 = tpu.matmul %211, %213, %cst_72 {dimension_numbers = #tpu.dot_dimension_numbers<[1], [1], [0], [0], [0, 0, 1, 0], [], []>} : vector<16x8xbf16>, vector<32x8xbf16>, vector<16x32xf32> -> vector<16x32xf32>
    "tpu.trace_stop"() : () -> ()
    %215 = arith.addf %167, %214 : vector<16x32xf32>
    %216 = arith.addf %4, %215 : vector<16x32xf32>
    %c0_73 = arith.constant 0 : index
    %c0_74 = arith.constant 0 : index
    %c0_75 = arith.constant 0 : index
    %217 = vector.load %arg9[%c0_73, %c0_74, %c0_75] : memref<1x1x32xf32, #tpu.memory_space<vmem>>, vector<1x1x32xf32>
    %218 = vector.shape_cast %217 : vector<1x1x32xf32> to vector<1x32xf32>
    %c0_76 = arith.constant 0 : index
    %c0_77 = arith.constant 0 : index
    %c0_78 = arith.constant 0 : index
    %219 = vector.load %arg10[%c0_76, %c0_77, %c0_78] : memref<1x1x32xf32, #tpu.memory_space<vmem>>, vector<1x1x32xf32>
    %220 = vector.shape_cast %219 : vector<1x1x32xf32> to vector<1x32xf32>
    %cst_79 = arith.constant dense<0.000000e+00> : vector<16xf32>
    %221 = vector.multi_reduction <add>, %216, %cst_79 [1] : vector<16x32xf32> to vector<16xf32>
    %222 = vector.shape_cast %221 : vector<16xf32> to vector<16x1xf32>
    %cst_80 = arith.constant 3.200000e+01 : f32
    %223 = vector.broadcast %cst_80 : f32 to vector<16x1xf32>
    %224 = arith.divf %222, %223 : vector<16x1xf32>
    %225 = vector.broadcast %224 : vector<16x1xf32> to vector<16x32xf32>
    %226 = arith.subf %216, %225 : vector<16x32xf32>
    %227 = arith.mulf %226, %226 : vector<16x32xf32>
    %cst_81 = arith.constant dense<0.000000e+00> : vector<16xf32>
    %228 = vector.multi_reduction <add>, %227, %cst_81 [1] : vector<16x32xf32> to vector<16xf32>
    %229 = vector.shape_cast %228 : vector<16xf32> to vector<16x1xf32>
    %cst_82 = arith.constant 3.200000e+01 : f32
    %230 = vector.broadcast %cst_82 : f32 to vector<16x1xf32>
    %231 = arith.divf %229, %230 : vector<16x1xf32>
    %232 = vector.broadcast %224 : vector<16x1xf32> to vector<16x32xf32>
    %233 = arith.subf %216, %232 : vector<16x32xf32>
    %cst_83 = arith.constant 9.99999974E-6 : f32
    %234 = vector.broadcast %cst_83 : f32 to vector<16x1xf32>
    %235 = arith.addf %231, %234 : vector<16x1xf32>
    %236 = math.rsqrt %235 : vector<16x1xf32>
    %237 = vector.broadcast %236 : vector<16x1xf32> to vector<16x32xf32>
    %238 = arith.mulf %233, %237 : vector<16x32xf32>
    %239 = vector.broadcast %218 : vector<1x32xf32> to vector<16x32xf32>
    %240 = arith.mulf %238, %239 : vector<16x32xf32>
    %241 = vector.broadcast %220 : vector<1x32xf32> to vector<16x32xf32>
    %242 = arith.addf %240, %241 : vector<16x32xf32>
    %243 = arith.truncf %242 : vector<16x32xf32> to vector<16x32xbf16>
    %c0_84 = arith.constant 0 : index
    %c0_85 = arith.constant 0 : index
    %c0_86 = arith.constant 0 : index
    %244 = vector.load %arg13[%c0_84, %c0_85, %c0_86] : memref<1x2048x32xbf16, #tpu.memory_space<vmem>>, vector<1x2048x32xbf16>
    %245 = vector.shape_cast %244 : vector<1x2048x32xbf16> to vector<2048x32xbf16>
    "tpu.trace_start"() <{level = 10 : i32, message = "nd,fd->nf"}> : () -> ()
    %cst_87 = arith.constant dense<0.000000e+00> : vector<16x2048xf32>
    %246 = tpu.matmul %243, %245, %cst_87 {dimension_numbers = #tpu.dot_dimension_numbers<[1], [1], [0], [0], [0, 0, 1, 0], [], []>} : vector<16x32xbf16>, vector<2048x32xbf16>, vector<16x2048xf32> -> vector<16x2048xf32>
    "tpu.trace_stop"() : () -> ()
    %c0_88 = arith.constant 0 : index
    %c0_89 = arith.constant 0 : index
    %c0_90 = arith.constant 0 : index
    %247 = vector.load %arg14[%c0_88, %c0_89, %c0_90] : memref<1x1x2048xf32, #tpu.memory_space<vmem>>, vector<1x1x2048xf32>
    %248 = vector.shape_cast %247 : vector<1x1x2048xf32> to vector<1x2048xf32>
    %249 = vector.broadcast %248 : vector<1x2048xf32> to vector<16x2048xf32>
    %250 = arith.addf %246, %249 : vector<16x2048xf32>
    %cst_91 = arith.constant 0.000000e+00 : f32
    %251 = vector.broadcast %cst_91 : f32 to vector<16x2048xf32>
    %252 = arith.maximumf %250, %251 : vector<16x2048xf32>
    %253 = arith.truncf %252 : vector<16x2048xf32> to vector<16x2048xbf16>
    %c0_92 = arith.constant 0 : index
    %c0_93 = arith.constant 0 : index
    %c0_94 = arith.constant 0 : index
    %254 = vector.load %arg15[%c0_92, %c0_93, %c0_94] : memref<1x32x2048xbf16, #tpu.memory_space<vmem>>, vector<1x32x2048xbf16>
    %255 = vector.shape_cast %254 : vector<1x32x2048xbf16> to vector<32x2048xbf16>
    "tpu.trace_start"() <{level = 10 : i32, message = "nf,df->nd"}> : () -> ()
    %cst_95 = arith.constant dense<0.000000e+00> : vector<16x32xf32>
    %256 = tpu.matmul %253, %255, %cst_95 {dimension_numbers = #tpu.dot_dimension_numbers<[1], [1], [0], [0], [0, 0, 1, 0], [], []>} : vector<16x2048xbf16>, vector<32x2048xbf16>, vector<16x32xf32> -> vector<16x32xf32>
    "tpu.trace_stop"() : () -> ()
    %c0_96 = arith.constant 0 : index
    %c0_97 = arith.constant 0 : index
    %c0_98 = arith.constant 0 : index
    %257 = vector.load %arg16[%c0_96, %c0_97, %c0_98] : memref<1x1x32xf32, #tpu.memory_space<vmem>>, vector<1x1x32xf32>
    %258 = vector.shape_cast %257 : vector<1x1x32xf32> to vector<1x32xf32>
    %259 = vector.broadcast %258 : vector<1x32xf32> to vector<16x32xf32>
    %260 = arith.addf %256, %259 : vector<16x32xf32>
    %261 = arith.addf %242, %260 : vector<16x32xf32>
    %c0_99 = arith.constant 0 : index
    %c0_100 = arith.constant 0 : index
    %c0_101 = arith.constant 0 : index
    %262 = vector.load %arg11[%c0_99, %c0_100, %c0_101] : memref<1x1x32xf32, #tpu.memory_space<vmem>>, vector<1x1x32xf32>
    %263 = vector.shape_cast %262 : vector<1x1x32xf32> to vector<1x32xf32>
    %c0_102 = arith.constant 0 : index
    %c0_103 = arith.constant 0 : index
    %c0_104 = arith.constant 0 : index
    %264 = vector.load %arg12[%c0_102, %c0_103, %c0_104] : memref<1x1x32xf32, #tpu.memory_space<vmem>>, vector<1x1x32xf32>
    %265 = vector.shape_cast %264 : vector<1x1x32xf32> to vector<1x32xf32>
    %cst_105 = arith.constant dense<0.000000e+00> : vector<16xf32>
    %266 = vector.multi_reduction <add>, %261, %cst_105 [1] : vector<16x32xf32> to vector<16xf32>
    %267 = vector.shape_cast %266 : vector<16xf32> to vector<16x1xf32>
    %cst_106 = arith.constant 3.200000e+01 : f32
    %268 = vector.broadcast %cst_106 : f32 to vector<16x1xf32>
    %269 = arith.divf %267, %268 : vector<16x1xf32>
    %270 = vector.broadcast %269 : vector<16x1xf32> to vector<16x32xf32>
    %271 = arith.subf %261, %270 : vector<16x32xf32>
    %272 = arith.mulf %271, %271 : vector<16x32xf32>
    %cst_107 = arith.constant dense<0.000000e+00> : vector<16xf32>
    %273 = vector.multi_reduction <add>, %272, %cst_107 [1] : vector<16x32xf32> to vector<16xf32>
    %274 = vector.shape_cast %273 : vector<16xf32> to vector<16x1xf32>
    %cst_108 = arith.constant 3.200000e+01 : f32
    %275 = vector.broadcast %cst_108 : f32 to vector<16x1xf32>
    %276 = arith.divf %274, %275 : vector<16x1xf32>
    %277 = vector.broadcast %269 : vector<16x1xf32> to vector<16x32xf32>
    %278 = arith.subf %261, %277 : vector<16x32xf32>
    %cst_109 = arith.constant 9.99999974E-6 : f32
    %279 = vector.broadcast %cst_109 : f32 to vector<16x1xf32>
    %280 = arith.addf %276, %279 : vector<16x1xf32>
    %281 = math.rsqrt %280 : vector<16x1xf32>
    %282 = vector.broadcast %281 : vector<16x1xf32> to vector<16x32xf32>
    %283 = arith.mulf %278, %282 : vector<16x32xf32>
    %284 = vector.broadcast %263 : vector<1x32xf32> to vector<16x32xf32>
    %285 = arith.mulf %283, %284 : vector<16x32xf32>
    %286 = vector.broadcast %265 : vector<1x32xf32> to vector<16x32xf32>
    %287 = arith.addf %285, %286 : vector<16x32xf32>
    %288 = vector.shape_cast %287 : vector<16x32xf32> to vector<2x8x32xf32>
    %c0_110 = arith.constant 0 : index
    %c0_111 = arith.constant 0 : index
    %c0_112 = arith.constant 0 : index
    %289 = vector.load %arg20[%c0_110, %c0_111, %c0_112] : memref<2x8x32xf32, #tpu.memory_space<vmem>>, vector<2x8x32xf32>
    tpu.vector_store %arg20[%c0_110, %c0_111, %c0_112], %288 {strides = array<i32>} : memref<2x8x32xf32, #tpu.memory_space<vmem>>, vector<2x8x32xf32>,
    %c1_i32 = arith.constant 1 : i32
    %290 = arith.cmpi eq, %arg0, %c1_i32 : i32
    %291 = arith.extui %290 : i1 to i32
    %c0_i32_113 = arith.constant 0 : i32
    %292 = arith.cmpi ne, %291, %c0_i32_113 : i32
    scf.if %292 {
      %c0_114 = arith.constant 0 : index
      %c7 = arith.constant 7 : index
      %c0_115 = arith.constant 0 : index
      %293 = vector.load %arg20[%c0_114, %c7, %c0_115] : memref<2x8x32xf32, #tpu.memory_space<vmem>>, vector<2x1x32xf32>
      %294 = vector.shape_cast %293 : vector<2x1x32xf32> to vector<2x32xf32>
      %295 = arith.truncf %294 : vector<2x32xf32> to vector<2x32xbf16>
      %c0_116 = arith.constant 0 : index
      %c0_117 = arith.constant 0 : index
      %296 = vector.load %arg17[%c0_116, %c0_117] : memref<4x32xbf16, #tpu.memory_space<vmem>>, vector<4x32xbf16>
      "tpu.trace_start"() <{level = 10 : i32, message = "bd,od->bo"}> : () -> ()
      %cst_118 = arith.constant dense<0.000000e+00> : vector<2x4xf32>
      %297 = tpu.matmul %295, %296, %cst_118 {dimension_numbers = #tpu.dot_dimension_numbers<[1], [1], [0], [0], [0, 0, 1, 0], [], []>} : vector<2x32xbf16>, vector<4x32xbf16>, vector<2x4xf32> -> vector<2x4xf32>
      "tpu.trace_stop"() : () -> ()
      %c0_119 = arith.constant 0 : index
      %c0_120 = arith.constant 0 : index
      %298 = vector.load %arg18[%c0_119, %c0_120] : memref<1x4xf32, #tpu.memory_space<vmem>>, vector<1x4xf32>
      %299 = vector.broadcast %298 : vector<1x4xf32> to vector<2x4xf32>
      %300 = arith.addf %297, %299 : vector<2x4xf32>
      %c0_121 = arith.constant 0 : index
      %c0_122 = arith.constant 0 : index
      %301 = vector.load %arg19[%c0_121, %c0_122] : memref<2x4xf32, #tpu.memory_space<vmem>>, vector<2x4xf32>
      tpu.vector_store %arg19[%c0_121, %c0_122], %300 {strides = array<i32>} : memref<2x4xf32, #tpu.memory_space<vmem>>, vector<2x4xf32>,
    } else {
    }
    return
  }
  func.func @transform_0(%arg0: i32) -> (i32, i32, i32) {
    %c0_i32 = arith.constant 0 : i32
    %c0_i32_0 = arith.constant 0 : i32
    %c0_i32_1 = arith.constant 0 : i32
    %c0_i32_2 = arith.constant 0 : i32
    return %c0_i32, %c0_i32_0, %c0_i32_1 : i32, i32, i32
  }
  func.func @transform_1(%arg0: i32) -> (i32, i32) {
    %c0_i32 = arith.constant 0 : i32
    %c0_i32_0 = arith.constant 0 : i32
    %c0_i32_1 = arith.constant 0 : i32
    return %c0_i32, %c0_i32_0 : i32, i32
  }
  func.func @transform_2(%arg0: i32) -> (i32, i32) {
    %c0_i32 = arith.constant 0 : i32
    %c0_i32_0 = arith.constant 0 : i32
    %c0_i32_1 = arith.constant 0 : i32
    return %c0_i32, %c0_i32_0 : i32, i32
  }
  func.func @transform_3(%arg0: i32) -> (i32, i32) {
    %c0_i32 = arith.constant 0 : i32
    %c0_i32_0 = arith.constant 0 : i32
    %c0_i32_1 = arith.constant 0 : i32
    return %c0_i32, %c0_i32_0 : i32, i32
  }
  func.func @transform_4(%arg0: i32) -> (i32, i32, i32, i32, i32) {
    %c0_i32 = arith.constant 0 : i32
    %c0_i32_0 = arith.constant 0 : i32
    %c0_i32_1 = arith.constant 0 : i32
    %c0_i32_2 = arith.constant 0 : i32
    %c0_i32_3 = arith.constant 0 : i32
    return %arg0, %c0_i32, %c0_i32_0, %c0_i32_1, %c0_i32_2 : i32, i32, i32, i32, i32
  }
  func.func @transform_5(%arg0: i32) -> (i32, i32, i32, i32, i32) {
    %c0_i32 = arith.constant 0 : i32
    %c0_i32_0 = arith.constant 0 : i32
    %c0_i32_1 = arith.constant 0 : i32
    %c0_i32_2 = arith.constant 0 : i32
    %c0_i32_3 = arith.constant 0 : i32
    return %arg0, %c0_i32, %c0_i32_0, %c0_i32_1, %c0_i32_2 : i32, i32, i32, i32, i32
  }
  func.func @transform_6(%arg0: i32) -> (i32, i32, i32, i32) {
    %c0_i32 = arith.constant 0 : i32
    %c0_i32_0 = arith.constant 0 : i32
    %c0_i32_1 = arith.constant 0 : i32
    %c0_i32_2 = arith.constant 0 : i32
    return %arg0, %c0_i32, %c0_i32_0, %c0_i32_1 : i32, i32, i32, i32
  }
  func.func @transform_7(%arg0: i32) -> (i32, i32, i32) {
    %c0_i32 = arith.constant 0 : i32
    %c0_i32_0 = arith.constant 0 : i32
    %c0_i32_1 = arith.constant 0 : i32
    return %arg0, %c0_i32, %c0_i32_0 : i32, i32, i32
  }
  func.func @transform_8(%arg0: i32) -> (i32, i32, i32) {
    %c0_i32 = arith.constant 0 : i32
    %c0_i32_0 = arith.constant 0 : i32
    %c0_i32_1 = arith.constant 0 : i32
    return %arg0, %c0_i32, %c0_i32_0 : i32, i32, i32
  }
  func.func @transform_9(%arg0: i32) -> (i32, i32, i32) {
    %c0_i32 = arith.constant 0 : i32
    %c0_i32_0 = arith.constant 0 : i32
    %c0_i32_1 = arith.constant 0 : i32
    return %arg0, %c0_i32, %c0_i32_0 : i32, i32, i32
  }
  func.func @transform_10(%arg0: i32) -> (i32, i32, i32) {
    %c0_i32 = arith.constant 0 : i32
    %c0_i32_0 = arith.constant 0 : i32
    %c0_i32_1 = arith.constant 0 : i32
    return %arg0, %c0_i32, %c0_i32_0 : i32, i32, i32
  }
  func.func @transform_11(%arg0: i32) -> (i32, i32, i32) {
    %c0_i32 = arith.constant 0 : i32
    %c0_i32_0 = arith.constant 0 : i32
    %c0_i32_1 = arith.constant 0 : i32
    return %arg0, %c0_i32, %c0_i32_0 : i32, i32, i32
  }
  func.func @transform_12(%arg0: i32) -> (i32, i32, i32) {
    %c0_i32 = arith.constant 0 : i32
    %c0_i32_0 = arith.constant 0 : i32
    %c0_i32_1 = arith.constant 0 : i32
    return %arg0, %c0_i32, %c0_i32_0 : i32, i32, i32
  }
  func.func @transform_13(%arg0: i32) -> (i32, i32, i32) {
    %c0_i32 = arith.constant 0 : i32
    %c0_i32_0 = arith.constant 0 : i32
    %c0_i32_1 = arith.constant 0 : i32
    return %arg0, %c0_i32, %c0_i32_0 : i32, i32, i32
  }
  func.func @transform_14(%arg0: i32) -> (i32, i32, i32) {
    %c0_i32 = arith.constant 0 : i32
    %c0_i32_0 = arith.constant 0 : i32
    %c0_i32_1 = arith.constant 0 : i32
    return %arg0, %c0_i32, %c0_i32_0 : i32, i32, i32
  }
  func.func @transform_15(%arg0: i32) -> (i32, i32, i32) {
    %c0_i32 = arith.constant 0 : i32
    %c0_i32_0 = arith.constant 0 : i32
    %c0_i32_1 = arith.constant 0 : i32
    return %arg0, %c0_i32, %c0_i32_0 : i32, i32, i32
  }
  func.func @transform_16(%arg0: i32) -> (i32, i32) {
    %c0_i32 = arith.constant 0 : i32
    %c0_i32_0 = arith.constant 0 : i32
    %c0_i32_1 = arith.constant 0 : i32
    return %c0_i32, %c0_i32_0 : i32, i32
  }
  func.func @transform_17(%arg0: i32) -> (i32, i32) {
    %c0_i32 = arith.constant 0 : i32
    %c0_i32_0 = arith.constant 0 : i32
    %c0_i32_1 = arith.constant 0 : i32
    return %c0_i32, %c0_i32_0 : i32, i32
  }
  func.func @transform_18(%arg0: i32) -> (i32, i32) {
    %c0_i32 = arith.constant 0 : i32
    %c0_i32_0 = arith.constant 0 : i32
    %c0_i32_1 = arith.constant 0 : i32
    return %c0_i32, %c0_i32_0 : i32, i32
  }
}

</mosaic_0001>

<llo_original>
// kernel: tpu_custom_call.1
$region0: #{tpu_custom_call.1}
  #allocation0 [shape = 'u32[]', space=smem, size = 0x4, offset = 0x4, fixed_abs, tag = 'smem constant byte address 0x4 - core index']
  #allocation1 [shape = 'u32[144,128]{1,0:T(1,128)}', space=vmem, size = 0x12000, scoped, tag = 'internal scratch']
  #allocation2 [shape = 'f32[2,8,32]{2,1,0:T(8,128)}', space=vmem, size = 0x2000, scoped, tag = 'scratch operand']
  %s0 = inlined_call_operand.vmem [shape: f32[2,8,16], index: 0, kind: input, shape index: {}]
  %s1 = inlined_call_operand.vmem [shape: bf16[32,16], index: 1, kind: input, shape index: {}]
  %s2 = inlined_call_operand.vmem [shape: f32[1,32], index: 2, kind: input, shape index: {}]
  %s3 = inlined_call_operand.vmem [shape: f32[8,32], index: 3, kind: input, shape index: {}]
  %s4 = inlined_call_operand.vmem [shape: bf16[2,3,4,8,32], index: 4, kind: input, shape index: {}]
  %s5 = inlined_call_operand.vmem [shape: f32[2,3,4,1,8], index: 5, kind: input, shape index: {}]
  %s6 = inlined_call_operand.vmem [shape: bf16[2,4,32,8], index: 6, kind: input, shape index: {}]
  %s7 = inlined_call_operand.vmem [shape: f32[2,1,32], index: 7, kind: input, shape index: {}]
  %s8 = inlined_call_operand.vmem [shape: f32[2,1,32], index: 8, kind: input, shape index: {}]
  %s9 = inlined_call_operand.vmem [shape: f32[2,1,32], index: 9, kind: input, shape index: {}]
  %s10 = inlined_call_operand.vmem [shape: f32[2,1,32], index: 10, kind: input, shape index: {}]
  %s11 = inlined_call_operand.vmem [shape: f32[2,1,32], index: 11, kind: input, shape index: {}]
  %s12 = inlined_call_operand.vmem [shape: bf16[2,2048,32], index: 12, kind: input, shape index: {}]
  %s13 = inlined_call_operand.vmem [shape: f32[2,1,2048], index: 13, kind: input, shape index: {}]
  %s14 = inlined_call_operand.vmem [shape: bf16[2,32,2048], index: 14, kind: input, shape index: {}]
  %s15 = inlined_call_operand.vmem [shape: f32[2,1,32], index: 15, kind: input, shape index: {}]
  %s16 = inlined_call_operand.vmem [shape: bf16[4,32], index: 16, kind: input, shape index: {}]
  %s17 = inlined_call_operand.vmem [shape: f32[1,4], index: 17, kind: input, shape index: {}]
  %s18 = inlined_call_operand.hbm [shape: f32[2,4], index: 18, kind: output, shape index: {}]
  %s19 = sld [smem:[#allocation0]]
  $region113: #{tpu_custom_call.1} parent=0
    _
  %s21 = ssub.s32 1, %s19
  %s22 = scalar_select 0, %s21, %s19
  $region1: #{tpu_custom_call.1} parent=0
    #allocation3 [shape = 'u8[1024]{0}', space=vmem, size = 0x400, scoped, tag = 'output window, operand 0, single buffered']
    #allocation4 [shape = 's32[2]{0}', space=sflag, size = 0x8, scoped, tag = 'scoped memory for tpu_custom_call.1']
    %23 = vsyncpa [#allocation4], 0
    loop: start=0, step=1, limit=4
    $region2: #{tpu_custom_call.1} parent=1 // loop_pre_header
      _
    $region3: #{tpu_custom_call.1} parent=1 // loop_header
      %s25 = sphi 0, %s29
      %p26 = scmp.ge.s32.totalorder %s25, 4
      %s33 = sphi 0, %s33
      %s35 = sphi 0, %s33
      %s36 = sphi 0, %s35
      %s50 = sphi 0, %s36
      %s54 = sphi 0, %s54
      %s56 = sphi 0, %s54
      %s57 = sphi 0, %s56
      %s71 = sphi 0, %s57
      %s75 = sphi 0, %s75
      %s77 = sphi 0, %s75
      %s78 = sphi 0, %s77
      %s92 = sphi 0, %s78
      %s96 = sphi 0, %s96
      %s98 = sphi 0, %s96
      %s99 = sphi 0, %s98
      %s113 = sphi 0, %s99
      %s119 = sphi 0, %s121
      %s122 = sphi 0, %s119
      %s123 = sphi 0, %s122
      %s139 = sphi 0, %s123
      %s145 = sphi 0, %s147
      %s148 = sphi 0, %s145
      %s149 = sphi 0, %s148
      %s165 = sphi 0, %s149
      %s171 = sphi 0, %s173
      %s174 = sphi 0, %s171
      %s175 = sphi 0, %s174
      %s191 = sphi 0, %s175
      %s197 = sphi 0, %s199
      %s200 = sphi 0, %s197
      %s201 = sphi 0, %s200
      %s217 = sphi 0, %s201
      %s223 = sphi 0, %s225
      %s226 = sphi 0, %s223
      %s227 = sphi 0, %s226
      %s243 = sphi 0, %s227
      %s249 = sphi 0, %s251
      %s252 = sphi 0, %s249
      %s253 = sphi 0, %s252
      %s269 = sphi 0, %s253
      %s275 = sphi 0, %s277
      %s278 = sphi 0, %s275
      %s279 = sphi 0, %s278
      %s295 = sphi 0, %s279
      %s301 = sphi 0, %s303
      %s304 = sphi 0, %s301
      %s305 = sphi 0, %s304
      %s321 = sphi 0, %s305
      %s327 = sphi 0, %s329
      %s330 = sphi 0, %s327
      %s331 = sphi 0, %s330
      %s347 = sphi 0, %s331
      %s353 = sphi 0, %s355
      %s356 = sphi 0, %s353
      %s357 = sphi 0, %s356
      %s373 = sphi 0, %s357
      %s379 = sphi 0, %s381
      %s382 = sphi 0, %s379
      %s383 = sphi 0, %s382
      %s399 = sphi 0, %s383
      %s405 = sphi 0, %s407
      %s408 = sphi 0, %s405
      %s409 = sphi 0, %s408
      %s425 = sphi 0, %s409
      %s429 = sphi 0, %s429
      %s431 = sphi 0, %s429
      %s432 = sphi 0, %s431
      %s446 = sphi 0, %s432
      %s450 = sphi 0, %s450
      %s452 = sphi 0, %s450
      %s453 = sphi 0, %s452
      %s467 = sphi 0, %s453
      %s471 = sphi 0, %s471
      %s473 = sphi 0, %s471
      %s474 = sphi 0, %s473
      %s488 = sphi 0, %s474
    $region4: #{tpu_custom_call.1} parent=1 // loop_header_branch
      %28 = sbr.rel (%p26) target = $region8
    $region5: #{tpu_custom_call.1} parent=1 // loop_body
      %s30 = ssub.s32 %s25, 1
      %s31 = ssub.s32 %s25, 2
      %s32 = sadd.s32 %s25, 1
      %s34 = sadd.s32 %s33, 1
      %p37 = scmp.eq.s32.totalorder %s25, 1
      %p38 = scmp.ne.s32.totalorder %s33, %s35
      %p39 = scmp.eq.s32.totalorder %s25, 0
      %p40 = por %p38, %p39
      %p41 = scmp.ne.s32.totalorder %s33, %s35
      %p42 = scmp.eq.s32.totalorder %s30, 1
      %p43 = por %p41, %p42
      %p44 = scmp.ne.s32.totalorder %s35, %s36
      %p45 = scmp.eq.s32.totalorder %s30, 0
      %p46 = por %p44, %p45
      %p47 = scmp.ne.s32.totalorder %s35, %s36
      %p48 = scmp.eq.s32.totalorder %s31, 1
      %p49 = por %p47, %p48
      %p51 = scmp.ne.s32.totalorder %s36, %s50
      %p52 = scmp.eq.s32.totalorder %s31, 0
      %p53 = por %p51, %p52
      %s55 = sadd.s32 %s54, 1
      %p58 = scmp.eq.s32.totalorder %s25, 1
      %p59 = scmp.ne.s32.totalorder %s54, %s56
      %p60 = scmp.eq.s32.totalorder %s25, 0
      %p61 = por %p59, %p60
      %p62 = scmp.ne.s32.totalorder %s54, %s56
      %p63 = scmp.eq.s32.totalorder %s30, 1
      %p64 = por %p62, %p63
      %p65 = scmp.ne.s32.totalorder %s56, %s57
      %p66 = scmp.eq.s32.totalorder %s30, 0
      %p67 = por %p65, %p66
      %p68 = scmp.ne.s32.totalorder %s56, %s57
      %p69 = scmp.eq.s32.totalorder %s31, 1
      %p70 = por %p68, %p69
      %p72 = scmp.ne.s32.totalorder %s57, %s71
      %p73 = scmp.eq.s32.totalorder %s31, 0
      %p74 = por %p72, %p73
      %s76 = sadd.s32 %s75, 1
      %p79 = scmp.eq.s32.totalorder %s25, 1
      %p80 = scmp.ne.s32.totalorder %s75, %s77
      %p81 = scmp.eq.s32.totalorder %s25, 0
      %p82 = por %p80, %p81
      %p83 = scmp.ne.s32.totalorder %s75, %s77
      %p84 = scmp.eq.s32.totalorder %s30, 1
      %p85 = por %p83, %p84
      %p86 = scmp.ne.s32.totalorder %s77, %s78
      %p87 = scmp.eq.s32.totalorder %s30, 0
      %p88 = por %p86, %p87
      %p89 = scmp.ne.s32.totalorder %s77, %s78
      %p90 = scmp.eq.s32.totalorder %s31, 1
      %p91 = por %p89, %p90
      %p93 = scmp.ne.s32.totalorder %s78, %s92
      %p94 = scmp.eq.s32.totalorder %s31, 0
      %p95 = por %p93, %p94
      %s97 = sadd.s32 %s96, 1
      %p100 = scmp.eq.s32.totalorder %s25, 1
      %p101 = scmp.ne.s32.totalorder %s96, %s98
      %p102 = scmp.eq.s32.totalorder %s25, 0
      %p103 = por %p101, %p102
      %p104 = scmp.ne.s32.totalorder %s96, %s98
      %p105 = scmp.eq.s32.totalorder %s30, 1
      %p106 = por %p104, %p105
      %p107 = scmp.ne.s32.totalorder %s98, %s99
      %p108 = scmp.eq.s32.totalorder %s30, 0
      %p109 = por %p107, %p108
      %p110 = scmp.ne.s32.totalorder %s98, %s99
      %p111 = scmp.eq.s32.totalorder %s31, 1
      %p112 = por %p110, %p111
      %p114 = scmp.ne.s32.totalorder %s99, %s113
      %p115 = scmp.eq.s32.totalorder %s31, 0
      %p116 = por %p114, %p115
      %s117 = ssub.s32 %s25, %s32
      %p118 = scmp.eq.s32.totalorder %s117, 0
      %s120 = sadd.s32 %s119, 1
      %s121 = scalar_select %p118, %s119, %s120
      %p124 = pneg %p118
      %p125 = scmp.eq.s32.totalorder %s25, 1
      %p126 = por %p124, %p125
      %p127 = scmp.ne.s32.totalorder %s119, %s122
      %p128 = scmp.eq.s32.totalorder %s25, 0
      %p129 = por %p127, %p128
      %p130 = scmp.ne.s32.totalorder %s119, %s122
      %p131 = scmp.eq.s32.totalorder %s30, 1
      %p132 = por %p130, %p131
      %p133 = scmp.ne.s32.totalorder %s122, %s123
      %p134 = scmp.eq.s32.totalorder %s30, 0
      %p135 = por %p133, %p134
      %p136 = scmp.ne.s32.totalorder %s122, %s123
      %p137 = scmp.eq.s32.totalorder %s31, 1
      %p138 = por %p136, %p137
      %p140 = scmp.ne.s32.totalorder %s123, %s139
      %p141 = scmp.eq.s32.totalorder %s31, 0
      %p142 = por %p140, %p141
      %s143 = ssub.s32 %s25, %s32
      %p144 = scmp.eq.s32.totalorder %s143, 0
      %s146 = sadd.s32 %s145, 1
      %s147 = scalar_select %p144, %s145, %s146
      %p150 = pneg %p144
      %p151 = scmp.eq.s32.totalorder %s25, 1
      %p152 = por %p150, %p151
      %p153 = scmp.ne.s32.totalorder %s145, %s148
      %p154 = scmp.eq.s32.totalorder %s25, 0
      %p155 = por %p153, %p154
      %p156 = scmp.ne.s32.totalorder %s145, %s148
      %p157 = scmp.eq.s32.totalorder %s30, 1
      %p158 = por %p156, %p157
      %p159 = scmp.ne.s32.totalorder %s148, %s149
      %p160 = scmp.eq.s32.totalorder %s30, 0
      %p161 = por %p159, %p160
      %p162 = scmp.ne.s32.totalorder %s148, %s149
      %p163 = scmp.eq.s32.totalorder %s31, 1
      %p164 = por %p162, %p163
      %p166 = scmp.ne.s32.totalorder %s149, %s165
      %p167 = scmp.eq.s32.totalorder %s31, 0
      %p168 = por %p166, %p167
      %s169 = ssub.s32 %s25, %s32
      %p170 = scmp.eq.s32.totalorder %s169, 0
      %s172 = sadd.s32 %s171, 1
      %s173 = scalar_select %p170, %s171, %s172
      %p176 = pneg %p170
      %p177 = scmp.eq.s32.totalorder %s25, 1
      %p178 = por %p176, %p177
      %p179 = scmp.ne.s32.totalorder %s171, %s174
      %p180 = scmp.eq.s32.totalorder %s25, 0
      %p181 = por %p179, %p180
      %p182 = scmp.ne.s32.totalorder %s171, %s174
      %p183 = scmp.eq.s32.totalorder %s30, 1
      %p184 = por %p182, %p183
      %p185 = scmp.ne.s32.totalorder %s174, %s175
      %p186 = scmp.eq.s32.totalorder %s30, 0
      %p187 = por %p185, %p186
      %p188 = scmp.ne.s32.totalorder %s174, %s175
      %p189 = scmp.eq.s32.totalorder %s31, 1
      %p190 = por %p188, %p189
      %p192 = scmp.ne.s32.totalorder %s175, %s191
      %p193 = scmp.eq.s32.totalorder %s31, 0
      %p194 = por %p192, %p193
      %s195 = ssub.s32 %s25, %s32
      %p196 = scmp.eq.s32.totalorder %s195, 0
      %s198 = sadd.s32 %s197, 1
      %s199 = scalar_select %p196, %s197, %s198
      %p202 = pneg %p196
      %p203 = scmp.eq.s32.totalorder %s25, 1
      %p204 = por %p202, %p203
      %p205 = scmp.ne.s32.totalorder %s197, %s200
      %p206 = scmp.eq.s32.totalorder %s25, 0
      %p207 = por %p205, %p206
      %p208 = scmp.ne.s32.totalorder %s197, %s200
      %p209 = scmp.eq.s32.totalorder %s30, 1
      %p210 = por %p208, %p209
      %p211 = scmp.ne.s32.totalorder %s200, %s201
      %p212 = scmp.eq.s32.totalorder %s30, 0
      %p213 = por %p211, %p212
      %p214 = scmp.ne.s32.totalorder %s200, %s201
      %p215 = scmp.eq.s32.totalorder %s31, 1
      %p216 = por %p214, %p215
      %p218 = scmp.ne.s32.totalorder %s201, %s217
      %p219 = scmp.eq.s32.totalorder %s31, 0
      %p220 = por %p218, %p219
      %s221 = ssub.s32 %s25, %s32
      %p222 = scmp.eq.s32.totalorder %s221, 0
      %s224 = sadd.s32 %s223, 1
      %s225 = scalar_select %p222, %s223, %s224
      %p228 = pneg %p222
      %p229 = scmp.eq.s32.totalorder %s25, 1
      %p230 = por %p228, %p229
      %p231 = scmp.ne.s32.totalorder %s223, %s226
      %p232 = scmp.eq.s32.totalorder %s25, 0
      %p233 = por %p231, %p232
      %p234 = scmp.ne.s32.totalorder %s223, %s226
      %p235 = scmp.eq.s32.totalorder %s30, 1
      %p236 = por %p234, %p235
      %p237 = scmp.ne.s32.totalorder %s226, %s227
      %p238 = scmp.eq.s32.totalorder %s30, 0
      %p239 = por %p237, %p238
      %p240 = scmp.ne.s32.totalorder %s226, %s227
      %p241 = scmp.eq.s32.totalorder %s31, 1
      %p242 = por %p240, %p241
      %p244 = scmp.ne.s32.totalorder %s227, %s243
      %p245 = scmp.eq.s32.totalorder %s31, 0
      %p246 = por %p244, %p245
      %s247 = ssub.s32 %s25, %s32
      %p248 = scmp.eq.s32.totalorder %s247, 0
      %s250 = sadd.s32 %s249, 1
      %s251 = scalar_select %p248, %s249, %s250
      %p254 = pneg %p248
      %p255 = scmp.eq.s32.totalorder %s25, 1
      %p256 = por %p254, %p255
      %p257 = scmp.ne.s32.totalorder %s249, %s252
      %p258 = scmp.eq.s32.totalorder %s25, 0
      %p259 = por %p257, %p258
      %p260 = scmp.ne.s32.totalorder %s249, %s252
      %p261 = scmp.eq.s32.totalorder %s30, 1
      %p262 = por %p260, %p261
      %p263 = scmp.ne.s32.totalorder %s252, %s253
      %p264 = scmp.eq.s32.totalorder %s30, 0
      %p265 = por %p263, %p264
      %p266 = scmp.ne.s32.totalorder %s252, %s253
      %p267 = scmp.eq.s32.totalorder %s31, 1
      %p268 = por %p266, %p267
      %p270 = scmp.ne.s32.totalorder %s253, %s269
      %p271 = scmp.eq.s32.totalorder %s31, 0
      %p272 = por %p270, %p271
      %s273 = ssub.s32 %s25, %s32
      %p274 = scmp.eq.s32.totalorder %s273, 0
      %s276 = sadd.s32 %s275, 1
      %s277 = scalar_select %p274, %s275, %s276
      %p280 = pneg %p274
      %p281 = scmp.eq.s32.totalorder %s25, 1
      %p282 = por %p280, %p281
      %p283 = scmp.ne.s32.totalorder %s275, %s278
      %p284 = scmp.eq.s32.totalorder %s25, 0
      %p285 = por %p283, %p284
      %p286 = scmp.ne.s32.totalorder %s275, %s278
      %p287 = scmp.eq.s32.totalorder %s30, 1
      %p288 = por %p286, %p287
      %p289 = scmp.ne.s32.totalorder %s278, %s279
      %p290 = scmp.eq.s32.totalorder %s30, 0
      %p291 = por %p289, %p290
      %p292 = scmp.ne.s32.totalorder %s278, %s279
      %p293 = scmp.eq.s32.totalorder %s31, 1
      %p294 = por %p292, %p293
      %p296 = scmp.ne.s32.totalorder %s279, %s295
      %p297 = scmp.eq.s32.totalorder %s31, 0
      %p298 = por %p296, %p297
      %s299 = ssub.s32 %s25, %s32
      %p300 = scmp.eq.s32.totalorder %s299, 0
      %s302 = sadd.s32 %s301, 1
      %s303 = scalar_select %p300, %s301, %s302
      %p306 = pneg %p300
      %p307 = scmp.eq.s32.totalorder %s25, 1
      %p308 = por %p306, %p307
      %p309 = scmp.ne.s32.totalorder %s301, %s304
      %p310 = scmp.eq.s32.totalorder %s25, 0
      %p311 = por %p309, %p310
      %p312 = scmp.ne.s32.totalorder %s301, %s304
      %p313 = scmp.eq.s32.totalorder %s30, 1
      %p314 = por %p312, %p313
      %p315 = scmp.ne.s32.totalorder %s304, %s305
      %p316 = scmp.eq.s32.totalorder %s30, 0
      %p317 = por %p315, %p316
      %p318 = scmp.ne.s32.totalorder %s304, %s305
      %p319 = scmp.eq.s32.totalorder %s31, 1
      %p320 = por %p318, %p319
      %p322 = scmp.ne.s32.totalorder %s305, %s321
      %p323 = scmp.eq.s32.totalorder %s31, 0
      %p324 = por %p322, %p323
      %s325 = ssub.s32 %s25, %s32
      %p326 = scmp.eq.s32.totalorder %s325, 0
      %s328 = sadd.s32 %s327, 1
      %s329 = scalar_select %p326, %s327, %s328
      %p332 = pneg %p326
      %p333 = scmp.eq.s32.totalorder %s25, 1
      %p334 = por %p332, %p333
      %p335 = scmp.ne.s32.totalorder %s327, %s330
      %p336 = scmp.eq.s32.totalorder %s25, 0
      %p337 = por %p335, %p336
      %p338 = scmp.ne.s32.totalorder %s327, %s330
      %p339 = scmp.eq.s32.totalorder %s30, 1
      %p340 = por %p338, %p339
      %p341 = scmp.ne.s32.totalorder %s330, %s331
      %p342 = scmp.eq.s32.totalorder %s30, 0
      %p343 = por %p341, %p342
      %p344 = scmp.ne.s32.totalorder %s330, %s331
      %p345 = scmp.eq.s32.totalorder %s31, 1
      %p346 = por %p344, %p345
      %p348 = scmp.ne.s32.totalorder %s331, %s347
      %p349 = scmp.eq.s32.totalorder %s31, 0
      %p350 = por %p348, %p349
      %s351 = ssub.s32 %s25, %s32
      %p352 = scmp.eq.s32.totalorder %s351, 0
      %s354 = sadd.s32 %s353, 1
      %s355 = scalar_select %p352, %s353, %s354
      %p358 = pneg %p352
      %p359 = scmp.eq.s32.totalorder %s25, 1
      %p360 = por %p358, %p359
      %p361 = scmp.ne.s32.totalorder %s353, %s356
      %p362 = scmp.eq.s32.totalorder %s25, 0
      %p363 = por %p361, %p362
      %p364 = scmp.ne.s32.totalorder %s353, %s356
      %p365 = scmp.eq.s32.totalorder %s30, 1
      %p366 = por %p364, %p365
      %p367 = scmp.ne.s32.totalorder %s356, %s357
      %p368 = scmp.eq.s32.totalorder %s30, 0
      %p369 = por %p367, %p368
      %p370 = scmp.ne.s32.totalorder %s356, %s357
      %p371 = scmp.eq.s32.totalorder %s31, 1
      %p372 = por %p370, %p371
      %p374 = scmp.ne.s32.totalorder %s357, %s373
      %p375 = scmp.eq.s32.totalorder %s31, 0
      %p376 = por %p374, %p375
      %s377 = ssub.s32 %s25, %s32
      %p378 = scmp.eq.s32.totalorder %s377, 0
      %s380 = sadd.s32 %s379, 1
      %s381 = scalar_select %p378, %s379, %s380
      %p384 = pneg %p378
      %p385 = scmp.eq.s32.totalorder %s25, 1
      %p386 = por %p384, %p385
      %p387 = scmp.ne.s32.totalorder %s379, %s382
      %p388 = scmp.eq.s32.totalorder %s25, 0
      %p389 = por %p387, %p388
      %p390 = scmp.ne.s32.totalorder %s379, %s382
      %p391 = scmp.eq.s32.totalorder %s30, 1
      %p392 = por %p390, %p391
      %p393 = scmp.ne.s32.totalorder %s382, %s383
      %p394 = scmp.eq.s32.totalorder %s30, 0
      %p395 = por %p393, %p394
      %p396 = scmp.ne.s32.totalorder %s382, %s383
      %p397 = scmp.eq.s32.totalorder %s31, 1
      %p398 = por %p396, %p397
      %p400 = scmp.ne.s32.totalorder %s383, %s399
      %p401 = scmp.eq.s32.totalorder %s31, 0
      %p402 = por %p400, %p401
      %s403 = ssub.s32 %s25, %s32
      %p404 = scmp.eq.s32.totalorder %s403, 0
      %s406 = sadd.s32 %s405, 1
      %s407 = scalar_select %p404, %s405, %s406
      %p410 = pneg %p404
      %p411 = scmp.eq.s32.totalorder %s25, 1
      %p412 = por %p410, %p411
      %p413 = scmp.ne.s32.totalorder %s405, %s408
      %p414 = scmp.eq.s32.totalorder %s25, 0
      %p415 = por %p413, %p414
      %p416 = scmp.ne.s32.totalorder %s405, %s408
      %p417 = scmp.eq.s32.totalorder %s30, 1
      %p418 = por %p416, %p417
      %p419 = scmp.ne.s32.totalorder %s408, %s409
      %p420 = scmp.eq.s32.totalorder %s30, 0
      %p421 = por %p419, %p420
      %p422 = scmp.ne.s32.totalorder %s408, %s409
      %p423 = scmp.eq.s32.totalorder %s31, 1
      %p424 = por %p422, %p423
      %p426 = scmp.ne.s32.totalorder %s409, %s425
      %p427 = scmp.eq.s32.totalorder %s31, 0
      %p428 = por %p426, %p427
      %s430 = sadd.s32 %s429, 1
      %p433 = scmp.eq.s32.totalorder %s25, 1
      %p434 = scmp.ne.s32.totalorder %s429, %s431
      %p435 = scmp.eq.s32.totalorder %s25, 0
      %p436 = por %p434, %p435
      %p437 = scmp.ne.s32.totalorder %s429, %s431
      %p438 = scmp.eq.s32.totalorder %s30, 1
      %p439 = por %p437, %p438
      %p440 = scmp.ne.s32.totalorder %s431, %s432
      %p441 = scmp.eq.s32.totalorder %s30, 0
      %p442 = por %p440, %p441
      %p443 = scmp.ne.s32.totalorder %s431, %s432
      %p444 = scmp.eq.s32.totalorder %s31, 1
      %p445 = por %p443, %p444
      %p447 = scmp.ne.s32.totalorder %s432, %s446
      %p448 = scmp.eq.s32.totalorder %s31, 0
      %p449 = por %p447, %p448
      %s451 = sadd.s32 %s450, 1
      %p454 = scmp.eq.s32.totalorder %s25, 1
      %p455 = scmp.ne.s32.totalorder %s450, %s452
      %p456 = scmp.eq.s32.totalorder %s25, 0
      %p457 = por %p455, %p456
      %p458 = scmp.ne.s32.totalorder %s450, %s452
      %p459 = scmp.eq.s32.totalorder %s30, 1
      %p460 = por %p458, %p459
      %p461 = scmp.ne.s32.totalorder %s452, %s453
      %p462 = scmp.eq.s32.totalorder %s30, 0
      %p463 = por %p461, %p462
      %p464 = scmp.ne.s32.totalorder %s452, %s453
      %p465 = scmp.eq.s32.totalorder %s31, 1
      %p466 = por %p464, %p465
      %p468 = scmp.ne.s32.totalorder %s453, %s467
      %p469 = scmp.eq.s32.totalorder %s31, 0
      %p470 = por %p468, %p469
      %s472 = sadd.s32 %s471, 1
      %p475 = scmp.eq.s32.totalorder %s25, 1
      %p476 = scmp.ne.s32.totalorder %s471, %s473
      %p477 = scmp.eq.s32.totalorder %s25, 0
      %p478 = por %p476, %p477
      %p479 = scmp.ne.s32.totalorder %s471, %s473
      %p480 = scmp.eq.s32.totalorder %s30, 1
      %p481 = por %p479, %p480
      %p482 = scmp.ne.s32.totalorder %s473, %s474
      %p483 = scmp.eq.s32.totalorder %s30, 0
      %p484 = por %p482, %p483
      %p485 = scmp.ne.s32.totalorder %s473, %s474
      %p486 = scmp.eq.s32.totalorder %s31, 1
      %p487 = por %p485, %p486
      %p489 = scmp.ne.s32.totalorder %s474, %s488
      %p490 = scmp.eq.s32.totalorder %s31, 0
      %p491 = por %p489, %p490
      %p492 = scmp.le.s32.totalorder 1, %s25
      %p493 = scmp.lt.s32.totalorder %s25, 3
      %p494 = pnand %p492, %p493
      %p495 = pneg %p494
      // Predicated region
      $region9: #{tpu_custom_call.1} parent=5 // pred_check
        _
      $region10: #{tpu_custom_call.1} parent=5 // pred_check_branch
        %497 = sbr.rel (%p494) target = $region12
      $region11: #{tpu_custom_call.1} parent=5 // pred_region
        %s498 = ssub.s32 %s25, 1
        // Predicated region
        $region13: #{tpu_custom_call.1} parent=11 // pred_check
          %p499 = pneg %p46
        $region14: #{tpu_custom_call.1} parent=11 // pred_check_branch
          %501 = sbr.rel (%p499) target = $region16
        $region15: #{tpu_custom_call.1} parent=11 // pred_region
          _
        $region16: #{tpu_custom_call.1} parent=11 // pred_fallthru
          _
        // Predicated region
        $region17: #{tpu_custom_call.1} parent=11 // pred_check
          %p502 = pneg %p67
        $region18: #{tpu_custom_call.1} parent=11 // pred_check_branch
          %504 = sbr.rel (%p502) target = $region20
        $region19: #{tpu_custom_call.1} parent=11 // pred_region
          _
        $region20: #{tpu_custom_call.1} parent=11 // pred_fallthru
          _
        // Predicated region
        $region21: #{tpu_custom_call.1} parent=11 // pred_check
          %p505 = pneg %p88
        $region22: #{tpu_custom_call.1} parent=11 // pred_check_branch
          %507 = sbr.rel (%p505) target = $region24
        $region23: #{tpu_custom_call.1} parent=11 // pred_region
          _
        $region24: #{tpu_custom_call.1} parent=11 // pred_fallthru
          _
        // Predicated region
        $region25: #{tpu_custom_call.1} parent=11 // pred_check
          %p508 = pneg %p109
        $region26: #{tpu_custom_call.1} parent=11 // pred_check_branch
          %510 = sbr.rel (%p508) target = $region28
        $region27: #{tpu_custom_call.1} parent=11 // pred_region
          _
        $region28: #{tpu_custom_call.1} parent=11 // pred_fallthru
          _
        // Predicated region
        $region29: #{tpu_custom_call.1} parent=11 // pred_check
          %p511 = pneg %p442
        $region30: #{tpu_custom_call.1} parent=11 // pred_check_branch
          %513 = sbr.rel (%p511) target = $region32
        $region31: #{tpu_custom_call.1} parent=11 // pred_region
          _
        $region32: #{tpu_custom_call.1} parent=11 // pred_fallthru
          _
        // Predicated region
        $region33: #{tpu_custom_call.1} parent=11 // pred_check
          %p514 = pneg %p463
        $region34: #{tpu_custom_call.1} parent=11 // pred_check_branch
          %516 = sbr.rel (%p514) target = $region36
        $region35: #{tpu_custom_call.1} parent=11 // pred_region
          _
        $region36: #{tpu_custom_call.1} parent=11 // pred_fallthru
          _
      $region12: #{tpu_custom_call.1} parent=5 // pred_fallthru
        _
      %p517 = scmp.lt.s32.totalorder %s25, 2
      // Predicated region
      $region37: #{tpu_custom_call.1} parent=5 // pred_check
        %p518 = pneg %p517
      $region38: #{tpu_custom_call.1} parent=5 // pred_check_branch
        %520 = sbr.rel (%p518) target = $region40
      $region39: #{tpu_custom_call.1} parent=5 // pred_region
        // Predicated region
        $region41: #{tpu_custom_call.1} parent=39 // pred_check
          %p521 = pneg %p129
        $region42: #{tpu_custom_call.1} parent=39 // pred_check_branch
          %523 = sbr.rel (%p521) target = $region44
        $region43: #{tpu_custom_call.1} parent=39 // pred_region
          %p524 = scmp.lt.s32.totalorder %s25, 1
          %s525 = scalar_select %p524, %s25, 1
          %s526 = smul.addr %s525, 12
          %s527 = smul.addr %s526, 4
          %s528 = scalar_lea.vmem %s4, %s527
        $region44: #{tpu_custom_call.1} parent=39 // pred_fallthru
          _
        // Predicated region
        $region45: #{tpu_custom_call.1} parent=39 // pred_check
          %p529 = pneg %p155
        $region46: #{tpu_custom_call.1} parent=39 // pred_check_branch
          %531 = sbr.rel (%p529) target = $region48
        $region47: #{tpu_custom_call.1} parent=39 // pred_region
          %p532 = scmp.lt.s32.totalorder %s25, 1
          %s533 = scalar_select %p532, %s25, 1
          %s534 = smul.addr %s533, 12
          %s535 = scalar_lea.vmem %s5, %s534
        $region48: #{tpu_custom_call.1} parent=39 // pred_fallthru
          _
        // Predicated region
        $region49: #{tpu_custom_call.1} parent=39 // pred_check
          %p536 = pneg %p181
        $region50: #{tpu_custom_call.1} parent=39 // pred_check_branch
          %538 = sbr.rel (%p536) target = $region52
        $region51: #{tpu_custom_call.1} parent=39 // pred_region
          %p539 = scmp.lt.s32.totalorder %s25, 1
          %s540 = scalar_select %p539, %s25, 1
          %s541 = smul.addr %s540, 16
          %s542 = smul.addr %s541, 4
          %s543 = scalar_lea.vmem %s6, %s542
        $region52: #{tpu_custom_call.1} parent=39 // pred_fallthru
          _
        // Predicated region
        $region53: #{tpu_custom_call.1} parent=39 // pred_check
          %p544 = pneg %p207
        $region54: #{tpu_custom_call.1} parent=39 // pred_check_branch
          %546 = sbr.rel (%p544) target = $region56
        $region55: #{tpu_custom_call.1} parent=39 // pred_region
          %p547 = scmp.lt.s32.totalorder %s25, 1
          %s548 = scalar_select %p547, %s25, 1
          %s549 = scalar_lea.vmem %s7, %s548
        $region56: #{tpu_custom_call.1} parent=39 // pred_fallthru
          _
        // Predicated region
        $region57: #{tpu_custom_call.1} parent=39 // pred_check
          %p550 = pneg %p233
        $region58: #{tpu_custom_call.1} parent=39 // pred_check_branch
          %552 = sbr.rel (%p550) target = $region60
        $region59: #{tpu_custom_call.1} parent=39 // pred_region
          %p553 = scmp.lt.s32.totalorder %s25, 1
          %s554 = scalar_select %p553, %s25, 1
          %s555 = scalar_lea.vmem %s8, %s554
        $region60: #{tpu_custom_call.1} parent=39 // pred_fallthru
          _
        // Predicated region
        $region61: #{tpu_custom_call.1} parent=39 // pred_check
          %p556 = pneg %p259
        $region62: #{tpu_custom_call.1} parent=39 // pred_check_branch
          %558 = sbr.rel (%p556) target = $region64
        $region63: #{tpu_custom_call.1} parent=39 // pred_region
          %p559 = scmp.lt.s32.totalorder %s25, 1
          %s560 = scalar_select %p559, %s25, 1
          %s561 = scalar_lea.vmem %s9, %s560
        $region64: #{tpu_custom_call.1} parent=39 // pred_fallthru
          _
        // Predicated region
        $region65: #{tpu_custom_call.1} parent=39 // pred_check
          %p562 = pneg %p285
        $region66: #{tpu_custom_call.1} parent=39 // pred_check_branch
          %564 = sbr.rel (%p562) target = $region68
        $region67: #{tpu_custom_call.1} parent=39 // pred_region
          %p565 = scmp.lt.s32.totalorder %s25, 1
          %s566 = scalar_select %p565, %s25, 1
          %s567 = scalar_lea.vmem %s10, %s566
        $region68: #{tpu_custom_call.1} parent=39 // pred_fallthru
          _
        // Predicated region
        $region69: #{tpu_custom_call.1} parent=39 // pred_check
          %p568 = pneg %p311
        $region70: #{tpu_custom_call.1} parent=39 // pred_check_branch
          %570 = sbr.rel (%p568) target = $region72
        $region71: #{tpu_custom_call.1} parent=39 // pred_region
          %p571 = scmp.lt.s32.totalorder %s25, 1
          %s572 = scalar_select %p571, %s25, 1
          %s573 = scalar_lea.vmem %s11, %s572
        $region72: #{tpu_custom_call.1} parent=39 // pred_fallthru
          _
        // Predicated region
        $region73: #{tpu_custom_call.1} parent=39 // pred_check
          %p574 = pneg %p337
        $region74: #{tpu_custom_call.1} parent=39 // pred_check_branch
          %576 = sbr.rel (%p574) target = $region76
        $region75: #{tpu_custom_call.1} parent=39 // pred_region
          %p577 = scmp.lt.s32.totalorder %s25, 1
          %s578 = scalar_select %p577, %s25, 1
          %s579 = smul.addr %s578, 256
          %s580 = smul.addr %s579, 4
          %s581 = scalar_lea.vmem %s12, %s580
        $region76: #{tpu_custom_call.1} parent=39 // pred_fallthru
          _
        // Predicated region
        $region77: #{tpu_custom_call.1} parent=39 // pred_check
          %p582 = pneg %p363
        $region78: #{tpu_custom_call.1} parent=39 // pred_check_branch
          %584 = sbr.rel (%p582) target = $region80
        $region79: #{tpu_custom_call.1} parent=39 // pred_region
          %p585 = scmp.lt.s32.totalorder %s25, 1
          %s586 = scalar_select %p585, %s25, 1
          %s587 = smul.addr %s586, 16
          %s588 = scalar_lea.vmem %s13, %s587
        $region80: #{tpu_custom_call.1} parent=39 // pred_fallthru
          _
        // Predicated region
        $region81: #{tpu_custom_call.1} parent=39 // pred_check
          %p589 = pneg %p389
        $region82: #{tpu_custom_call.1} parent=39 // pred_check_branch
          %591 = sbr.rel (%p589) target = $region84
        $region83: #{tpu_custom_call.1} parent=39 // pred_region
          %p592 = scmp.lt.s32.totalorder %s25, 1
          %s593 = scalar_select %p592, %s25, 1
          %s594 = smul.addr %s593, 64
          %s595 = smul.addr %s594, 4
          %s596 = scalar_lea.vmem %s14, %s595
        $region84: #{tpu_custom_call.1} parent=39 // pred_fallthru
          _
        // Predicated region
        $region85: #{tpu_custom_call.1} parent=39 // pred_check
          %p597 = pneg %p415
        $region86: #{tpu_custom_call.1} parent=39 // pred_check_branch
          %599 = sbr.rel (%p597) target = $region88
        $region87: #{tpu_custom_call.1} parent=39 // pred_region
          %p600 = scmp.lt.s32.totalorder %s25, 1
          %s601 = scalar_select %p600, %s25, 1
          %s602 = scalar_lea.vmem %s15, %s601
        $region88: #{tpu_custom_call.1} parent=39 // pred_fallthru
          _
      $region40: #{tpu_custom_call.1} parent=5 // pred_fallthru
        _
      %p603 = scmp.le.s32.totalorder 1, %s25
      %p604 = scmp.lt.s32.totalorder %s25, 3
      %p605 = pnand %p603, %p604
      %p606 = pneg %p605
      // Predicated region
      $region89: #{tpu_custom_call.1} parent=5 // pred_check
        _
      $region90: #{tpu_custom_call.1} parent=5 // pred_check_branch
        %608 = sbr.rel (%p605) target = $region92
      $region91: #{tpu_custom_call.1} parent=5 // pred_region
        %s609 = ssub.s32 %s25, 1
        %p610 = pneg %p46
        %p611 = pneg %p43
        %p612 = pneg %p67
        %p613 = pneg %p64
        %p614 = pneg %p88
        %p615 = pneg %p85
        %p616 = pneg %p109
        %p617 = pneg %p106
        %p618 = scmp.lt.s32.totalorder %s30, 1
        %s619 = scalar_select %p618, %s30, 1
        %s620 = smul.addr %s619, 12
        %s621 = smul.addr %s620, 4
        %s622 = scalar_lea.vmem %s4, %s621
        %p623 = pneg %p135
        %p624 = pneg %p132
        %p625 = scmp.lt.s32.totalorder %s30, 1
        %s626 = scalar_select %p625, %s30, 1
        %s627 = smul.addr %s626, 12
        %s628 = scalar_lea.vmem %s5, %s627
        %p629 = pneg %p161
        %p630 = pneg %p158
        %p631 = scmp.lt.s32.totalorder %s30, 1
        %s632 = scalar_select %p631, %s30, 1
        %s633 = smul.addr %s632, 16
        %s634 = smul.addr %s633, 4
        %s635 = scalar_lea.vmem %s6, %s634
        %p636 = pneg %p187
        %p637 = pneg %p184
        %p638 = scmp.lt.s32.totalorder %s30, 1
        %s639 = scalar_select %p638, %s30, 1
        %s640 = scalar_lea.vmem %s7, %s639
        %p641 = pneg %p213
        %p642 = pneg %p210
        %p643 = scmp.lt.s32.totalorder %s30, 1
        %s644 = scalar_select %p643, %s30, 1
        %s645 = scalar_lea.vmem %s8, %s644
        %p646 = pneg %p239
        %p647 = pneg %p236
        %p648 = scmp.lt.s32.totalorder %s30, 1
        %s649 = scalar_select %p648, %s30, 1
        %s650 = scalar_lea.vmem %s9, %s649
        %p651 = pneg %p265
        %p652 = pneg %p262
        %p653 = scmp.lt.s32.totalorder %s30, 1
        %s654 = scalar_select %p653, %s30, 1
        %s655 = scalar_lea.vmem %s10, %s654
        %p656 = pneg %p291
        %p657 = pneg %p288
        %p658 = scmp.lt.s32.totalorder %s30, 1
        %s659 = scalar_select %p658, %s30, 1
        %s660 = scalar_lea.vmem %s11, %s659
        %p661 = pneg %p317
        %p662 = pneg %p314
        %p663 = scmp.lt.s32.totalorder %s30, 1
        %s664 = scalar_select %p663, %s30, 1
        %s665 = smul.addr %s664, 256
        %s666 = smul.addr %s665, 4
        %s667 = scalar_lea.vmem %s12, %s666
        %p668 = pneg %p343
        %p669 = pneg %p340
        %p670 = scmp.lt.s32.totalorder %s30, 1
        %s671 = scalar_select %p670, %s30, 1
        %s672 = smul.addr %s671, 16
        %s673 = scalar_lea.vmem %s13, %s672
        %p674 = pneg %p369
        %p675 = pneg %p366
        %p676 = scmp.lt.s32.totalorder %s30, 1
        %s677 = scalar_select %p676, %s30, 1
        %s678 = smul.addr %s677, 64
        %s679 = smul.addr %s678, 4
        %s680 = scalar_lea.vmem %s14, %s679
        %p681 = pneg %p395
        %p682 = pneg %p392
        %p683 = scmp.lt.s32.totalorder %s30, 1
        %s684 = scalar_select %p683, %s30, 1
        %s685 = scalar_lea.vmem %s15, %s684
        %p686 = pneg %p421
        %p687 = pneg %p418
        %p688 = pneg %p442
        %p689 = pneg %p439
        %p690 = pneg %p463
        %p691 = pneg %p460
        %p692 = pneg %p484
        %p693 = pneg %p481
        %p694 = scmp.lt.s32.totalorder %s30, 1
        %s695 = scalar_select %p694, %s30, 1
        %s696 = smul.addr %s695, 12
        %s697 = smul.addr %s696, 4
        %s698 = scalar_lea.vmem %s4, %s697
        %p699 = scmp.lt.s32.totalorder %s30, 1
        %s700 = scalar_select %p699, %s30, 1
        %s701 = smul.addr %s700, 12
        %s702 = scalar_lea.vmem %s5, %s701
        %p703 = scmp.lt.s32.totalorder %s30, 1
        %s704 = scalar_select %p703, %s30, 1
        %s705 = smul.addr %s704, 16
        %s706 = smul.addr %s705, 4
        %s707 = scalar_lea.vmem %s6, %s706
        %p708 = scmp.lt.s32.totalorder %s30, 1
        %s709 = scalar_select %p708, %s30, 1
        %s710 = scalar_lea.vmem %s7, %s709
        %p711 = scmp.lt.s32.totalorder %s30, 1
        %s712 = scalar_select %p711, %s30, 1
        %s713 = scalar_lea.vmem %s8, %s712
        %p714 = scmp.lt.s32.totalorder %s30, 1
        %s715 = scalar_select %p714, %s30, 1
        %s716 = scalar_lea.vmem %s9, %s715
        %p717 = scmp.lt.s32.totalorder %s30, 1
        %s718 = scalar_select %p717, %s30, 1
        %s719 = scalar_lea.vmem %s10, %s718
        %p720 = scmp.lt.s32.totalorder %s30, 1
        %s721 = scalar_select %p720, %s30, 1
        %s722 = scalar_lea.vmem %s11, %s721
        %p723 = scmp.lt.s32.totalorder %s30, 1
        %s724 = scalar_select %p723, %s30, 1
        %s725 = smul.addr %s724, 256
        %s726 = smul.addr %s725, 4
        %s727 = scalar_lea.vmem %s12, %s726
        %p728 = scmp.lt.s32.totalorder %s30, 1
        %s729 = scalar_select %p728, %s30, 1
        %s730 = smul.addr %s729, 16
        %s731 = scalar_lea.vmem %s13, %s730
        %p732 = scmp.lt.s32.totalorder %s30, 1
        %s733 = scalar_select %p732, %s30, 1
        %s734 = smul.addr %s733, 64
        %s735 = smul.addr %s734, 4
        %s736 = scalar_lea.vmem %s14, %s735
        %p737 = scmp.lt.s32.totalorder %s30, 1
        %s738 = scalar_select %p737, %s30, 1
        %s739 = scalar_lea.vmem %s15, %s738
        %p741 = scmp.eq.s32.totalorder %s30, 0
        // Predicated region
        $region93: #{tpu_custom_call.1} parent=91 // pred_check
          %p742 = pneg %p741
        $region94: #{tpu_custom_call.1} parent=91 // pred_check_branch
          %744 = sbr.rel (%p742) target = $region96
        $region95: #{tpu_custom_call.1} parent=91 // pred_region
          %v745 = vld [vmem:[%s0] sm:$0xff]
          %v746 = vld [vmem:[%s0 + $0x8] sm:$0xff]
          %v747 = vpack.c.bf16 %v746, %v745
          %v748 = vld [vmem:[%s1] sm:$0xf]
          %v749 = vld [vmem:[%s1 + $0x4] sm:$0xf]
          %v750 = vld [vmem:[%s1 + $0x8] sm:$0xf]
          %v751 = vld [vmem:[%s1 + $0xc] sm:$0xf]
          %v752 = vld [vmem:[%s2] sm:$0x1]
          %v754 = vlaneseq
          %v755 = vshrl.u32 %v754, 7
          %v756 = vsub.s32 0, %v755
          %v757 = vrot.slane %v752, %v756
          %v763 = vunpack.c.l.b16 %v748
          %v764 = vunpack.c.l.b16 %v749
          %v765 = vunpack.c.l.b16 %v750
          %v766 = vunpack.c.l.b16 %v751
          %v767 = vpack.c.b16 %v764, %v763
          %v768 = vpack.c.b16 %v766, %v765
          %vm769 = vcmask 130048
          %v771 = vsel %vm769, %v747, 0
          %v774 = vsel %vm769, %v767, 0
          %v777 = vsel %vm769, %v768, 0
          %779 = vmatprep.subr.bf16.mxu0 0
          %780 = vmatpush1.bf16.xpose.msra.mxu0 %v774
          %781 = vmatprep.subr.bf16.mxu0 0
          %782 = vmatpush1.bf16.xpose.msra.mxu0 %v777
          %783 = vmatprep.subr.bf16.mxu0 0
          %784 = vmatpush1.bf16.xpose.msra.mxu0 0
          %785 = vmatprep.subr.bf16.mxu0 0
          %786 = vmatpush1.bf16.xpose.msra.mxu0 0
          %787 = vmatprep.subr.bf16.mxu0 0
          %788 = vmatpush1.bf16.xpose.msra.mxu0 0
          %789 = vmatprep.subr.bf16.mxu0 0
          %790 = vmatpush1.bf16.xpose.msra.mxu0 0
          %791 = vmatprep.subr.bf16.mxu0 0
          %792 = vmatpush1.bf16.xpose.msra.mxu0 0
          %793 = vmatprep.subr.bf16.mxu0 0
          %794 = vmatpush1.bf16.xpose.msra.mxu0 0
          %795 = vmatprep.subr.bf16.mxu0 0
          %796 = vmatpush1.bf16.xpose.msra.mxu0 0
          %797 = vmatprep.subr.bf16.mxu0 0
          %798 = vmatpush1.bf16.xpose.msra.mxu0 0
          %799 = vmatprep.subr.bf16.mxu0 0
          %800 = vmatpush1.bf16.xpose.msra.mxu0 0
          %801 = vmatprep.subr.bf16.mxu0 0
          %802 = vmatpush1.bf16.xpose.msra.mxu0 0
          %803 = vmatprep.subr.bf16.mxu0 0
          %804 = vmatpush1.bf16.xpose.msra.mxu0 0
          %805 = vmatprep.subr.bf16.mxu0 0
          %806 = vmatpush1.bf16.xpose.msra.mxu0 0
          %807 = vmatprep.subr.bf16.mxu0 0
          %808 = vmatpush1.bf16.xpose.msra.mxu0 0
          %809 = vmatprep.subr.bf16.mxu0 0
          %810 = vmatpush1.bf16.xpose.msra.mxu0 0
          %811 = vmatprep.mubr.bf16.mxu0 0
          %812 = vmatmul.mubr.bf16.gmra.mrb[0].mxu0 %v771
          %v813 = vpop.f32.mrb[0].mxu0
          %v814 = vadd.f32 %v757, %v813
          %v815 = vpop.f32.mrb[0].mxu0
          %v816 = vpop.f32.mrb[0].mxu0
          %v817 = vadd.f32 %v757, %v816
          %v818 = vpop.f32.mrb[0].mxu0
          %819 = vdwg.mxu0
          %v820 = vld [vmem:[%s3] sm:$0xff]
          %v821 = vadd.f32 %v814, %v820
          %v822 = vadd.f32 %v817, %v820
          %vm823 = vcmask 261120
          %824 = vst.msk [vmem:[#allocation2] sm:$0xff] %vm823, %v821
          %825 = vst.msk [vmem:[#allocation2 + $0x8] sm:$0xff] %vm823, %v822
        $region96: #{tpu_custom_call.1} parent=91 // pred_fallthru
          _
        %v826 = vld [vmem:[#allocation2] sm:$0xff]
        %v827 = vld [vmem:[#allocation2 + $0x8] sm:$0xff]
        %v828 = vpack.c.bf16 %v827, %v826
        %v829 = vld [vmem:[%s698] sm:$0xf]
        %v830 = vld [vmem:[%s698 + $0x4] sm:$0xf]
        %v831 = vld [vmem:[%s698 + $0x8] sm:$0xf]
        %v832 = vld [vmem:[%s698 + $0xc] sm:$0xf]
        %s833 = scalar_lea.vmem %s698, 16
        %v834 = vld [vmem:[%s833] sm:$0xf]
        %v835 = vld [vmem:[%s833 + $0x4] sm:$0xf]
        %v836 = vld [vmem:[%s833 + $0x8] sm:$0xf]
        %v837 = vld [vmem:[%s833 + $0xc] sm:$0xf]
        %s838 = scalar_lea.vmem %s698, 32
        %v839 = vld [vmem:[%s838] sm:$0xf]
        %v840 = vld [vmem:[%s838 + $0x4] sm:$0xf]
        %v841 = vld [vmem:[%s838 + $0x8] sm:$0xf]
        %v842 = vld [vmem:[%s838 + $0xc] sm:$0xf]
        %v843 = vld [vmem:[%s702] sm:$0x1]
        %v844 = vld [vmem:[%s702 + $0x1] sm:$0x1]
        %v845 = vld [vmem:[%s702 + $0x2] sm:$0x1]
        %v846 = vld [vmem:[%s702 + $0x3] sm:$0x1]
        %s847 = scalar_lea.vmem %s702, 4
        %v848 = vld [vmem:[%s847] sm:$0x1]
        %v849 = vld [vmem:[%s847 + $0x1] sm:$0x1]
        %v850 = vld [vmem:[%s847 + $0x2] sm:$0x1]
        %v851 = vld [vmem:[%s847 + $0x3] sm:$0x1]
        %s852 = scalar_lea.vmem %s702, 8
        %v853 = vld [vmem:[%s852] sm:$0x1]
        %v854 = vld [vmem:[%s852 + $0x1] sm:$0x1]
        %v855 = vld [vmem:[%s852 + $0x2] sm:$0x1]
        %v856 = vld [vmem:[%s852 + $0x3] sm:$0x1]
        %v857 = vld [vmem:[%s707] sm:$0xf]
        %v858 = vld [vmem:[%s707 + $0x4] sm:$0xf]
        %v859 = vld [vmem:[%s707 + $0x8] sm:$0xf]
        %v860 = vld [vmem:[%s707 + $0xc] sm:$0xf]
        %v861 = vld [vmem:[%s707 + $0x10] sm:$0xf]
        %v862 = vld [vmem:[%s707 + $0x14] sm:$0xf]
        %v863 = vld [vmem:[%s707 + $0x18] sm:$0xf]
        %v864 = vld [vmem:[%s707 + $0x1c] sm:$0xf]
        %v865 = vld [vmem:[%s707 + $0x20] sm:$0xf]
        %v866 = vld [vmem:[%s707 + $0x24] sm:$0xf]
        %v867 = vld [vmem:[%s707 + $0x28] sm:$0xf]
        %v868 = vld [vmem:[%s707 + $0x2c] sm:$0xf]
        %v869 = vld [vmem:[%s707 + $0x30] sm:$0xf]
        %v870 = vld [vmem:[%s707 + $0x34] sm:$0xf]
        %v871 = vld [vmem:[%s707 + $0x38] sm:$0xf]
        %v872 = vld [vmem:[%s707 + $0x3c] sm:$0xf]
        %v873 = vld [vmem:[%s710] sm:$0x1]
        %v875 = vlaneseq
        %v876 = vshrl.u32 %v875, 7
        %v877 = vsub.s32 0, %v876
        %v878 = vrot.slane %v873, %v877
        %v881 = vlaneseq
        %v882 = vshrl.u32 %v881, 7
        %v883 = vsub.s32 0, %v882
        %v884 = vrot.slane %v843, %v883
        %vm886 = vcmask 261120
        %v888 = vsel %vm886, %v828, 0
        %v891 = vsel %vm886, %v829, 0
        %893 = vmatprep.subr.bf16.mxu0 0
        %894 = vmatpush1.bf16.xpose.msra.mxu0 %v891
        %895 = vmatprep.subr.bf16.mxu0 0
        %896 = vmatpush1.bf16.xpose.msra.mxu0 0
        %897 = vmatprep.subr.bf16.mxu0 0
        %898 = vmatpush1.bf16.xpose.msra.mxu0 0
        %899 = vmatprep.subr.bf16.mxu0 0
        %900 = vmatpush1.bf16.xpose.msra.mxu0 0
        %901 = vmatprep.subr.bf16.mxu0 0
        %902 = vmatpush1.bf16.xpose.msra.mxu0 0
        %903 = vmatprep.subr.bf16.mxu0 0
        %904 = vmatpush1.bf16.xpose.msra.mxu0 0
        %905 = vmatprep.subr.bf16.mxu0 0
        %906 = vmatpush1.bf16.xpose.msra.mxu0 0
        %907 = vmatprep.subr.bf16.mxu0 0
        %908 = vmatpush1.bf16.xpose.msra.mxu0 0
        %909 = vmatprep.subr.bf16.mxu0 0
        %910 = vmatpush1.bf16.xpose.msra.mxu0 0
        %911 = vmatprep.subr.bf16.mxu0 0
        %912 = vmatpush1.bf16.xpose.msra.mxu0 0
        %913 = vmatprep.subr.bf16.mxu0 0
        %914 = vmatpush1.bf16.xpose.msra.mxu0 0
        %915 = vmatprep.subr.bf16.mxu0 0
        %916 = vmatpush1.bf16.xpose.msra.mxu0 0
        %917 = vmatprep.subr.bf16.mxu0 0
        %918 = vmatpush1.bf16.xpose.msra.mxu0 0
        %919 = vmatprep.subr.bf16.mxu0 0
        %920 = vmatpush1.bf16.xpose.msra.mxu0 0
        %921 = vmatprep.subr.bf16.mxu0 0
        %922 = vmatpush1.bf16.xpose.msra.mxu0 0
        %923 = vmatprep.subr.bf16.mxu0 0
        %924 = vmatpush1.bf16.xpose.msra.mxu0 0
        %925 = vmatprep.mubr.bf16.mxu0 0
        %926 = vmatmul.mubr.bf16.gmra.mrb[0].mxu0 %v888
        %v927 = vpop.f32.mrb[0].mxu0
        %v928 = vadd.f32 %v884, %v927
        %v929 = vpop.f32.mrb[0].mxu0
        %v930 = vpop.f32.mrb[0].mxu0
        %v931 = vadd.f32 %v884, %v930
        %v932 = vpop.f32.mrb[0].mxu0
        %933 = vdwg.mxu0
        %v935 = vlaneseq
        %v936 = vshrl.u32 %v935, 7
        %v937 = vsub.s32 0, %v936
        %v938 = vrot.slane %v848, %v937
        %v941 = vsel %vm886, %v834, 0
        %943 = vmatprep.subr.bf16.mxu0 0
        %944 = vmatpush1.bf16.xpose.msra.mxu0 %v941
        %945 = vmatprep.subr.bf16.mxu0 0
        %946 = vmatpush1.bf16.xpose.msra.mxu0 0
        %947 = vmatprep.subr.bf16.mxu0 0
        %948 = vmatpush1.bf16.xpose.msra.mxu0 0
        %949 = vmatprep.subr.bf16.mxu0 0
        %950 = vmatpush1.bf16.xpose.msra.mxu0 0
        %951 = vmatprep.subr.bf16.mxu0 0
        %952 = vmatpush1.bf16.xpose.msra.mxu0 0
        %953 = vmatprep.subr.bf16.mxu0 0
        %954 = vmatpush1.bf16.xpose.msra.mxu0 0
        %955 = vmatprep.subr.bf16.mxu0 0
        %956 = vmatpush1.bf16.xpose.msra.mxu0 0
        %957 = vmatprep.subr.bf16.mxu0 0
        %958 = vmatpush1.bf16.xpose.msra.mxu0 0
        %959 = vmatprep.subr.bf16.mxu0 0
        %960 = vmatpush1.bf16.xpose.msra.mxu0 0
        %961 = vmatprep.subr.bf16.mxu0 0
        %962 = vmatpush1.bf16.xpose.msra.mxu0 0
        %963 = vmatprep.subr.bf16.mxu0 0
        %964 = vmatpush1.bf16.xpose.msra.mxu0 0
        %965 = vmatprep.subr.bf16.mxu0 0
        %966 = vmatpush1.bf16.xpose.msra.mxu0 0
        %967 = vmatprep.subr.bf16.mxu0 0
        %968 = vmatpush1.bf16.xpose.msra.mxu0 0
        %969 = vmatprep.subr.bf16.mxu0 0
        %970 = vmatpush1.bf16.xpose.msra.mxu0 0
        %971 = vmatprep.subr.bf16.mxu0 0
        %972 = vmatpush1.bf16.xpose.msra.mxu0 0
        %973 = vmatprep.subr.bf16.mxu0 0
        %974 = vmatpush1.bf16.xpose.msra.mxu0 0
        %975 = vmatprep.mubr.bf16.mxu0 0
        %976 = vmatmul.mubr.bf16.gmra.mrb[0].mxu0 %v888
        %v977 = vpop.f32.mrb[0].mxu0
        %v978 = vadd.f32 %v938, %v977
        %v979 = vpop.f32.mrb[0].mxu0
        %v980 = vpop.f32.mrb[0].mxu0
        %v981 = vadd.f32 %v938, %v980
        %v982 = vpop.f32.mrb[0].mxu0
        %983 = vdwg.mxu0
        %v985 = vlaneseq
        %v986 = vshrl.u32 %v985, 7
        %v987 = vsub.s32 0, %v986
        %v988 = vrot.slane %v853, %v987
        %v991 = vsel %vm886, %v839, 0
        %993 = vmatprep.subr.bf16.mxu0 0
        %994 = vmatpush1.bf16.xpose.msra.mxu0 %v991
        %995 = vmatprep.subr.bf16.mxu0 0
        %996 = vmatpush1.bf16.xpose.msra.mxu0 0
        %997 = vmatprep.subr.bf16.mxu0 0
        %998 = vmatpush1.bf16.xpose.msra.mxu0 0
        %999 = vmatprep.subr.bf16.mxu0 0
        %1000 = vmatpush1.bf16.xpose.msra.mxu0 0
        %1001 = vmatprep.subr.bf16.mxu0 0
        %1002 = vmatpush1.bf16.xpose.msra.mxu0 0
        %1003 = vmatprep.subr.bf16.mxu0 0
        %1004 = vmatpush1.bf16.xpose.msra.mxu0 0
        %1005 = vmatprep.subr.bf16.mxu0 0
        %1006 = vmatpush1.bf16.xpose.msra.mxu0 0
        %1007 = vmatprep.subr.bf16.mxu0 0
        %1008 = vmatpush1.bf16.xpose.msra.mxu0 0
        %1009 = vmatprep.subr.bf16.mxu0 0
        %1010 = vmatpush1.bf16.xpose.msra.mxu0 0
        %1011 = vmatprep.subr.bf16.mxu0 0
        %1012 = vmatpush1.bf16.xpose.msra.mxu0 0
        %1013 = vmatprep.subr.bf16.mxu0 0
        %1014 = vmatpush1.bf16.xpose.msra.mxu0 0
        %1015 = vmatprep.subr.bf16.mxu0 0
        %1016 = vmatpush1.bf16.xpose.msra.mxu0 0
        %1017 = vmatprep.subr.bf16.mxu0 0
        %1018 = vmatpush1.bf16.xpose.msra.mxu0 0
        %1019 = vmatprep.subr.bf16.mxu0 0
        %1020 = vmatpush1.bf16.xpose.msra.mxu0 0
        %1021 = vmatprep.subr.bf16.mxu0 0
        %1022 = vmatpush1.bf16.xpose.msra.mxu0 0
        %1023 = vmatprep.subr.bf16.mxu0 0
        %1024 = vmatpush1.bf16.xpose.msra.mxu0 0
        %1025 = vmatprep.mubr.bf16.mxu0 0
        %1026 = vmatmul.mubr.bf16.gmra.mrb[0].mxu0 %v888
        %v1027 = vpop.f32.mrb[0].mxu0
        %v1028 = vadd.f32 %v988, %v1027
        %v1029 = vpop.f32.mrb[0].mxu0
        %v1030 = vpop.f32.mrb[0].mxu0
        %v1031 = vadd.f32 %v988, %v1030
        %v1032 = vpop.f32.mrb[0].mxu0
        %1033 = vdwg.mxu0
        %v1034 = vpack.c.bf16 %v928, %v928
        %v1035 = vpack.c.bf16 %v931, %v931
        %v1036 = vpack.c.bf16 %v978, %v978
        %v1037 = vpack.c.bf16 %v981, %v981
        %vm1038 = vcmask 64512
        %v1040 = vsel %vm1038, %v1034, 0
        %v1043 = vsel %vm1038, %v1036, 0
        %1045 = vmatprep.subr.bf16.mxu0 0
        %1046 = vmatpush1.bf16.xpose.msra.mxu0 %v1043
        %1047 = vmatprep.subr.bf16.mxu0 0
        %1048 = vmatpush1.bf16.xpose.msra.mxu0 0
        %1049 = vmatprep.subr.bf16.mxu0 0
        %1050 = vmatpush1.bf16.xpose.msra.mxu0 0
        %1051 = vmatprep.subr.bf16.mxu0 0
        %1052 = vmatpush1.bf16.xpose.msra.mxu0 0
        %1053 = vmatprep.subr.bf16.mxu0 0
        %1054 = vmatpush1.bf16.xpose.msra.mxu0 0
        %1055 = vmatprep.subr.bf16.mxu0 0
        %1056 = vmatpush1.bf16.xpose.msra.mxu0 0
        %1057 = vmatprep.subr.bf16.mxu0 0
        %1058 = vmatpush1.bf16.xpose.msra.mxu0 0
        %1059 = vmatprep.subr.bf16.mxu0 0
        %1060 = vmatpush1.bf16.xpose.msra.mxu0 0
        %1061 = vmatprep.subr.bf16.mxu0 0
        %1062 = vmatpush1.bf16.xpose.msra.mxu0 0
        %1063 = vmatprep.subr.bf16.mxu0 0
        %1064 = vmatpush1.bf16.xpose.msra.mxu0 0
        %1065 = vmatprep.subr.bf16.mxu0 0
        %1066 = vmatpush1.bf16.xpose.msra.mxu0 0
        %1067 = vmatprep.subr.bf16.mxu0 0
        %1068 = vmatpush1.bf16.xpose.msra.mxu0 0
        %1069 = vmatprep.subr.bf16.mxu0 0
        %1070 = vmatpush1.bf16.xpose.msra.mxu0 0
        %1071 = vmatprep.subr.bf16.mxu0 0
        %1072 = vmatpush1.bf16.xpose.msra.mxu0 0
        %1073 = vmatprep.subr.bf16.mxu0 0
        %1074 = vmatpush1.bf16.xpose.msra.mxu0 0
        %1075 = vmatprep.subr.bf16.mxu0 0
        %1076 = vmatpush1.bf16.xpose.msra.mxu0 0
        %1077 = vmatprep.mubr.bf16.mxu0 0
        %1078 = vmatmul.mubr.bf16.gmra.mrb[0].mxu0 %v1040
        %v1079 = vpop.f32.mrb[0].mxu0
        %v1080 = vadd.f32 0.0, %v1079
        %v1081 = vpop.f32.mrb[0].mxu0
        %v1082 = vpop.f32.mrb[0].mxu0
        %v1083 = vpop.f32.mrb[0].mxu0
        %1084 = vdwg.mxu0
        %v1086 = vsel %vm1038, %v1035, 0
        %v1089 = vsel %vm1038, %v1037, 0
        %1091 = vmatprep.subr.bf16.mxu0 0
        %1092 = vmatpush1.bf16.xpose.msra.mxu0 %v1089
        %1093 = vmatprep.subr.bf16.mxu0 0
        %1094 = vmatpush1.bf16.xpose.msra.mxu0 0
        %1095 = vmatprep.subr.bf16.mxu0 0
        %1096 = vmatpush1.bf16.xpose.msra.mxu0 0
        %1097 = vmatprep.subr.bf16.mxu0 0
        %1098 = vmatpush1.bf16.xpose.msra.mxu0 0
        %1099 = vmatprep.subr.bf16.mxu0 0
        %1100 = vmatpush1.bf16.xpose.msra.mxu0 0
        %1101 = vmatprep.subr.bf16.mxu0 0
        %1102 = vmatpush1.bf16.xpose.msra.mxu0 0
        %1103 = vmatprep.subr.bf16.mxu0 0
        %1104 = vmatpush1.bf16.xpose.msra.mxu0 0
        %1105 = vmatprep.subr.bf16.mxu0 0
        %1106 = vmatpush1.bf16.xpose.msra.mxu0 0
        %1107 = vmatprep.subr.bf16.mxu0 0
        %1108 = vmatpush1.bf16.xpose.msra.mxu0 0
        %1109 = vmatprep.subr.bf16.mxu0 0
        %1110 = vmatpush1.bf16.xpose.msra.mxu0 0
        %1111 = vmatprep.subr.bf16.mxu0 0
        %1112 = vmatpush1.bf16.xpose.msra.mxu0 0
        %1113 = vmatprep.subr.bf16.mxu0 0
        %1114 = vmatpush1.bf16.xpose.msra.mxu0 0
        %1115 = vmatprep.subr.bf16.mxu0 0
        %1116 = vmatpush1.bf16.xpose.msra.mxu0 0
        %1117 = vmatprep.subr.bf16.mxu0 0
        %1118 = vmatpush1.bf16.xpose.msra.mxu0 0
        %1119 = vmatprep.subr.bf16.mxu0 0
        %1120 = vmatpush1.bf16.xpose.msra.mxu0 0
        %1121 = vmatprep.subr.bf16.mxu0 0
        %1122 = vmatpush1.bf16.xpose.msra.mxu0 0
        %1123 = vmatprep.mubr.bf16.mxu0 0
        %1124 = vmatmul.mubr.bf16.gmra.mrb[0].mxu0 %v1086
        %v1125 = vpop.f32.mrb[0].mxu0
        %v1126 = vadd.f32 0.0, %v1125
        %v1127 = vpop.f32.mrb[0].mxu0
        %v1128 = vpop.f32.mrb[0].mxu0
        %v1129 = vpop.f32.mrb[0].mxu0
        %1130 = vdwg.mxu0
        %v1131 = vmul.f32 %v1080, 0.35355338
        %v1132 = vmul.f32 %v1126, 0.35355338
        %v1133 = vsel %vm1038, %v1131, -inf
        %1134 = vmax.xlane.f32.xlu0 %v1133
        %v1135 = vpop.xlane.xlu0 %1134
        %v1136 = vsel %vm1038, %v1132, -inf
        %1137 = vmax.xlane.f32.xlu0 %v1136
        %v1138 = vpop.xlane.xlu0 %1137
        %v1139 = vsub.f32 %v1131, %v1135
        %v1140 = vsub.f32 %v1132, %v1138
        %v1141 = vmul.f32 %v1139, 1.442695
        %v1142 = vpow.pop %v1141
        %v1143 = vmul.f32 %v1140, 1.442695
        %v1144 = vpow.pop %v1143
        %v1145 = vsel %vm1038, %v1142, 0.0
        %1146 = vadd.xlane.f32.xlu0 %v1145
        %v1147 = vpop.xlane.xlu0 %1146
        %v1148 = vsel %vm1038, %v1144, 0.0
        %1149 = vadd.xlane.f32.xlu0 %v1148
        %v1150 = vpop.xlane.xlu0 %1149
        %v1151 = vrcp.pop %v1147
        %v1152 = vrcp.pop %v1150
        %v1153 = vmul.f32 %v1142, %v1151
        %v1154 = vmul.f32 %v1144, %v1152
        %v1155 = vpack.c.bf16 %v1153, %v1153
        %v1156 = vpack.c.bf16 %v1154, %v1154
        %v1157 = vpack.c.bf16 %v1028, %v1028
        %v1158 = vpack.c.bf16 %v1031, %v1031
        %v1160 = vsel %vm1038, %v1155, 0
        %vm1162 = vcmask 1043456
        %v1164 = vsel %vm1162, %v1157, 0
        %1166 = vmatprep.subr.bf16.mxu0 0
        %1167 = vmatpush1.bf16.msra.mxu0 %v1164
        %1168 = vmatprep.subr.bf16.mxu0 0
        %1169 = vmatpush1.bf16.msra.mxu0 0
        %1170 = vmatprep.subr.bf16.mxu0 0
        %1171 = vmatpush1.bf16.msra.mxu0 0
        %1172 = vmatprep.subr.bf16.mxu0 0
        %1173 = vmatpush1.bf16.msra.mxu0 0
        %1174 = vmatprep.subr.bf16.mxu0 0
        %1175 = vmatpush1.bf16.msra.mxu0 0
        %1176 = vmatprep.subr.bf16.mxu0 0
        %1177 = vmatpush1.bf16.msra.mxu0 0
        %1178 = vmatprep.subr.bf16.mxu0 0
        %1179 = vmatpush1.bf16.msra.mxu0 0
        %1180 = vmatprep.subr.bf16.mxu0 0
        %1181 = vmatpush1.bf16.msra.mxu0 0
        %1182 = vmatprep.subr.bf16.mxu0 0
        %1183 = vmatpush1.bf16.msra.mxu0 0
        %1184 = vmatprep.subr.bf16.mxu0 0
        %1185 = vmatpush1.bf16.msra.mxu0 0
        %1186 = vmatprep.subr.bf16.mxu0 0
        %1187 = vmatpush1.bf16.msra.mxu0 0
        %1188 = vmatprep.subr.bf16.mxu0 0
        %1189 = vmatpush1.bf16.msra.mxu0 0
        %1190 = vmatprep.subr.bf16.mxu0 0
        %1191 = vmatpush1.bf16.msra.mxu0 0
        %1192 = vmatprep.subr.bf16.mxu0 0
        %1193 = vmatpush1.bf16.msra.mxu0 0
        %1194 = vmatprep.subr.bf16.mxu0 0
        %1195 = vmatpush1.bf16.msra.mxu0 0
        %1196 = vmatprep.subr.bf16.mxu0 0
        %1197 = vmatpush1.bf16.msra.mxu0 0
        %1198 = vmatprep.mubr.bf16.mxu0 0
        %1199 = vmatmul.mubr.bf16.gmra.mrb[0].mxu0 %v1160
        %v1200 = vpop.f32.mrb[0].mxu0
        %v1201 = vadd.f32 0.0, %v1200
        %v1202 = vpop.f32.mrb[0].mxu0
        %v1203 = vpop.f32.mrb[0].mxu0
        %v1204 = vpop.f32.mrb[0].mxu0
        %1205 = vdwg.mxu0
        %v1207 = vsel %vm1038, %v1156, 0
        %v1210 = vsel %vm1162, %v1158, 0
        %1212 = vmatprep.subr.bf16.mxu0 0
        %1213 = vmatpush1.bf16.msra.mxu0 %v1210
        %1214 = vmatprep.subr.bf16.mxu0 0
        %1215 = vmatpush1.bf16.msra.mxu0 0
        %1216 = vmatprep.subr.bf16.mxu0 0
        %1217 = vmatpush1.bf16.msra.mxu0 0
        %1218 = vmatprep.subr.bf16.mxu0 0
        %1219 = vmatpush1.bf16.msra.mxu0 0
        %1220 = vmatprep.subr.bf16.mxu0 0
        %1221 = vmatpush1.bf16.msra.mxu0 0
        %1222 = vmatprep.subr.bf16.mxu0 0
        %1223 = vmatpush1.bf16.msra.mxu0 0
        %1224 = vmatprep.subr.bf16.mxu0 0
        %1225 = vmatpush1.bf16.msra.mxu0 0
        %1226 = vmatprep.subr.bf16.mxu0 0
        %1227 = vmatpush1.bf16.msra.mxu0 0
        %1228 = vmatprep.subr.bf16.mxu0 0
        %1229 = vmatpush1.bf16.msra.mxu0 0
        %1230 = vmatprep.subr.bf16.mxu0 0
        %1231 = vmatpush1.bf16.msra.mxu0 0
        %1232 = vmatprep.subr.bf16.mxu0 0
        %1233 = vmatpush1.bf16.msra.mxu0 0
        %1234 = vmatprep.subr.bf16.mxu0 0
        %1235 = vmatpush1.bf16.msra.mxu0 0
        %1236 = vmatprep.subr.bf16.mxu0 0
        %1237 = vmatpush1.bf16.msra.mxu0 0
        %1238 = vmatprep.subr.bf16.mxu0 0
        %1239 = vmatpush1.bf16.msra.mxu0 0
        %1240 = vmatprep.subr.bf16.mxu0 0
        %1241 = vmatpush1.bf16.msra.mxu0 0
        %1242 = vmatprep.subr.bf16.mxu0 0
        %1243 = vmatpush1.bf16.msra.mxu0 0
        %1244 = vmatprep.mubr.bf16.mxu0 0
        %1245 = vmatmul.mubr.bf16.gmra.mrb[0].mxu0 %v1207
        %v1246 = vpop.f32.mrb[0].mxu0
        %v1247 = vadd.f32 0.0, %v1246
        %v1248 = vpop.f32.mrb[0].mxu0
        %v1249 = vpop.f32.mrb[0].mxu0
        %v1250 = vpop.f32.mrb[0].mxu0
        %1251 = vdwg.mxu0
        %v1252 = vpack.c.bf16 %v1247, %v1201
        %v1257 = vunpack.c.l.b16 %v857
        %v1258 = vunpack.c.l.b16 %v858
        %v1259 = vunpack.c.l.b16 %v859
        %v1260 = vunpack.c.l.b16 %v860
        %v1261 = vpack.c.b16 %v1258, %v1257
        %v1262 = vpack.c.b16 %v1260, %v1259
        %v1264 = vsel %vm1038, %v1252, 0
        %v1267 = vsel %vm1038, %v1261, 0
        %v1270 = vsel %vm1038, %v1262, 0
        %1272 = vmatprep.subr.bf16.mxu0 0
        %1273 = vmatpush1.bf16.xpose.msra.mxu0 %v1267
        %1274 = vmatprep.subr.bf16.mxu0 0
        %1275 = vmatpush1.bf16.xpose.msra.mxu0 %v1270
        %1276 = vmatprep.subr.bf16.mxu0 0
        %1277 = vmatpush1.bf16.xpose.msra.mxu0 0
        %1278 = vmatprep.subr.bf16.mxu0 0
        %1279 = vmatpush1.bf16.xpose.msra.mxu0 0
        %1280 = vmatprep.subr.bf16.mxu0 0
        %1281 = vmatpush1.bf16.xpose.msra.mxu0 0
        %1282 = vmatprep.subr.bf16.mxu0 0
        %1283 = vmatpush1.bf16.xpose.msra.mxu0 0
        %1284 = vmatprep.subr.bf16.mxu0 0
        %1285 = vmatpush1.bf16.xpose.msra.mxu0 0
        %1286 = vmatprep.subr.bf16.mxu0 0
        %1287 = vmatpush1.bf16.xpose.msra.mxu0 0
        %1288 = vmatprep.subr.bf16.mxu0 0
        %1289 = vmatpush1.bf16.xpose.msra.mxu0 0
        %1290 = vmatprep.subr.bf16.mxu0 0
        %1291 = vmatpush1.bf16.xpose.msra.mxu0 0
        %1292 = vmatprep.subr.bf16.mxu0 0
        %1293 = vmatpush1.bf16.xpose.msra.mxu0 0
        %1294 = vmatprep.subr.bf16.mxu0 0
        %1295 = vmatpush1.bf16.xpose.msra.mxu0 0
        %1296 = vmatprep.subr.bf16.mxu0 0
        %1297 = vmatpush1.bf16.xpose.msra.mxu0 0
        %1298 = vmatprep.subr.bf16.mxu0 0
        %1299 = vmatpush1.bf16.xpose.msra.mxu0 0
        %1300 = vmatprep.subr.bf16.mxu0 0
        %1301 = vmatpush1.bf16.xpose.msra.mxu0 0
        %1302 = vmatprep.subr.bf16.mxu0 0
        %1303 = vmatpush1.bf16.xpose.msra.mxu0 0
        %1304 = vmatprep.mubr.bf16.mxu0 0
        %1305 = vmatmul.mubr.bf16.gmra.mrb[0].mxu0 %v1264
        %v1306 = vpop.f32.mrb[0].mxu0
        %v1307 = vadd.f32 0.0, %v1306
        %v1308 = vpop.f32.mrb[0].mxu0
        %v1309 = vpop.f32.mrb[0].mxu0
        %v1310 = vadd.f32 0.0, %v1309
        %v1311 = vpop.f32.mrb[0].mxu0
        %1312 = vdwg.mxu0
        %v1313 = vadd.f32 %v878, %v1307
        %v1314 = vadd.f32 %v878, %v1310
        %v1316 = vlaneseq
        %v1317 = vshrl.u32 %v1316, 7
        %v1318 = vsub.s32 0, %v1317
        %v1319 = vrot.slane %v844, %v1318
        %v1322 = vsel %vm886, %v830, 0
        %1324 = vmatprep.subr.bf16.mxu0 0
        %1325 = vmatpush1.bf16.xpose.msra.mxu0 %v1322
        %1326 = vmatprep.subr.bf16.mxu0 0
        %1327 = vmatpush1.bf16.xpose.msra.mxu0 0
        %1328 = vmatprep.subr.bf16.mxu0 0
        %1329 = vmatpush1.bf16.xpose.msra.mxu0 0
        %1330 = vmatprep.subr.bf16.mxu0 0
        %1331 = vmatpush1.bf16.xpose.msra.mxu0 0
        %1332 = vmatprep.subr.bf16.mxu0 0
        %1333 = vmatpush1.bf16.xpose.msra.mxu0 0
        %1334 = vmatprep.subr.bf16.mxu0 0
        %1335 = vmatpush1.bf16.xpose.msra.mxu0 0
        %1336 = vmatprep.subr.bf16.mxu0 0
        %1337 = vmatpush1.bf16.xpose.msra.mxu0 0
        %1338 = vmatprep.subr.bf16.mxu0 0
        %1339 = vmatpush1.bf16.xpose.msra.mxu0 0
        %1340 = vmatprep.subr.bf16.mxu0 0
        %1341 = vmatpush1.bf16.xpose.msra.mxu0 0
        %1342 = vmatprep.subr.bf16.mxu0 0
        %1343 = vmatpush1.bf16.xpose.msra.mxu0 0
        %1344 = vmatprep.subr.bf16.mxu0 0
        %1345 = vmatpush1.bf16.xpose.msra.mxu0 0
        %1346 = vmatprep.subr.bf16.mxu0 0
        %1347 = vmatpush1.bf16.xpose.msra.mxu0 0
        %1348 = vmatprep.subr.bf16.mxu0 0
        %1349 = vmatpush1.bf16.xpose.msra.mxu0 0
        %1350 = vmatprep.subr.bf16.mxu0 0
        %1351 = vmatpush1.bf16.xpose.msra.mxu0 0
        %1352 = vmatprep.subr.bf16.mxu0 0
        %1353 = vmatpush1.bf16.xpose.msra.mxu0 0
        %1354 = vmatprep.subr.bf16.mxu0 0
        %1355 = vmatpush1.bf16.xpose.msra.mxu0 0
        %1356 = vmatprep.mubr.bf16.mxu0 0
        %1357 = vmatmul.mubr.bf16.gmra.mrb[0].mxu0 %v888
        %v1358 = vpop.f32.mrb[0].mxu0
        %v1359 = vadd.f32 %v1319, %v1358
        %v1360 = vpop.f32.mrb[0].mxu0
        %v1361 = vpop.f32.mrb[0].mxu0
        %v1362 = vadd.f32 %v1319, %v1361
        %v1363 = vpop.f32.mrb[0].mxu0
        %1364 = vdwg.mxu0
        %v1366 = vlaneseq
        %v1367 = vshrl.u32 %v1366, 7
        %v1368 = vsub.s32 0, %v1367
        %v1369 = vrot.slane %v849, %v1368
        %v1372 = vsel %vm886, %v835, 0
        %1374 = vmatprep.subr.bf16.mxu0 0
        %1375 = vmatpush1.bf16.xpose.msra.mxu0 %v1372
        %1376 = vmatprep.subr.bf16.mxu0 0
        %1377 = vmatpush1.bf16.xpose.msra.mxu0 0
        %1378 = vmatprep.subr.bf16.mxu0 0
        %1379 = vmatpush1.bf16.xpose.msra.mxu0 0
        %1380 = vmatprep.subr.bf16.mxu0 0
        %1381 = vmatpush1.bf16.xpose.msra.mxu0 0
        %1382 = vmatprep.subr.bf16.mxu0 0
        %1383 = vmatpush1.bf16.xpose.msra.mxu0 0
        %1384 = vmatprep.subr.bf16.mxu0 0
        %1385 = vmatpush1.bf16.xpose.msra.mxu0 0
        %1386 = vmatprep.subr.bf16.mxu0 0
        %1387 = vmatpush1.bf16.xpose.msra.mxu0 0
        %1388 = vmatprep.subr.bf16.mxu0 0
        %1389 = vmatpush1.bf16.xpose.msra.mxu0 0
        %1390 = vmatprep.subr.bf16.mxu0 0
        %1391 = vmatpush1.bf16.xpose.msra.mxu0 0
        %1392 = vmatprep.subr.bf16.mxu0 0
        %1393 = vmatpush1.bf16.xpose.msra.mxu0 0
        %1394 = vmatprep.subr.bf16.mxu0 0
        %1395 = vmatpush1.bf16.xpose.msra.mxu0 0
        %1396 = vmatprep.subr.bf16.mxu0 0
        %1397 = vmatpush1.bf16.xpose.msra.mxu0 0
        %1398 = vmatprep.subr.bf16.mxu0 0
        %1399 = vmatpush1.bf16.xpose.msra.mxu0 0
        %1400 = vmatprep.subr.bf16.mxu0 0
        %1401 = vmatpush1.bf16.xpose.msra.mxu0 0
        %1402 = vmatprep.subr.bf16.mxu0 0
        %1403 = vmatpush1.bf16.xpose.msra.mxu0 0
        %1404 = vmatprep.subr.bf16.mxu0 0
        %1405 = vmatpush1.bf16.xpose.msra.mxu0 0
        %1406 = vmatprep.mubr.bf16.mxu0 0
        %1407 = vmatmul.mubr.bf16.gmra.mrb[0].mxu0 %v888
        %v1408 = vpop.f32.mrb[0].mxu0
        %v1409 = vadd.f32 %v1369, %v1408
        %v1410 = vpop.f32.mrb[0].mxu0
        %v1411 = vpop.f32.mrb[0].mxu0
        %v1412 = vadd.f32 %v1369, %v1411
        %v1413 = vpop.f32.mrb[0].mxu0
        %1414 = vdwg.mxu0
        %v1416 = vlaneseq
        %v1417 = vshrl.u32 %v1416, 7
        %v1418 = vsub.s32 0, %v1417
        %v1419 = vrot.slane %v854, %v1418
        %v1422 = vsel %vm886, %v840, 0
        %1424 = vmatprep.subr.bf16.mxu0 0
        %1425 = vmatpush1.bf16.xpose.msra.mxu0 %v1422
        %1426 = vmatprep.subr.bf16.mxu0 0
        %1427 = vmatpush1.bf16.xpose.msra.mxu0 0
        %1428 = vmatprep.subr.bf16.mxu0 0
        %1429 = vmatpush1.bf16.xpose.msra.mxu0 0
        %1430 = vmatprep.subr.bf16.mxu0 0
        %1431 = vmatpush1.bf16.xpose.msra.mxu0 0
        %1432 = vmatprep.subr.bf16.mxu0 0
        %1433 = vmatpush1.bf16.xpose.msra.mxu0 0
        %1434 = vmatprep.subr.bf16.mxu0 0
        %1435 = vmatpush1.bf16.xpose.msra.mxu0 0
        %1436 = vmatprep.subr.bf16.mxu0 0
        %1437 = vmatpush1.bf16.xpose.msra.mxu0 0
        %1438 = vmatprep.subr.bf16.mxu0 0
        %1439 = vmatpush1.bf16.xpose.msra.mxu0 0
        %1440 = vmatprep.subr.bf16.mxu0 0
        %1441 = vmatpush1.bf16.xpose.msra.mxu0 0
        %1442 = vmatprep.subr.bf16.mxu0 0
        %1443 = vmatpush1.bf16.xpose.msra.mxu0 0
        %1444 = vmatprep.subr.bf16.mxu0 0
        %1445 = vmatpush1.bf16.xpose.msra.mxu0 0
        %1446 = vmatprep.subr.bf16.mxu0 0
        %1447 = vmatpush1.bf16.xpose.msra.mxu0 0
        %1448 = vmatprep.subr.bf16.mxu0 0
        %1449 = vmatpush1.bf16.xpose.msra.mxu0 0
        %1450 = vmatprep.subr.bf16.mxu0 0
        %1451 = vmatpush1.bf16.xpose.msra.mxu0 0
        %1452 = vmatprep.subr.bf16.mxu0 0
        %1453 = vmatpush1.bf16.xpose.msra.mxu0 0
        %1454 = vmatprep.subr.bf16.mxu0 0
        %1455 = vmatpush1.bf16.xpose.msra.mxu0 0
        %1456 = vmatprep.mubr.bf16.mxu0 0
        %1457 = vmatmul.mubr.bf16.gmra.mrb[0].mxu0 %v888
        %v1458 = vpop.f32.mrb[0].mxu0
        %v1459 = vadd.f32 %v1419, %v1458
        %v1460 = vpop.f32.mrb[0].mxu0
        %v1461 = vpop.f32.mrb[0].mxu0
        %v1462 = vadd.f32 %v1419, %v1461
        %v1463 = vpop.f32.mrb[0].mxu0
        %1464 = vdwg.mxu0
        %v1465 = vpack.c.bf16 %v1359, %v1359
        %v1466 = vpack.c.bf16 %v1362, %v1362
        %v1467 = vpack.c.bf16 %v1409, %v1409
        %v1468 = vpack.c.bf16 %v1412, %v1412
        %v1470 = vsel %vm1038, %v1465, 0
        %v1473 = vsel %vm1038, %v1467, 0
        %1475 = vmatprep.subr.bf16.mxu0 0
        %1476 = vmatpush1.bf16.xpose.msra.mxu0 %v1473
        %1477 = vmatprep.subr.bf16.mxu0 0
        %1478 = vmatpush1.bf16.xpose.msra.mxu0 0
        %1479 = vmatprep.subr.bf16.mxu0 0
        %1480 = vmatpush1.bf16.xpose.msra.mxu0 0
        %1481 = vmatprep.subr.bf16.mxu0 0
        %1482 = vmatpush1.bf16.xpose.msra.mxu0 0
        %1483 = vmatprep.subr.bf16.mxu0 0
        %1484 = vmatpush1.bf16.xpose.msra.mxu0 0
        %1485 = vmatprep.subr.bf16.mxu0 0
        %1486 = vmatpush1.bf16.xpose.msra.mxu0 0
        %1487 = vmatprep.subr.bf16.mxu0 0
        %1488 = vmatpush1.bf16.xpose.msra.mxu0 0
        %1489 = vmatprep.subr.bf16.mxu0 0
        %1490 = vmatpush1.bf16.xpose.msra.mxu0 0
        %1491 = vmatprep.subr.bf16.mxu0 0
        %1492 = vmatpush1.bf16.xpose.msra.mxu0 0
        %1493 = vmatprep.subr.bf16.mxu0 0
        %1494 = vmatpush1.bf16.xpose.msra.mxu0 0
        %1495 = vmatprep.subr.bf16.mxu0 0
        %1496 = vmatpush1.bf16.xpose.msra.mxu0 0
        %1497 = vmatprep.subr.bf16.mxu0 0
        %1498 = vmatpush1.bf16.xpose.msra.mxu0 0
        %1499 = vmatprep.subr.bf16.mxu0 0
        %1500 = vmatpush1.bf16.xpose.msra.mxu0 0
        %1501 = vmatprep.subr.bf16.mxu0 0
        %1502 = vmatpush1.bf16.xpose.msra.mxu0 0
        %1503 = vmatprep.subr.bf16.mxu0 0
        %1504 = vmatpush1.bf16.xpose.msra.mxu0 0
        %1505 = vmatprep.subr.bf16.mxu0 0
        %1506 = vmatpush1.bf16.xpose.msra.mxu0 0
        %1507 = vmatprep.mubr.bf16.mxu0 0
        %1508 = vmatmul.mubr.bf16.gmra.mrb[0].mxu0 %v1470
        %v1509 = vpop.f32.mrb[0].mxu0
        %v1510 = vadd.f32 0.0, %v1509
        %v1511 = vpop.f32.mrb[0].mxu0
        %v1512 = vpop.f32.mrb[0].mxu0
        %v1513 = vpop.f32.mrb[0].mxu0
        %1514 = vdwg.mxu0
        %v1516 = vsel %vm1038, %v1466, 0
        %v1519 = vsel %vm1038, %v1468, 0
        %1521 = vmatprep.subr.bf16.mxu0 0
        %1522 = vmatpush1.bf16.xpose.msra.mxu0 %v1519
        %1523 = vmatprep.subr.bf16.mxu0 0
        %1524 = vmatpush1.bf16.xpose.msra.mxu0 0
        %1525 = vmatprep.subr.bf16.mxu0 0
        %1526 = vmatpush1.bf16.xpose.msra.mxu0 0
        %1527 = vmatprep.subr.bf16.mxu0 0
        %1528 = vmatpush1.bf16.xpose.msra.mxu0 0
        %1529 = vmatprep.subr.bf16.mxu0 0
        %1530 = vmatpush1.bf16.xpose.msra.mxu0 0
        %1531 = vmatprep.subr.bf16.mxu0 0
        %1532 = vmatpush1.bf16.xpose.msra.mxu0 0
        %1533 = vmatprep.subr.bf16.mxu0 0
        %1534 = vmatpush1.bf16.xpose.msra.mxu0 0
        %1535 = vmatprep.subr.bf16.mxu0 0
        %1536 = vmatpush1.bf16.xpose.msra.mxu0 0
        %1537 = vmatprep.subr.bf16.mxu0 0
        %1538 = vmatpush1.bf16.xpose.msra.mxu0 0
        %1539 = vmatprep.subr.bf16.mxu0 0
        %1540 = vmatpush1.bf16.xpose.msra.mxu0 0
        %1541 = vmatprep.subr.bf16.mxu0 0
        %1542 = vmatpush1.bf16.xpose.msra.mxu0 0
        %1543 = vmatprep.subr.bf16.mxu0 0
        %1544 = vmatpush1.bf16.xpose.msra.mxu0 0
        %1545 = vmatprep.subr.bf16.mxu0 0
        %1546 = vmatpush1.bf16.xpose.msra.mxu0 0
        %1547 = vmatprep.subr.bf16.mxu0 0
        %1548 = vmatpush1.bf16.xpose.msra.mxu0 0
        %1549 = vmatprep.subr.bf16.mxu0 0
        %1550 = vmatpush1.bf16.xpose.msra.mxu0 0
        %1551 = vmatprep.subr.bf16.mxu0 0
        %1552 = vmatpush1.bf16.xpose.msra.mxu0 0
        %1553 = vmatprep.mubr.bf16.mxu0 0
        %1554 = vmatmul.mubr.bf16.gmra.mrb[0].mxu0 %v1516
        %v1555 = vpop.f32.mrb[0].mxu0
        %v1556 = vadd.f32 0.0, %v1555
        %v1557 = vpop.f32.mrb[0].mxu0
        %v1558 = vpop.f32.mrb[0].mxu0
        %v1559 = vpop.f32.mrb[0].mxu0
        %1560 = vdwg.mxu0
        %v1561 = vmul.f32 %v1510, 0.35355338
        %v1562 = vmul.f32 %v1556, 0.35355338
        %v1563 = vsel %vm1038, %v1561, -inf
        %1564 = vmax.xlane.f32.xlu0 %v1563
        %v1565 = vpop.xlane.xlu0 %1564
        %v1566 = vsel %vm1038, %v1562, -inf
        %1567 = vmax.xlane.f32.xlu0 %v1566
        %v1568 = vpop.xlane.xlu0 %1567
        %v1569 = vsub.f32 %v1561, %v1565
        %v1570 = vsub.f32 %v1562, %v1568
        %v1571 = vmul.f32 %v1569, 1.442695
        %v1572 = vpow.pop %v1571
        %v1573 = vmul.f32 %v1570, 1.442695
        %v1574 = vpow.pop %v1573
        %v1575 = vsel %vm1038, %v1572, 0.0
        %1576 = vadd.xlane.f32.xlu0 %v1575
        %v1577 = vpop.xlane.xlu0 %1576
        %v1578 = vsel %vm1038, %v1574, 0.0
        %1579 = vadd.xlane.f32.xlu0 %v1578
        %v1580 = vpop.xlane.xlu0 %1579
        %v1581 = vrcp.pop %v1577
        %v1582 = vrcp.pop %v1580
        %v1583 = vmul.f32 %v1572, %v1581
        %v1584 = vmul.f32 %v1574, %v1582
        %v1585 = vpack.c.bf16 %v1583, %v1583
        %v1586 = vpack.c.bf16 %v1584, %v1584
        %v1587 = vpack.c.bf16 %v1459, %v1459
        %v1588 = vpack.c.bf16 %v1462, %v1462
        %v1590 = vsel %vm1038, %v1585, 0
        %v1593 = vsel %vm1162, %v1587, 0
        %1595 = vmatprep.subr.bf16.mxu0 0
        %1596 = vmatpush1.bf16.msra.mxu0 %v1593
        %1597 = vmatprep.subr.bf16.mxu0 0
        %1598 = vmatpush1.bf16.msra.mxu0 0
        %1599 = vmatprep.subr.bf16.mxu0 0
        %1600 = vmatpush1.bf16.msra.mxu0 0
        %1601 = vmatprep.subr.bf16.mxu0 0
        %1602 = vmatpush1.bf16.msra.mxu0 0
        %1603 = vmatprep.subr.bf16.mxu0 0
        %1604 = vmatpush1.bf16.msra.mxu0 0
        %1605 = vmatprep.subr.bf16.mxu0 0
        %1606 = vmatpush1.bf16.msra.mxu0 0
        %1607 = vmatprep.subr.bf16.mxu0 0
        %1608 = vmatpush1.bf16.msra.mxu0 0
        %1609 = vmatprep.subr.bf16.mxu0 0
        %1610 = vmatpush1.bf16.msra.mxu0 0
        %1611 = vmatprep.subr.bf16.mxu0 0
        %1612 = vmatpush1.bf16.msra.mxu0 0
        %1613 = vmatprep.subr.bf16.mxu0 0
        %1614 = vmatpush1.bf16.msra.mxu0 0
        %1615 = vmatprep.subr.bf16.mxu0 0
        %1616 = vmatpush1.bf16.msra.mxu0 0
        %1617 = vmatprep.subr.bf16.mxu0 0
        %1618 = vmatpush1.bf16.msra.mxu0 0
        %1619 = vmatprep.subr.bf16.mxu0 0
        %1620 = vmatpush1.bf16.msra.mxu0 0
        %1621 = vmatprep.subr.bf16.mxu0 0
        %1622 = vmatpush1.bf16.msra.mxu0 0
        %1623 = vmatprep.subr.bf16.mxu0 0
        %1624 = vmatpush1.bf16.msra.mxu0 0
        %1625 = vmatprep.subr.bf16.mxu0 0
        %1626 = vmatpush1.bf16.msra.mxu0 0
        %1627 = vmatprep.mubr.bf16.mxu0 0
        %1628 = vmatmul.mubr.bf16.gmra.mrb[0].mxu0 %v1590
        %v1629 = vpop.f32.mrb[0].mxu0
        %v1630 = vadd.f32 0.0, %v1629
        %v1631 = vpop.f32.mrb[0].mxu0
        %v1632 = vpop.f32.mrb[0].mxu0
        %v1633 = vpop.f32.mrb[0].mxu0
        %1634 = vdwg.mxu0
        %v1636 = vsel %vm1038, %v1586, 0
        %v1639 = vsel %vm1162, %v1588, 0
        %1641 = vmatprep.subr.bf16.mxu0 0
        %1642 = vmatpush1.bf16.msra.mxu0 %v1639
        %1643 = vmatprep.subr.bf16.mxu0 0
        %1644 = vmatpush1.bf16.msra.mxu0 0
        %1645 = vmatprep.subr.bf16.mxu0 0
        %1646 = vmatpush1.bf16.msra.mxu0 0
        %1647 = vmatprep.subr.bf16.mxu0 0
        %1648 = vmatpush1.bf16.msra.mxu0 0
        %1649 = vmatprep.subr.bf16.mxu0 0
        %1650 = vmatpush1.bf16.msra.mxu0 0
        %1651 = vmatprep.subr.bf16.mxu0 0
        %1652 = vmatpush1.bf16.msra.mxu0 0
        %1653 = vmatprep.subr.bf16.mxu0 0
        %1654 = vmatpush1.bf16.msra.mxu0 0
        %1655 = vmatprep.subr.bf16.mxu0 0
        %1656 = vmatpush1.bf16.msra.mxu0 0
        %1657 = vmatprep.subr.bf16.mxu0 0
        %1658 = vmatpush1.bf16.msra.mxu0 0
        %1659 = vmatprep.subr.bf16.mxu0 0
        %1660 = vmatpush1.bf16.msra.mxu0 0
        %1661 = vmatprep.subr.bf16.mxu0 0
        %1662 = vmatpush1.bf16.msra.mxu0 0
        %1663 = vmatprep.subr.bf16.mxu0 0
        %1664 = vmatpush1.bf16.msra.mxu0 0
        %1665 = vmatprep.subr.bf16.mxu0 0
        %1666 = vmatpush1.bf16.msra.mxu0 0
        %1667 = vmatprep.subr.bf16.mxu0 0
        %1668 = vmatpush1.bf16.msra.mxu0 0
        %1669 = vmatprep.subr.bf16.mxu0 0
        %1670 = vmatpush1.bf16.msra.mxu0 0
        %1671 = vmatprep.subr.bf16.mxu0 0
        %1672 = vmatpush1.bf16.msra.mxu0 0
        %1673 = vmatprep.mubr.bf16.mxu0 0
        %1674 = vmatmul.mubr.bf16.gmra.mrb[0].mxu0 %v1636
        %v1675 = vpop.f32.mrb[0].mxu0
        %v1676 = vadd.f32 0.0, %v1675
        %v1677 = vpop.f32.mrb[0].mxu0
        %v1678 = vpop.f32.mrb[0].mxu0
        %v1679 = vpop.f32.mrb[0].mxu0
        %1680 = vdwg.mxu0
        %v1681 = vpack.c.bf16 %v1676, %v1630
        %v1686 = vunpack.c.l.b16 %v861
        %v1687 = vunpack.c.l.b16 %v862
        %v1688 = vunpack.c.l.b16 %v863
        %v1689 = vunpack.c.l.b16 %v864
        %v1690 = vpack.c.b16 %v1687, %v1686
        %v1691 = vpack.c.b16 %v1689, %v1688
        %v1693 = vsel %vm1038, %v1681, 0
        %v1696 = vsel %vm1038, %v1690, 0
        %v1699 = vsel %vm1038, %v1691, 0
        %1701 = vmatprep.subr.bf16.mxu0 0
        %1702 = vmatpush1.bf16.xpose.msra.mxu0 %v1696
        %1703 = vmatprep.subr.bf16.mxu0 0
        %1704 = vmatpush1.bf16.xpose.msra.mxu0 %v1699
        %1705 = vmatprep.subr.bf16.mxu0 0
        %1706 = vmatpush1.bf16.xpose.msra.mxu0 0
        %1707 = vmatprep.subr.bf16.mxu0 0
        %1708 = vmatpush1.bf16.xpose.msra.mxu0 0
        %1709 = vmatprep.subr.bf16.mxu0 0
        %1710 = vmatpush1.bf16.xpose.msra.mxu0 0
        %1711 = vmatprep.subr.bf16.mxu0 0
        %1712 = vmatpush1.bf16.xpose.msra.mxu0 0
        %1713 = vmatprep.subr.bf16.mxu0 0
        %1714 = vmatpush1.bf16.xpose.msra.mxu0 0
        %1715 = vmatprep.subr.bf16.mxu0 0
        %1716 = vmatpush1.bf16.xpose.msra.mxu0 0
        %1717 = vmatprep.subr.bf16.mxu0 0
        %1718 = vmatpush1.bf16.xpose.msra.mxu0 0
        %1719 = vmatprep.subr.bf16.mxu0 0
        %1720 = vmatpush1.bf16.xpose.msra.mxu0 0
        %1721 = vmatprep.subr.bf16.mxu0 0
        %1722 = vmatpush1.bf16.xpose.msra.mxu0 0
        %1723 = vmatprep.subr.bf16.mxu0 0
        %1724 = vmatpush1.bf16.xpose.msra.mxu0 0
        %1725 = vmatprep.subr.bf16.mxu0 0
        %1726 = vmatpush1.bf16.xpose.msra.mxu0 0
        %1727 = vmatprep.subr.bf16.mxu0 0
        %1728 = vmatpush1.bf16.xpose.msra.mxu0 0
        %1729 = vmatprep.subr.bf16.mxu0 0
        %1730 = vmatpush1.bf16.xpose.msra.mxu0 0
        %1731 = vmatprep.subr.bf16.mxu0 0
        %1732 = vmatpush1.bf16.xpose.msra.mxu0 0
        %1733 = vmatprep.mubr.bf16.mxu0 0
        %1734 = vmatmul.mubr.bf16.gmra.mrb[0].mxu0 %v1693
        %v1735 = vpop.f32.mrb[0].mxu0
        %v1736 = vadd.f32 0.0, %v1735
        %v1737 = vpop.f32.mrb[0].mxu0
        %v1738 = vpop.f32.mrb[0].mxu0
        %v1739 = vadd.f32 0.0, %v1738
        %v1740 = vpop.f32.mrb[0].mxu0
        %1741 = vdwg.mxu0
        %v1742 = vadd.f32 %v1313, %v1736
        %v1743 = vadd.f32 %v1314, %v1739
        %v1745 = vlaneseq
        %v1746 = vshrl.u32 %v1745, 7
        %v1747 = vsub.s32 0, %v1746
        %v1748 = vrot.slane %v845, %v1747
        %v1751 = vsel %vm886, %v831, 0
        %1753 = vmatprep.subr.bf16.mxu0 0
        %1754 = vmatpush1.bf16.xpose.msra.mxu0 %v1751
        %1755 = vmatprep.subr.bf16.mxu0 0
        %1756 = vmatpush1.bf16.xpose.msra.mxu0 0
        %1757 = vmatprep.subr.bf16.mxu0 0
        %1758 = vmatpush1.bf16.xpose.msra.mxu0 0
        %1759 = vmatprep.subr.bf16.mxu0 0
        %1760 = vmatpush1.bf16.xpose.msra.mxu0 0
        %1761 = vmatprep.subr.bf16.mxu0 0
        %1762 = vmatpush1.bf16.xpose.msra.mxu0 0
        %1763 = vmatprep.subr.bf16.mxu0 0
        %1764 = vmatpush1.bf16.xpose.msra.mxu0 0
        %1765 = vmatprep.subr.bf16.mxu0 0
        %1766 = vmatpush1.bf16.xpose.msra.mxu0 0
        %1767 = vmatprep.subr.bf16.mxu0 0
        %1768 = vmatpush1.bf16.xpose.msra.mxu0 0
        %1769 = vmatprep.subr.bf16.mxu0 0
        %1770 = vmatpush1.bf16.xpose.msra.mxu0 0
        %1771 = vmatprep.subr.bf16.mxu0 0
        %1772 = vmatpush1.bf16.xpose.msra.mxu0 0
        %1773 = vmatprep.subr.bf16.mxu0 0
        %1774 = vmatpush1.bf16.xpose.msra.mxu0 0
        %1775 = vmatprep.subr.bf16.mxu0 0
        %1776 = vmatpush1.bf16.xpose.msra.mxu0 0
        %1777 = vmatprep.subr.bf16.mxu0 0
        %1778 = vmatpush1.bf16.xpose.msra.mxu0 0
        %1779 = vmatprep.subr.bf16.mxu0 0
        %1780 = vmatpush1.bf16.xpose.msra.mxu0 0
        %1781 = vmatprep.subr.bf16.mxu0 0
        %1782 = vmatpush1.bf16.xpose.msra.mxu0 0
        %1783 = vmatprep.subr.bf16.mxu0 0
        %1784 = vmatpush1.bf16.xpose.msra.mxu0 0
        %1785 = vmatprep.mubr.bf16.mxu0 0
        %1786 = vmatmul.mubr.bf16.gmra.mrb[0].mxu0 %v888
        %v1787 = vpop.f32.mrb[0].mxu0
        %v1788 = vadd.f32 %v1748, %v1787
        %v1789 = vpop.f32.mrb[0].mxu0
        %v1790 = vpop.f32.mrb[0].mxu0
        %v1791 = vadd.f32 %v1748, %v1790
        %v1792 = vpop.f32.mrb[0].mxu0
        %1793 = vdwg.mxu0
        %v1795 = vlaneseq
        %v1796 = vshrl.u32 %v1795, 7
        %v1797 = vsub.s32 0, %v1796
        %v1798 = vrot.slane %v850, %v1797
        %v1801 = vsel %vm886, %v836, 0
        %1803 = vmatprep.subr.bf16.mxu0 0
        %1804 = vmatpush1.bf16.xpose.msra.mxu0 %v1801
        %1805 = vmatprep.subr.bf16.mxu0 0
        %1806 = vmatpush1.bf16.xpose.msra.mxu0 0
        %1807 = vmatprep.subr.bf16.mxu0 0
        %1808 = vmatpush1.bf16.xpose.msra.mxu0 0
        %1809 = vmatprep.subr.bf16.mxu0 0
        %1810 = vmatpush1.bf16.xpose.msra.mxu0 0
        %1811 = vmatprep.subr.bf16.mxu0 0
        %1812 = vmatpush1.bf16.xpose.msra.mxu0 0
        %1813 = vmatprep.subr.bf16.mxu0 0
        %1814 = vmatpush1.bf16.xpose.msra.mxu0 0
        %1815 = vmatprep.subr.bf16.mxu0 0
        %1816 = vmatpush1.bf16.xpose.msra.mxu0 0
        %1817 = vmatprep.subr.bf16.mxu0 0
        %1818 = vmatpush1.bf16.xpose.msra.mxu0 0
        %1819 = vmatprep.subr.bf16.mxu0 0
        %1820 = vmatpush1.bf16.xpose.msra.mxu0 0
        %1821 = vmatprep.subr.bf16.mxu0 0
        %1822 = vmatpush1.bf16.xpose.msra.mxu0 0
        %1823 = vmatprep.subr.bf16.mxu0 0
        %1824 = vmatpush1.bf16.xpose.msra.mxu0 0
        %1825 = vmatprep.subr.bf16.mxu0 0
        %1826 = vmatpush1.bf16.xpose.msra.mxu0 0
        %1827 = vmatprep.subr.bf16.mxu0 0
        %1828 = vmatpush1.bf16.xpose.msra.mxu0 0
        %1829 = vmatprep.subr.bf16.mxu0 0
        %1830 = vmatpush1.bf16.xpose.msra.mxu0 0
        %1831 = vmatprep.subr.bf16.mxu0 0
        %1832 = vmatpush1.bf16.xpose.msra.mxu0 0
        %1833 = vmatprep.subr.bf16.mxu0 0
        %1834 = vmatpush1.bf16.xpose.msra.mxu0 0
        %1835 = vmatprep.mubr.bf16.mxu0 0
        %1836 = vmatmul.mubr.bf16.gmra.mrb[0].mxu0 %v888
        %v1837 = vpop.f32.mrb[0].mxu0
        %v1838 = vadd.f32 %v1798, %v1837
        %v1839 = vpop.f32.mrb[0].mxu0
        %v1840 = vpop.f32.mrb[0].mxu0
        %v1841 = vadd.f32 %v1798, %v1840
        %v1842 = vpop.f32.mrb[0].mxu0
        %1843 = vdwg.mxu0
        %v1845 = vlaneseq
        %v1846 = vshrl.u32 %v1845, 7
        %v1847 = vsub.s32 0, %v1846
        %v1848 = vrot.slane %v855, %v1847
        %v1851 = vsel %vm886, %v841, 0
        %1853 = vmatprep.subr.bf16.mxu0 0
        %1854 = vmatpush1.bf16.xpose.msra.mxu0 %v1851
        %1855 = vmatprep.subr.bf16.mxu0 0
        %1856 = vmatpush1.bf16.xpose.msra.mxu0 0
        %1857 = vmatprep.subr.bf16.mxu0 0
        %1858 = vmatpush1.bf16.xpose.msra.mxu0 0
        %1859 = vmatprep.subr.bf16.mxu0 0
        %1860 = vmatpush1.bf16.xpose.msra.mxu0 0
        %1861 = vmatprep.subr.bf16.mxu0 0
        %1862 = vmatpush1.bf16.xpose.msra.mxu0 0
        %1863 = vmatprep.subr.bf16.mxu0 0
        %1864 = vmatpush1.bf16.xpose.msra.mxu0 0
        %1865 = vmatprep.subr.bf16.mxu0 0
        %1866 = vmatpush1.bf16.xpose.msra.mxu0 0
        %1867 = vmatprep.subr.bf16.mxu0 0
        %1868 = vmatpush1.bf16.xpose.msra.mxu0 0
        %1869 = vmatprep.subr.bf16.mxu0 0
        %1870 = vmatpush1.bf16.xpose.msra.mxu0 0
        %1871 = vmatprep.subr.bf16.mxu0 0
        %1872 = vmatpush1.bf16.xpose.msra.mxu0 0
        %1873 = vmatprep.subr.bf16.mxu0 0
        %1874 = vmatpush1.bf16.xpose.msra.mxu0 0
        %1875 = vmatprep.subr.bf16.mxu0 0
        %1876 = vmatpush1.bf16.xpose.msra.mxu0 0
        %1877 = vmatprep.subr.bf16.mxu0 0
        %1878 = vmatpush1.bf16.xpose.msra.mxu0 0
        %1879 = vmatprep.subr.bf16.mxu0 0
        %1880 = vmatpush1.bf16.xpose.msra.mxu0 0
        %1881 = vmatprep.subr.bf16.mxu0 0
        %1882 = vmatpush1.bf16.xpose.msra.mxu0 0
        %1883 = vmatprep.subr.bf16.mxu0 0
        %1884 = vmatpush1.bf16.xpose.msra.mxu0 0
        %1885 = vmatprep.mubr.bf16.mxu0 0
        %1886 = vmatmul.mubr.bf16.gmra.mrb[0].mxu0 %v888
        %v1887 = vpop.f32.mrb[0].mxu0
        %v1888 = vadd.f32 %v1848, %v1887
        %v1889 = vpop.f32.mrb[0].mxu0
        %v1890 = vpop.f32.mrb[0].mxu0
        %v1891 = vadd.f32 %v1848, %v1890
        %v1892 = vpop.f32.mrb[0].mxu0
        %1893 = vdwg.mxu0
        %v1894 = vpack.c.bf16 %v1788, %v1788
        %v1895 = vpack.c.bf16 %v1791, %v1791
        %v1896 = vpack.c.bf16 %v1838, %v1838
        %v1897 = vpack.c.bf16 %v1841, %v1841
        %v1899 = vsel %vm1038, %v1894, 0
        %v1902 = vsel %vm1038, %v1896, 0
        %1904 = vmatprep.subr.bf16.mxu0 0
        %1905 = vmatpush1.bf16.xpose.msra.mxu0 %v1902
        %1906 = vmatprep.subr.bf16.mxu0 0
        %1907 = vmatpush1.bf16.xpose.msra.mxu0 0
        %1908 = vmatprep.subr.bf16.mxu0 0
        %1909 = vmatpush1.bf16.xpose.msra.mxu0 0
        %1910 = vmatprep.subr.bf16.mxu0 0
        %1911 = vmatpush1.bf16.xpose.msra.mxu0 0
        %1912 = vmatprep.subr.bf16.mxu0 0
        %1913 = vmatpush1.bf16.xpose.msra.mxu0 0
        %1914 = vmatprep.subr.bf16.mxu0 0
        %1915 = vmatpush1.bf16.xpose.msra.mxu0 0
        %1916 = vmatprep.subr.bf16.mxu0 0
        %1917 = vmatpush1.bf16.xpose.msra.mxu0 0
        %1918 = vmatprep.subr.bf16.mxu0 0
        %1919 = vmatpush1.bf16.xpose.msra.mxu0 0
        %1920 = vmatprep.subr.bf16.mxu0 0
        %1921 = vmatpush1.bf16.xpose.msra.mxu0 0
        %1922 = vmatprep.subr.bf16.mxu0 0
        %1923 = vmatpush1.bf16.xpose.msra.mxu0 0
        %1924 = vmatprep.subr.bf16.mxu0 0
        %1925 = vmatpush1.bf16.xpose.msra.mxu0 0
        %1926 = vmatprep.subr.bf16.mxu0 0
        %1927 = vmatpush1.bf16.xpose.msra.mxu0 0
        %1928 = vmatprep.subr.bf16.mxu0 0
        %1929 = vmatpush1.bf16.xpose.msra.mxu0 0
        %1930 = vmatprep.subr.bf16.mxu0 0
        %1931 = vmatpush1.bf16.xpose.msra.mxu0 0
        %1932 = vmatprep.subr.bf16.mxu0 0
        %1933 = vmatpush1.bf16.xpose.msra.mxu0 0
        %1934 = vmatprep.subr.bf16.mxu0 0
        %1935 = vmatpush1.bf16.xpose.msra.mxu0 0
        %1936 = vmatprep.mubr.bf16.mxu0 0
        %1937 = vmatmul.mubr.bf16.gmra.mrb[0].mxu0 %v1899
        %v1938 = vpop.f32.mrb[0].mxu0
        %v1939 = vadd.f32 0.0, %v1938
        %v1940 = vpop.f32.mrb[0].mxu0
        %v1941 = vpop.f32.mrb[0].mxu0
        %v1942 = vpop.f32.mrb[0].mxu0
        %1943 = vdwg.mxu0
        %v1945 = vsel %vm1038, %v1895, 0
        %v1948 = vsel %vm1038, %v1897, 0
        %1950 = vmatprep.subr.bf16.mxu0 0
        %1951 = vmatpush1.bf16.xpose.msra.mxu0 %v1948
        %1952 = vmatprep.subr.bf16.mxu0 0
        %1953 = vmatpush1.bf16.xpose.msra.mxu0 0
        %1954 = vmatprep.subr.bf16.mxu0 0
        %1955 = vmatpush1.bf16.xpose.msra.mxu0 0
        %1956 = vmatprep.subr.bf16.mxu0 0
        %1957 = vmatpush1.bf16.xpose.msra.mxu0 0
        %1958 = vmatprep.subr.bf16.mxu0 0
        %1959 = vmatpush1.bf16.xpose.msra.mxu0 0
        %1960 = vmatprep.subr.bf16.mxu0 0
        %1961 = vmatpush1.bf16.xpose.msra.mxu0 0
        %1962 = vmatprep.subr.bf16.mxu0 0
        %1963 = vmatpush1.bf16.xpose.msra.mxu0 0
        %1964 = vmatprep.subr.bf16.mxu0 0
        %1965 = vmatpush1.bf16.xpose.msra.mxu0 0
        %1966 = vmatprep.subr.bf16.mxu0 0
        %1967 = vmatpush1.bf16.xpose.msra.mxu0 0
        %1968 = vmatprep.subr.bf16.mxu0 0
        %1969 = vmatpush1.bf16.xpose.msra.mxu0 0
        %1970 = vmatprep.subr.bf16.mxu0 0
        %1971 = vmatpush1.bf16.xpose.msra.mxu0 0
        %1972 = vmatprep.subr.bf16.mxu0 0
        %1973 = vmatpush1.bf16.xpose.msra.mxu0 0
        %1974 = vmatprep.subr.bf16.mxu0 0
        %1975 = vmatpush1.bf16.xpose.msra.mxu0 0
        %1976 = vmatprep.subr.bf16.mxu0 0
        %1977 = vmatpush1.bf16.xpose.msra.mxu0 0
        %1978 = vmatprep.subr.bf16.mxu0 0
        %1979 = vmatpush1.bf16.xpose.msra.mxu0 0
        %1980 = vmatprep.subr.bf16.mxu0 0
        %1981 = vmatpush1.bf16.xpose.msra.mxu0 0
        %1982 = vmatprep.mubr.bf16.mxu0 0
        %1983 = vmatmul.mubr.bf16.gmra.mrb[0].mxu0 %v1945
        %v1984 = vpop.f32.mrb[0].mxu0
        %v1985 = vadd.f32 0.0, %v1984
        %v1986 = vpop.f32.mrb[0].mxu0
        %v1987 = vpop.f32.mrb[0].mxu0
        %v1988 = vpop.f32.mrb[0].mxu0
        %1989 = vdwg.mxu0
        %v1990 = vmul.f32 %v1939, 0.35355338
        %v1991 = vmul.f32 %v1985, 0.35355338
        %v1992 = vsel %vm1038, %v1990, -inf
        %1993 = vmax.xlane.f32.xlu0 %v1992
        %v1994 = vpop.xlane.xlu0 %1993
        %v1995 = vsel %vm1038, %v1991, -inf
        %1996 = vmax.xlane.f32.xlu0 %v1995
        %v1997 = vpop.xlane.xlu0 %1996
        %v1998 = vsub.f32 %v1990, %v1994
        %v1999 = vsub.f32 %v1991, %v1997
        %v2000 = vmul.f32 %v1998, 1.442695
        %v2001 = vpow.pop %v2000
        %v2002 = vmul.f32 %v1999, 1.442695
        %v2003 = vpow.pop %v2002
        %v2004 = vsel %vm1038, %v2001, 0.0
        %2005 = vadd.xlane.f32.xlu0 %v2004
        %v2006 = vpop.xlane.xlu0 %2005
        %v2007 = vsel %vm1038, %v2003, 0.0
        %2008 = vadd.xlane.f32.xlu0 %v2007
        %v2009 = vpop.xlane.xlu0 %2008
        %v2010 = vrcp.pop %v2006
        %v2011 = vrcp.pop %v2009
        %v2012 = vmul.f32 %v2001, %v2010
        %v2013 = vmul.f32 %v2003, %v2011
        %v2014 = vpack.c.bf16 %v2012, %v2012
        %v2015 = vpack.c.bf16 %v2013, %v2013
        %v2016 = vpack.c.bf16 %v1888, %v1888
        %v2017 = vpack.c.bf16 %v1891, %v1891
        %v2019 = vsel %vm1038, %v2014, 0
        %v2022 = vsel %vm1162, %v2016, 0
        %2024 = vmatprep.subr.bf16.mxu0 0
        %2025 = vmatpush1.bf16.msra.mxu0 %v2022
        %2026 = vmatprep.subr.bf16.mxu0 0
        %2027 = vmatpush1.bf16.msra.mxu0 0
        %2028 = vmatprep.subr.bf16.mxu0 0
        %2029 = vmatpush1.bf16.msra.mxu0 0
        %2030 = vmatprep.subr.bf16.mxu0 0
        %2031 = vmatpush1.bf16.msra.mxu0 0
        %2032 = vmatprep.subr.bf16.mxu0 0
        %2033 = vmatpush1.bf16.msra.mxu0 0
        %2034 = vmatprep.subr.bf16.mxu0 0
        %2035 = vmatpush1.bf16.msra.mxu0 0
        %2036 = vmatprep.subr.bf16.mxu0 0
        %2037 = vmatpush1.bf16.msra.mxu0 0
        %2038 = vmatprep.subr.bf16.mxu0 0
        %2039 = vmatpush1.bf16.msra.mxu0 0
        %2040 = vmatprep.subr.bf16.mxu0 0
        %2041 = vmatpush1.bf16.msra.mxu0 0
        %2042 = vmatprep.subr.bf16.mxu0 0
        %2043 = vmatpush1.bf16.msra.mxu0 0
        %2044 = vmatprep.subr.bf16.mxu0 0
        %2045 = vmatpush1.bf16.msra.mxu0 0
        %2046 = vmatprep.subr.bf16.mxu0 0
        %2047 = vmatpush1.bf16.msra.mxu0 0
        %2048 = vmatprep.subr.bf16.mxu0 0
        %2049 = vmatpush1.bf16.msra.mxu0 0
        %2050 = vmatprep.subr.bf16.mxu0 0
        %2051 = vmatpush1.bf16.msra.mxu0 0
        %2052 = vmatprep.subr.bf16.mxu0 0
        %2053 = vmatpush1.bf16.msra.mxu0 0
        %2054 = vmatprep.subr.bf16.mxu0 0
        %2055 = vmatpush1.bf16.msra.mxu0 0
        %2056 = vmatprep.mubr.bf16.mxu0 0
        %2057 = vmatmul.mubr.bf16.gmra.mrb[0].mxu0 %v2019
        %v2058 = vpop.f32.mrb[0].mxu0
        %v2059 = vadd.f32 0.0, %v2058
        %v2060 = vpop.f32.mrb[0].mxu0
        %v2061 = vpop.f32.mrb[0].mxu0
        %v2062 = vpop.f32.mrb[0].mxu0
        %2063 = vdwg.mxu0
        %v2065 = vsel %vm1038, %v2015, 0
        %v2068 = vsel %vm1162, %v2017, 0
        %2070 = vmatprep.subr.bf16.mxu0 0
        %2071 = vmatpush1.bf16.msra.mxu0 %v2068
        %2072 = vmatprep.subr.bf16.mxu0 0
        %2073 = vmatpush1.bf16.msra.mxu0 0
        %2074 = vmatprep.subr.bf16.mxu0 0
        %2075 = vmatpush1.bf16.msra.mxu0 0
        %2076 = vmatprep.subr.bf16.mxu0 0
        %2077 = vmatpush1.bf16.msra.mxu0 0
        %2078 = vmatprep.subr.bf16.mxu0 0
        %2079 = vmatpush1.bf16.msra.mxu0 0
        %2080 = vmatprep.subr.bf16.mxu0 0
        %2081 = vmatpush1.bf16.msra.mxu0 0
        %2082 = vmatprep.subr.bf16.mxu0 0
        %2083 = vmatpush1.bf16.msra.mxu0 0
        %2084 = vmatprep.subr.bf16.mxu0 0
        %2085 = vmatpush1.bf16.msra.mxu0 0
        %2086 = vmatprep.subr.bf16.mxu0 0
        %2087 = vmatpush1.bf16.msra.mxu0 0
        %2088 = vmatprep.subr.bf16.mxu0 0
        %2089 = vmatpush1.bf16.msra.mxu0 0
        %2090 = vmatprep.subr.bf16.mxu0 0
        %2091 = vmatpush1.bf16.msra.mxu0 0
        %2092 = vmatprep.subr.bf16.mxu0 0
        %2093 = vmatpush1.bf16.msra.mxu0 0
        %2094 = vmatprep.subr.bf16.mxu0 0
        %2095 = vmatpush1.bf16.msra.mxu0 0
        %2096 = vmatprep.subr.bf16.mxu0 0
        %2097 = vmatpush1.bf16.msra.mxu0 0
        %2098 = vmatprep.subr.bf16.mxu0 0
        %2099 = vmatpush1.bf16.msra.mxu0 0
        %2100 = vmatprep.subr.bf16.mxu0 0
        %2101 = vmatpush1.bf16.msra.mxu0 0
        %2102 = vmatprep.mubr.bf16.mxu0 0
        %2103 = vmatmul.mubr.bf16.gmra.mrb[0].mxu0 %v2065
        %v2104 = vpop.f32.mrb[0].mxu0
        %v2105 = vadd.f32 0.0, %v2104
        %v2106 = vpop.f32.mrb[0].mxu0
        %v2107 = vpop.f32.mrb[0].mxu0
        %v2108 = vpop.f32.mrb[0].mxu0
        %2109 = vdwg.mxu0
        %v2110 = vpack.c.bf16 %v2105, %v2059
        %v2115 = vunpack.c.l.b16 %v865
        %v2116 = vunpack.c.l.b16 %v866
        %v2117 = vunpack.c.l.b16 %v867
        %v2118 = vunpack.c.l.b16 %v868
        %v2119 = vpack.c.b16 %v2116, %v2115
        %v2120 = vpack.c.b16 %v2118, %v2117
        %v2122 = vsel %vm1038, %v2110, 0
        %v2125 = vsel %vm1038, %v2119, 0
        %v2128 = vsel %vm1038, %v2120, 0
        %2130 = vmatprep.subr.bf16.mxu0 0
        %2131 = vmatpush1.bf16.xpose.msra.mxu0 %v2125
        %2132 = vmatprep.subr.bf16.mxu0 0
        %2133 = vmatpush1.bf16.xpose.msra.mxu0 %v2128
        %2134 = vmatprep.subr.bf16.mxu0 0
        %2135 = vmatpush1.bf16.xpose.msra.mxu0 0
        %2136 = vmatprep.subr.bf16.mxu0 0
        %2137 = vmatpush1.bf16.xpose.msra.mxu0 0
        %2138 = vmatprep.subr.bf16.mxu0 0
        %2139 = vmatpush1.bf16.xpose.msra.mxu0 0
        %2140 = vmatprep.subr.bf16.mxu0 0
        %2141 = vmatpush1.bf16.xpose.msra.mxu0 0
        %2142 = vmatprep.subr.bf16.mxu0 0
        %2143 = vmatpush1.bf16.xpose.msra.mxu0 0
        %2144 = vmatprep.subr.bf16.mxu0 0
        %2145 = vmatpush1.bf16.xpose.msra.mxu0 0
        %2146 = vmatprep.subr.bf16.mxu0 0
        %2147 = vmatpush1.bf16.xpose.msra.mxu0 0
        %2148 = vmatprep.subr.bf16.mxu0 0
        %2149 = vmatpush1.bf16.xpose.msra.mxu0 0
        %2150 = vmatprep.subr.bf16.mxu0 0
        %2151 = vmatpush1.bf16.xpose.msra.mxu0 0
        %2152 = vmatprep.subr.bf16.mxu0 0
        %2153 = vmatpush1.bf16.xpose.msra.mxu0 0
        %2154 = vmatprep.subr.bf16.mxu0 0
        %2155 = vmatpush1.bf16.xpose.msra.mxu0 0
        %2156 = vmatprep.subr.bf16.mxu0 0
        %2157 = vmatpush1.bf16.xpose.msra.mxu0 0
        %2158 = vmatprep.subr.bf16.mxu0 0
        %2159 = vmatpush1.bf16.xpose.msra.mxu0 0
        %2160 = vmatprep.subr.bf16.mxu0 0
        %2161 = vmatpush1.bf16.xpose.msra.mxu0 0
        %2162 = vmatprep.mubr.bf16.mxu0 0
        %2163 = vmatmul.mubr.bf16.gmra.mrb[0].mxu0 %v2122
        %v2164 = vpop.f32.mrb[0].mxu0
        %v2165 = vadd.f32 0.0, %v2164
        %v2166 = vpop.f32.mrb[0].mxu0
        %v2167 = vpop.f32.mrb[0].mxu0
        %v2168 = vadd.f32 0.0, %v2167
        %v2169 = vpop.f32.mrb[0].mxu0
        %2170 = vdwg.mxu0
        %v2171 = vadd.f32 %v1742, %v2165
        %v2172 = vadd.f32 %v1743, %v2168
        %v2174 = vlaneseq
        %v2175 = vshrl.u32 %v2174, 7
        %v2176 = vsub.s32 0, %v2175
        %v2177 = vrot.slane %v846, %v2176
        %v2180 = vsel %vm886, %v832, 0
        %2182 = vmatprep.subr.bf16.mxu0 0
        %2183 = vmatpush1.bf16.xpose.msra.mxu0 %v2180
        %2184 = vmatprep.subr.bf16.mxu0 0
        %2185 = vmatpush1.bf16.xpose.msra.mxu0 0
        %2186 = vmatprep.subr.bf16.mxu0 0
        %2187 = vmatpush1.bf16.xpose.msra.mxu0 0
        %2188 = vmatprep.subr.bf16.mxu0 0
        %2189 = vmatpush1.bf16.xpose.msra.mxu0 0
        %2190 = vmatprep.subr.bf16.mxu0 0
        %2191 = vmatpush1.bf16.xpose.msra.mxu0 0
        %2192 = vmatprep.subr.bf16.mxu0 0
        %2193 = vmatpush1.bf16.xpose.msra.mxu0 0
        %2194 = vmatprep.subr.bf16.mxu0 0
        %2195 = vmatpush1.bf16.xpose.msra.mxu0 0
        %2196 = vmatprep.subr.bf16.mxu0 0
        %2197 = vmatpush1.bf16.xpose.msra.mxu0 0
        %2198 = vmatprep.subr.bf16.mxu0 0
        %2199 = vmatpush1.bf16.xpose.msra.mxu0 0
        %2200 = vmatprep.subr.bf16.mxu0 0
        %2201 = vmatpush1.bf16.xpose.msra.mxu0 0
        %2202 = vmatprep.subr.bf16.mxu0 0
        %2203 = vmatpush1.bf16.xpose.msra.mxu0 0
        %2204 = vmatprep.subr.bf16.mxu0 0
        %2205 = vmatpush1.bf16.xpose.msra.mxu0 0
        %2206 = vmatprep.subr.bf16.mxu0 0
        %2207 = vmatpush1.bf16.xpose.msra.mxu0 0
        %2208 = vmatprep.subr.bf16.mxu0 0
        %2209 = vmatpush1.bf16.xpose.msra.mxu0 0
        %2210 = vmatprep.subr.bf16.mxu0 0
        %2211 = vmatpush1.bf16.xpose.msra.mxu0 0
        %2212 = vmatprep.subr.bf16.mxu0 0
        %2213 = vmatpush1.bf16.xpose.msra.mxu0 0
        %2214 = vmatprep.mubr.bf16.mxu0 0
        %2215 = vmatmul.mubr.bf16.gmra.mrb[0].mxu0 %v888
        %v2216 = vpop.f32.mrb[0].mxu0
        %v2217 = vadd.f32 %v2177, %v2216
        %v2218 = vpop.f32.mrb[0].mxu0
        %v2219 = vpop.f32.mrb[0].mxu0
        %v2220 = vadd.f32 %v2177, %v2219
        %v2221 = vpop.f32.mrb[0].mxu0
        %2222 = vdwg.mxu0
        %v2224 = vlaneseq
        %v2225 = vshrl.u32 %v2224, 7
        %v2226 = vsub.s32 0, %v2225
        %v2227 = vrot.slane %v851, %v2226
        %v2230 = vsel %vm886, %v837, 0
        %2232 = vmatprep.subr.bf16.mxu0 0
        %2233 = vmatpush1.bf16.xpose.msra.mxu0 %v2230
        %2234 = vmatprep.subr.bf16.mxu0 0
        %2235 = vmatpush1.bf16.xpose.msra.mxu0 0
        %2236 = vmatprep.subr.bf16.mxu0 0
        %2237 = vmatpush1.bf16.xpose.msra.mxu0 0
        %2238 = vmatprep.subr.bf16.mxu0 0
        %2239 = vmatpush1.bf16.xpose.msra.mxu0 0
        %2240 = vmatprep.subr.bf16.mxu0 0
        %2241 = vmatpush1.bf16.xpose.msra.mxu0 0
        %2242 = vmatprep.subr.bf16.mxu0 0
        %2243 = vmatpush1.bf16.xpose.msra.mxu0 0
        %2244 = vmatprep.subr.bf16.mxu0 0
        %2245 = vmatpush1.bf16.xpose.msra.mxu0 0
        %2246 = vmatprep.subr.bf16.mxu0 0
        %2247 = vmatpush1.bf16.xpose.msra.mxu0 0
        %2248 = vmatprep.subr.bf16.mxu0 0
        %2249 = vmatpush1.bf16.xpose.msra.mxu0 0
        %2250 = vmatprep.subr.bf16.mxu0 0
        %2251 = vmatpush1.bf16.xpose.msra.mxu0 0
        %2252 = vmatprep.subr.bf16.mxu0 0
        %2253 = vmatpush1.bf16.xpose.msra.mxu0 0
        %2254 = vmatprep.subr.bf16.mxu0 0
        %2255 = vmatpush1.bf16.xpose.msra.mxu0 0
        %2256 = vmatprep.subr.bf16.mxu0 0
        %2257 = vmatpush1.bf16.xpose.msra.mxu0 0
        %2258 = vmatprep.subr.bf16.mxu0 0
        %2259 = vmatpush1.bf16.xpose.msra.mxu0 0
        %2260 = vmatprep.subr.bf16.mxu0 0
        %2261 = vmatpush1.bf16.xpose.msra.mxu0 0
        %2262 = vmatprep.subr.bf16.mxu0 0
        %2263 = vmatpush1.bf16.xpose.msra.mxu0 0
        %2264 = vmatprep.mubr.bf16.mxu0 0
        %2265 = vmatmul.mubr.bf16.gmra.mrb[0].mxu0 %v888
        %v2266 = vpop.f32.mrb[0].mxu0
        %v2267 = vadd.f32 %v2227, %v2266
        %v2268 = vpop.f32.mrb[0].mxu0
        %v2269 = vpop.f32.mrb[0].mxu0
        %v2270 = vadd.f32 %v2227, %v2269
        %v2271 = vpop.f32.mrb[0].mxu0
        %2272 = vdwg.mxu0
        %v2274 = vlaneseq
        %v2275 = vshrl.u32 %v2274, 7
        %v2276 = vsub.s32 0, %v2275
        %v2277 = vrot.slane %v856, %v2276
        %v2280 = vsel %vm886, %v842, 0
        %2282 = vmatprep.subr.bf16.mxu0 0
        %2283 = vmatpush1.bf16.xpose.msra.mxu0 %v2280
        %2284 = vmatprep.subr.bf16.mxu0 0
        %2285 = vmatpush1.bf16.xpose.msra.mxu0 0
        %2286 = vmatprep.subr.bf16.mxu0 0
        %2287 = vmatpush1.bf16.xpose.msra.mxu0 0
        %2288 = vmatprep.subr.bf16.mxu0 0
        %2289 = vmatpush1.bf16.xpose.msra.mxu0 0
        %2290 = vmatprep.subr.bf16.mxu0 0
        %2291 = vmatpush1.bf16.xpose.msra.mxu0 0
        %2292 = vmatprep.subr.bf16.mxu0 0
        %2293 = vmatpush1.bf16.xpose.msra.mxu0 0
        %2294 = vmatprep.subr.bf16.mxu0 0
        %2295 = vmatpush1.bf16.xpose.msra.mxu0 0
        %2296 = vmatprep.subr.bf16.mxu0 0
        %2297 = vmatpush1.bf16.xpose.msra.mxu0 0
        %2298 = vmatprep.subr.bf16.mxu0 0
        %2299 = vmatpush1.bf16.xpose.msra.mxu0 0
        %2300 = vmatprep.subr.bf16.mxu0 0
        %2301 = vmatpush1.bf16.xpose.msra.mxu0 0
        %2302 = vmatprep.subr.bf16.mxu0 0
        %2303 = vmatpush1.bf16.xpose.msra.mxu0 0
        %2304 = vmatprep.subr.bf16.mxu0 0
        %2305 = vmatpush1.bf16.xpose.msra.mxu0 0
        %2306 = vmatprep.subr.bf16.mxu0 0
        %2307 = vmatpush1.bf16.xpose.msra.mxu0 0
        %2308 = vmatprep.subr.bf16.mxu0 0
        %2309 = vmatpush1.bf16.xpose.msra.mxu0 0
        %2310 = vmatprep.subr.bf16.mxu0 0
        %2311 = vmatpush1.bf16.xpose.msra.mxu0 0
        %2312 = vmatprep.subr.bf16.mxu0 0
        %2313 = vmatpush1.bf16.xpose.msra.mxu0 0
        %2314 = vmatprep.mubr.bf16.mxu0 0
        %2315 = vmatmul.mubr.bf16.gmra.mrb[0].mxu0 %v888
        %v2316 = vpop.f32.mrb[0].mxu0
        %v2317 = vadd.f32 %v2277, %v2316
        %v2318 = vpop.f32.mrb[0].mxu0
        %v2319 = vpop.f32.mrb[0].mxu0
        %v2320 = vadd.f32 %v2277, %v2319
        %v2321 = vpop.f32.mrb[0].mxu0
        %2322 = vdwg.mxu0
        %v2323 = vpack.c.bf16 %v2217, %v2217
        %v2324 = vpack.c.bf16 %v2220, %v2220
        %v2325 = vpack.c.bf16 %v2267, %v2267
        %v2326 = vpack.c.bf16 %v2270, %v2270
        %v2328 = vsel %vm1038, %v2323, 0
        %v2331 = vsel %vm1038, %v2325, 0
        %2333 = vmatprep.subr.bf16.mxu0 0
        %2334 = vmatpush1.bf16.xpose.msra.mxu0 %v2331
        %2335 = vmatprep.subr.bf16.mxu0 0
        %2336 = vmatpush1.bf16.xpose.msra.mxu0 0
        %2337 = vmatprep.subr.bf16.mxu0 0
        %2338 = vmatpush1.bf16.xpose.msra.mxu0 0
        %2339 = vmatprep.subr.bf16.mxu0 0
        %2340 = vmatpush1.bf16.xpose.msra.mxu0 0
        %2341 = vmatprep.subr.bf16.mxu0 0
        %2342 = vmatpush1.bf16.xpose.msra.mxu0 0
        %2343 = vmatprep.subr.bf16.mxu0 0
        %2344 = vmatpush1.bf16.xpose.msra.mxu0 0
        %2345 = vmatprep.subr.bf16.mxu0 0
        %2346 = vmatpush1.bf16.xpose.msra.mxu0 0
        %2347 = vmatprep.subr.bf16.mxu0 0
        %2348 = vmatpush1.bf16.xpose.msra.mxu0 0
        %2349 = vmatprep.subr.bf16.mxu0 0
        %2350 = vmatpush1.bf16.xpose.msra.mxu0 0
        %2351 = vmatprep.subr.bf16.mxu0 0
        %2352 = vmatpush1.bf16.xpose.msra.mxu0 0
        %2353 = vmatprep.subr.bf16.mxu0 0
        %2354 = vmatpush1.bf16.xpose.msra.mxu0 0
        %2355 = vmatprep.subr.bf16.mxu0 0
        %2356 = vmatpush1.bf16.xpose.msra.mxu0 0
        %2357 = vmatprep.subr.bf16.mxu0 0
        %2358 = vmatpush1.bf16.xpose.msra.mxu0 0
        %2359 = vmatprep.subr.bf16.mxu0 0
        %2360 = vmatpush1.bf16.xpose.msra.mxu0 0
        %2361 = vmatprep.subr.bf16.mxu0 0
        %2362 = vmatpush1.bf16.xpose.msra.mxu0 0
        %2363 = vmatprep.subr.bf16.mxu0 0
        %2364 = vmatpush1.bf16.xpose.msra.mxu0 0
        %2365 = vmatprep.mubr.bf16.mxu0 0
        %2366 = vmatmul.mubr.bf16.gmra.mrb[0].mxu0 %v2328
        %v2367 = vpop.f32.mrb[0].mxu0
        %v2368 = vadd.f32 0.0, %v2367
        %v2369 = vpop.f32.mrb[0].mxu0
        %v2370 = vpop.f32.mrb[0].mxu0
        %v2371 = vpop.f32.mrb[0].mxu0
        %2372 = vdwg.mxu0
        %v2374 = vsel %vm1038, %v2324, 0
        %v2377 = vsel %vm1038, %v2326, 0
        %2379 = vmatprep.subr.bf16.mxu0 0
        %2380 = vmatpush1.bf16.xpose.msra.mxu0 %v2377
        %2381 = vmatprep.subr.bf16.mxu0 0
        %2382 = vmatpush1.bf16.xpose.msra.mxu0 0
        %2383 = vmatprep.subr.bf16.mxu0 0
        %2384 = vmatpush1.bf16.xpose.msra.mxu0 0
        %2385 = vmatprep.subr.bf16.mxu0 0
        %2386 = vmatpush1.bf16.xpose.msra.mxu0 0
        %2387 = vmatprep.subr.bf16.mxu0 0
        %2388 = vmatpush1.bf16.xpose.msra.mxu0 0
        %2389 = vmatprep.subr.bf16.mxu0 0
        %2390 = vmatpush1.bf16.xpose.msra.mxu0 0
        %2391 = vmatprep.subr.bf16.mxu0 0
        %2392 = vmatpush1.bf16.xpose.msra.mxu0 0
        %2393 = vmatprep.subr.bf16.mxu0 0
        %2394 = vmatpush1.bf16.xpose.msra.mxu0 0
        %2395 = vmatprep.subr.bf16.mxu0 0
        %2396 = vmatpush1.bf16.xpose.msra.mxu0 0
        %2397 = vmatprep.subr.bf16.mxu0 0
        %2398 = vmatpush1.bf16.xpose.msra.mxu0 0
        %2399 = vmatprep.subr.bf16.mxu0 0
        %2400 = vmatpush1.bf16.xpose.msra.mxu0 0
        %2401 = vmatprep.subr.bf16.mxu0 0
        %2402 = vmatpush1.bf16.xpose.msra.mxu0 0
        %2403 = vmatprep.subr.bf16.mxu0 0
        %2404 = vmatpush1.bf16.xpose.msra.mxu0 0
        %2405 = vmatprep.subr.bf16.mxu0 0
        %2406 = vmatpush1.bf16.xpose.msra.mxu0 0
        %2407 = vmatprep.subr.bf16.mxu0 0
        %2408 = vmatpush1.bf16.xpose.msra.mxu0 0
        %2409 = vmatprep.subr.bf16.mxu0 0
        %2410 = vmatpush1.bf16.xpose.msra.mxu0 0
        %2411 = vmatprep.mubr.bf16.mxu0 0
        %2412 = vmatmul.mubr.bf16.gmra.mrb[0].mxu0 %v2374
        %v2413 = vpop.f32.mrb[0].mxu0
        %v2414 = vadd.f32 0.0, %v2413
        %v2415 = vpop.f32.mrb[0].mxu0
        %v2416 = vpop.f32.mrb[0].mxu0
        %v2417 = vpop.f32.mrb[0].mxu0
        %2418 = vdwg.mxu0
        %v2419 = vmul.f32 %v2368, 0.35355338
        %v2420 = vmul.f32 %v2414, 0.35355338
        %v2421 = vsel %vm1038, %v2419, -inf
        %2422 = vmax.xlane.f32.xlu0 %v2421
        %v2423 = vpop.xlane.xlu0 %2422
        %v2424 = vsel %vm1038, %v2420, -inf
        %2425 = vmax.xlane.f32.xlu0 %v2424
        %v2426 = vpop.xlane.xlu0 %2425
        %v2427 = vsub.f32 %v2419, %v2423
        %v2428 = vsub.f32 %v2420, %v2426
        %v2429 = vmul.f32 %v2427, 1.442695
        %v2430 = vpow.pop %v2429
        %v2431 = vmul.f32 %v2428, 1.442695
        %v2432 = vpow.pop %v2431
        %v2433 = vsel %vm1038, %v2430, 0.0
        %2434 = vadd.xlane.f32.xlu0 %v2433
        %v2435 = vpop.xlane.xlu0 %2434
        %v2436 = vsel %vm1038, %v2432, 0.0
        %2437 = vadd.xlane.f32.xlu0 %v2436
        %v2438 = vpop.xlane.xlu0 %2437
        %v2439 = vrcp.pop %v2435
        %v2440 = vrcp.pop %v2438
        %v2441 = vmul.f32 %v2430, %v2439
        %v2442 = vmul.f32 %v2432, %v2440
        %v2443 = vpack.c.bf16 %v2441, %v2441
        %v2444 = vpack.c.bf16 %v2442, %v2442
        %v2445 = vpack.c.bf16 %v2317, %v2317
        %v2446 = vpack.c.bf16 %v2320, %v2320
        %v2448 = vsel %vm1038, %v2443, 0
        %v2451 = vsel %vm1162, %v2445, 0
        %2453 = vmatprep.subr.bf16.mxu0 0
        %2454 = vmatpush1.bf16.msra.mxu0 %v2451
        %2455 = vmatprep.subr.bf16.mxu0 0
        %2456 = vmatpush1.bf16.msra.mxu0 0
        %2457 = vmatprep.subr.bf16.mxu0 0
        %2458 = vmatpush1.bf16.msra.mxu0 0
        %2459 = vmatprep.subr.bf16.mxu0 0
        %2460 = vmatpush1.bf16.msra.mxu0 0
        %2461 = vmatprep.subr.bf16.mxu0 0
        %2462 = vmatpush1.bf16.msra.mxu0 0
        %2463 = vmatprep.subr.bf16.mxu0 0
        %2464 = vmatpush1.bf16.msra.mxu0 0
        %2465 = vmatprep.subr.bf16.mxu0 0
        %2466 = vmatpush1.bf16.msra.mxu0 0
        %2467 = vmatprep.subr.bf16.mxu0 0
        %2468 = vmatpush1.bf16.msra.mxu0 0
        %2469 = vmatprep.subr.bf16.mxu0 0
        %2470 = vmatpush1.bf16.msra.mxu0 0
        %2471 = vmatprep.subr.bf16.mxu0 0
        %2472 = vmatpush1.bf16.msra.mxu0 0
        %2473 = vmatprep.subr.bf16.mxu0 0
        %2474 = vmatpush1.bf16.msra.mxu0 0
        %2475 = vmatprep.subr.bf16.mxu0 0
        %2476 = vmatpush1.bf16.msra.mxu0 0
        %2477 = vmatprep.subr.bf16.mxu0 0
        %2478 = vmatpush1.bf16.msra.mxu0 0
        %2479 = vmatprep.subr.bf16.mxu0 0
        %2480 = vmatpush1.bf16.msra.mxu0 0
        %2481 = vmatprep.subr.bf16.mxu0 0
        %2482 = vmatpush1.bf16.msra.mxu0 0
        %2483 = vmatprep.subr.bf16.mxu0 0
        %2484 = vmatpush1.bf16.msra.mxu0 0
        %2485 = vmatprep.mubr.bf16.mxu0 0
        %2486 = vmatmul.mubr.bf16.gmra.mrb[0].mxu0 %v2448
        %v2487 = vpop.f32.mrb[0].mxu0
        %v2488 = vadd.f32 0.0, %v2487
        %v2489 = vpop.f32.mrb[0].mxu0
        %v2490 = vpop.f32.mrb[0].mxu0
        %v2491 = vpop.f32.mrb[0].mxu0
        %2492 = vdwg.mxu0
        %v2494 = vsel %vm1038, %v2444, 0
        %v2497 = vsel %vm1162, %v2446, 0
        %2499 = vmatprep.subr.bf16.mxu0 0
        %2500 = vmatpush1.bf16.msra.mxu0 %v2497
        %2501 = vmatprep.subr.bf16.mxu0 0
        %2502 = vmatpush1.bf16.msra.mxu0 0
        %2503 = vmatprep.subr.bf16.mxu0 0
        %2504 = vmatpush1.bf16.msra.mxu0 0
        %2505 = vmatprep.subr.bf16.mxu0 0
        %2506 = vmatpush1.bf16.msra.mxu0 0
        %2507 = vmatprep.subr.bf16.mxu0 0
        %2508 = vmatpush1.bf16.msra.mxu0 0
        %2509 = vmatprep.subr.bf16.mxu0 0
        %2510 = vmatpush1.bf16.msra.mxu0 0
        %2511 = vmatprep.subr.bf16.mxu0 0
        %2512 = vmatpush1.bf16.msra.mxu0 0
        %2513 = vmatprep.subr.bf16.mxu0 0
        %2514 = vmatpush1.bf16.msra.mxu0 0
        %2515 = vmatprep.subr.bf16.mxu0 0
        %2516 = vmatpush1.bf16.msra.mxu0 0
        %2517 = vmatprep.subr.bf16.mxu0 0
        %2518 = vmatpush1.bf16.msra.mxu0 0
        %2519 = vmatprep.subr.bf16.mxu0 0
        %2520 = vmatpush1.bf16.msra.mxu0 0
        %2521 = vmatprep.subr.bf16.mxu0 0
        %2522 = vmatpush1.bf16.msra.mxu0 0
        %2523 = vmatprep.subr.bf16.mxu0 0
        %2524 = vmatpush1.bf16.msra.mxu0 0
        %2525 = vmatprep.subr.bf16.mxu0 0
        %2526 = vmatpush1.bf16.msra.mxu0 0
        %2527 = vmatprep.subr.bf16.mxu0 0
        %2528 = vmatpush1.bf16.msra.mxu0 0
        %2529 = vmatprep.subr.bf16.mxu0 0
        %2530 = vmatpush1.bf16.msra.mxu0 0
        %2531 = vmatprep.mubr.bf16.mxu0 0
        %2532 = vmatmul.mubr.bf16.gmra.mrb[0].mxu0 %v2494
        %v2533 = vpop.f32.mrb[0].mxu0
        %v2534 = vadd.f32 0.0, %v2533
        %v2535 = vpop.f32.mrb[0].mxu0
        %v2536 = vpop.f32.mrb[0].mxu0
        %v2537 = vpop.f32.mrb[0].mxu0
        %2538 = vdwg.mxu0
        %v2539 = vpack.c.bf16 %v2534, %v2488
        %v2544 = vunpack.c.l.b16 %v869
        %v2545 = vunpack.c.l.b16 %v870
        %v2546 = vunpack.c.l.b16 %v871
        %v2547 = vunpack.c.l.b16 %v872
        %v2548 = vpack.c.b16 %v2545, %v2544
        %v2549 = vpack.c.b16 %v2547, %v2546
        %v2551 = vsel %vm1038, %v2539, 0
        %v2554 = vsel %vm1038, %v2548, 0
        %v2557 = vsel %vm1038, %v2549, 0
        %2559 = vmatprep.subr.bf16.mxu0 0
        %2560 = vmatpush1.bf16.xpose.msra.mxu0 %v2554
        %2561 = vmatprep.subr.bf16.mxu0 0
        %2562 = vmatpush1.bf16.xpose.msra.mxu0 %v2557
        %2563 = vmatprep.subr.bf16.mxu0 0
        %2564 = vmatpush1.bf16.xpose.msra.mxu0 0
        %2565 = vmatprep.subr.bf16.mxu0 0
        %2566 = vmatpush1.bf16.xpose.msra.mxu0 0
        %2567 = vmatprep.subr.bf16.mxu0 0
        %2568 = vmatpush1.bf16.xpose.msra.mxu0 0
        %2569 = vmatprep.subr.bf16.mxu0 0
        %2570 = vmatpush1.bf16.xpose.msra.mxu0 0
        %2571 = vmatprep.subr.bf16.mxu0 0
        %2572 = vmatpush1.bf16.xpose.msra.mxu0 0
        %2573 = vmatprep.subr.bf16.mxu0 0
        %2574 = vmatpush1.bf16.xpose.msra.mxu0 0
        %2575 = vmatprep.subr.bf16.mxu0 0
        %2576 = vmatpush1.bf16.xpose.msra.mxu0 0
        %2577 = vmatprep.subr.bf16.mxu0 0
        %2578 = vmatpush1.bf16.xpose.msra.mxu0 0
        %2579 = vmatprep.subr.bf16.mxu0 0
        %2580 = vmatpush1.bf16.xpose.msra.mxu0 0
        %2581 = vmatprep.subr.bf16.mxu0 0
        %2582 = vmatpush1.bf16.xpose.msra.mxu0 0
        %2583 = vmatprep.subr.bf16.mxu0 0
        %2584 = vmatpush1.bf16.xpose.msra.mxu0 0
        %2585 = vmatprep.subr.bf16.mxu0 0
        %2586 = vmatpush1.bf16.xpose.msra.mxu0 0
        %2587 = vmatprep.subr.bf16.mxu0 0
        %2588 = vmatpush1.bf16.xpose.msra.mxu0 0
        %2589 = vmatprep.subr.bf16.mxu0 0
        %2590 = vmatpush1.bf16.xpose.msra.mxu0 0
        %2591 = vmatprep.mubr.bf16.mxu0 0
        %2592 = vmatmul.mubr.bf16.gmra.mrb[0].mxu0 %v2551
        %v2593 = vpop.f32.mrb[0].mxu0
        %v2594 = vadd.f32 0.0, %v2593
        %v2595 = vpop.f32.mrb[0].mxu0
        %v2596 = vpop.f32.mrb[0].mxu0
        %v2597 = vadd.f32 0.0, %v2596
        %v2598 = vpop.f32.mrb[0].mxu0
        %2599 = vdwg.mxu0
        %v2600 = vadd.f32 %v2171, %v2594
        %v2601 = vadd.f32 %v2172, %v2597
        %v2602 = vadd.f32 %v826, %v2600
        %v2603 = vadd.f32 %v827, %v2601
        %v2604 = vld [vmem:[%s713] sm:$0x1]
        %v2605 = vld [vmem:[%s716] sm:$0x1]
        %v2606 = vsel %vm886, %v2602, 0.0
        %2607 = vadd.xlane.f32.xlu0 %v2606
        %v2608 = vpop.xlane.xlu0 %2607
        %v2609 = vsel %vm886, %v2603, 0.0
        %2610 = vadd.xlane.f32.xlu0 %v2609
        %v2611 = vpop.xlane.xlu0 %2610
        %v2612 = vrcp.pop 32.0
        %v2613 = vmul.f32 %v2608, %v2612
        %v2614 = vmul.f32 %v2611, %v2612
        %v2615 = vsub.f32 %v2602, %v2613
        %v2616 = vsub.f32 %v2603, %v2614
        %v2617 = vmul.f32 %v2615, %v2615
        %v2618 = vmul.f32 %v2616, %v2616
        %v2619 = vsel %vm886, %v2617, 0.0
        %2620 = vadd.xlane.f32.xlu0 %v2619
        %v2621 = vpop.xlane.xlu0 %2620
        %v2622 = vsel %vm886, %v2618, 0.0
        %2623 = vadd.xlane.f32.xlu0 %v2622
        %v2624 = vpop.xlane.xlu0 %2623
        %v2625 = vmul.f32 %v2621, %v2612
        %v2626 = vmul.f32 %v2624, %v2612
        %v2627 = vadd.f32 %v2625, 1e-05
        %v2628 = vadd.f32 %v2626, 1e-05
        %v2629 = vrsqrt.pop %v2627
        %v2630 = vrsqrt.pop %v2628
        %v2631 = vmul.f32 %v2615, %v2629
        %v2632 = vmul.f32 %v2616, %v2630
        %v2634 = vlaneseq
        %v2635 = vshrl.u32 %v2634, 7
        %v2636 = vsub.s32 0, %v2635
        %v2637 = vrot.slane %v2604, %v2636
        %v2639 = vmul.f32 %v2631, %v2637
        %v2640 = vmul.f32 %v2632, %v2637
        %v2642 = vlaneseq
        %v2643 = vshrl.u32 %v2642, 7
        %v2644 = vsub.s32 0, %v2643
        %v2645 = vrot.slane %v2605, %v2644
        %v2647 = vadd.f32 %v2639, %v2645
        %v2648 = vadd.f32 %v2640, %v2645
        %v2649 = vpack.c.bf16 %v2648, %v2647
        %v2650 = vld [vmem:[%s727] sm:$0xf]
        %v2651 = vld [vmem:[%s727 + $0x4] sm:$0xf]
        %v2652 = vld [vmem:[%s727 + $0x8] sm:$0xf]
        %v2653 = vld [vmem:[%s727 + $0xc] sm:$0xf]
        %v2654 = vld [vmem:[%s727 + $0x10] sm:$0xf]
        %v2655 = vld [vmem:[%s727 + $0x14] sm:$0xf]
        %v2656 = vld [vmem:[%s727 + $0x18] sm:$0xf]
        %v2657 = vld [vmem:[%s727 + $0x1c] sm:$0xf]
        %v2658 = vld [vmem:[%s727 + $0x20] sm:$0xf]
        %v2659 = vld [vmem:[%s727 + $0x24] sm:$0xf]
        %v2660 = vld [vmem:[%s727 + $0x28] sm:$0xf]
        %v2661 = vld [vmem:[%s727 + $0x2c] sm:$0xf]
        %v2662 = vld [vmem:[%s727 + $0x30] sm:$0xf]
        %v2663 = vld [vmem:[%s727 + $0x34] sm:$0xf]
        %v2664 = vld [vmem:[%s727 + $0x38] sm:$0xf]
        %v2665 = vld [vmem:[%s727 + $0x3c] sm:$0xf]
        %v2666 = vld [vmem:[%s727 + $0x40] sm:$0xf]
        %v2667 = vld [vmem:[%s727 + $0x44] sm:$0xf]
        %v2668 = vld [vmem:[%s727 + $0x48] sm:$0xf]
        %v2669 = vld [vmem:[%s727 + $0x4c] sm:$0xf]
        %v2670 = vld [vmem:[%s727 + $0x50] sm:$0xf]
        %v2671 = vld [vmem:[%s727 + $0x54] sm:$0xf]
        %v2672 = vld [vmem:[%s727 + $0x58] sm:$0xf]
        %v2673 = vld [vmem:[%s727 + $0x5c] sm:$0xf]
        %v2674 = vld [vmem:[%s727 + $0x60] sm:$0xf]
        %v2675 = vld [vmem:[%s727 + $0x64] sm:$0xf]
        %v2676 = vld [vmem:[%s727 + $0x68] sm:$0xf]
        %v2677 = vld [vmem:[%s727 + $0x6c] sm:$0xf]
        %v2678 = vld [vmem:[%s727 + $0x70] sm:$0xf]
        %v2679 = vld [vmem:[%s727 + $0x74] sm:$0xf]
        %v2680 = vld [vmem:[%s727 + $0x78] sm:$0xf]
        %v2681 = vld [vmem:[%s727 + $0x7c] sm:$0xf]
        %v2682 = vld [vmem:[%s727 + $0x80] sm:$0xf]
        %v2683 = vld [vmem:[%s727 + $0x84] sm:$0xf]
        %v2684 = vld [vmem:[%s727 + $0x88] sm:$0xf]
        %v2685 = vld [vmem:[%s727 + $0x8c] sm:$0xf]
        %v2686 = vld [vmem:[%s727 + $0x90] sm:$0xf]
        %v2687 = vld [vmem:[%s727 + $0x94] sm:$0xf]
        %v2688 = vld [vmem:[%s727 + $0x98] sm:$0xf]
        %v2689 = vld [vmem:[%s727 + $0x9c] sm:$0xf]
        %v2690 = vld [vmem:[%s727 + $0xa0] sm:$0xf]
        %v2691 = vld [vmem:[%s727 + $0xa4] sm:$0xf]
        %v2692 = vld [vmem:[%s727 + $0xa8] sm:$0xf]
        %v2693 = vld [vmem:[%s727 + $0xac] sm:$0xf]
        %v2694 = vld [vmem:[%s727 + $0xb0] sm:$0xf]
        %v2695 = vld [vmem:[%s727 + $0xb4] sm:$0xf]
        %v2696 = vld [vmem:[%s727 + $0xb8] sm:$0xf]
        %v2697 = vld [vmem:[%s727 + $0xbc] sm:$0xf]
        %v2698 = vld [vmem:[%s727 + $0xc0] sm:$0xf]
        %v2699 = vld [vmem:[%s727 + $0xc4] sm:$0xf]
        %v2700 = vld [vmem:[%s727 + $0xc8] sm:$0xf]
        %v2701 = vld [vmem:[%s727 + $0xcc] sm:$0xf]
        %v2702 = vld [vmem:[%s727 + $0xd0] sm:$0xf]
        %v2703 = vld [vmem:[%s727 + $0xd4] sm:$0xf]
        %v2704 = vld [vmem:[%s727 + $0xd8] sm:$0xf]
        %v2705 = vld [vmem:[%s727 + $0xdc] sm:$0xf]
        %v2706 = vld [vmem:[%s727 + $0xe0] sm:$0xf]
        %v2707 = vld [vmem:[%s727 + $0xe4] sm:$0xf]
        %v2708 = vld [vmem:[%s727 + $0xe8] sm:$0xf]
        %v2709 = vld [vmem:[%s727 + $0xec] sm:$0xf]
        %v2710 = vld [vmem:[%s727 + $0xf0] sm:$0xf]
        %v2711 = vld [vmem:[%s727 + $0xf4] sm:$0xf]
        %v2712 = vld [vmem:[%s727 + $0xf8] sm:$0xf]
        %v2713 = vld [vmem:[%s727 + $0xfc] sm:$0xf]
        %v2714 = vld [vmem:[%s727 + $0x100] sm:$0xf]
        %v2715 = vld [vmem:[%s727 + $0x104] sm:$0xf]
        %v2716 = vld [vmem:[%s727 + $0x108] sm:$0xf]
        %v2717 = vld [vmem:[%s727 + $0x10c] sm:$0xf]
        %v2718 = vld [vmem:[%s727 + $0x110] sm:$0xf]
        %v2719 = vld [vmem:[%s727 + $0x114] sm:$0xf]
        %v2720 = vld [vmem:[%s727 + $0x118] sm:$0xf]
        %v2721 = vld [vmem:[%s727 + $0x11c] sm:$0xf]
        %v2722 = vld [vmem:[%s727 + $0x120] sm:$0xf]
        %v2723 = vld [vmem:[%s727 + $0x124] sm:$0xf]
        %v2724 = vld [vmem:[%s727 + $0x128] sm:$0xf]
        %v2725 = vld [vmem:[%s727 + $0x12c] sm:$0xf]
        %v2726 = vld [vmem:[%s727 + $0x130] sm:$0xf]
        %v2727 = vld [vmem:[%s727 + $0x134] sm:$0xf]
        %v2728 = vld [vmem:[%s727 + $0x138] sm:$0xf]
        %v2729 = vld [vmem:[%s727 + $0x13c] sm:$0xf]
        %v2730 = vld [vmem:[%s727 + $0x140] sm:$0xf]
        %v2731 = vld [vmem:[%s727 + $0x144] sm:$0xf]
        %v2732 = vld [vmem:[%s727 + $0x148] sm:$0xf]
        %v2733 = vld [vmem:[%s727 + $0x14c] sm:$0xf]
        %v2734 = vld [vmem:[%s727 + $0x150] sm:$0xf]
        %v2735 = vld [vmem:[%s727 + $0x154] sm:$0xf]
        %v2736 = vld [vmem:[%s727 + $0x158] sm:$0xf]
        %v2737 = vld [vmem:[%s727 + $0x15c] sm:$0xf]
        %v2738 = vld [vmem:[%s727 + $0x160] sm:$0xf]
        %v2739 = vld [vmem:[%s727 + $0x164] sm:$0xf]
        %v2740 = vld [vmem:[%s727 + $0x168] sm:$0xf]
        %v2741 = vld [vmem:[%s727 + $0x16c] sm:$0xf]
        %v2742 = vld [vmem:[%s727 + $0x170] sm:$0xf]
        %v2743 = vld [vmem:[%s727 + $0x174] sm:$0xf]
        %v2744 = vld [vmem:[%s727 + $0x178] sm:$0xf]
        %v2745 = vld [vmem:[%s727 + $0x17c] sm:$0xf]
        %v2746 = vld [vmem:[%s727 + $0x180] sm:$0xf]
        %v2747 = vld [vmem:[%s727 + $0x184] sm:$0xf]
        %v2748 = vld [vmem:[%s727 + $0x188] sm:$0xf]
        %v2749 = vld [vmem:[%s727 + $0x18c] sm:$0xf]
        %v2750 = vld [vmem:[%s727 + $0x190] sm:$0xf]
        %v2751 = vld [vmem:[%s727 + $0x194] sm:$0xf]
        %v2752 = vld [vmem:[%s727 + $0x198] sm:$0xf]
        %v2753 = vld [vmem:[%s727 + $0x19c] sm:$0xf]
        %v2754 = vld [vmem:[%s727 + $0x1a0] sm:$0xf]
        %v2755 = vld [vmem:[%s727 + $0x1a4] sm:$0xf]
        %v2756 = vld [vmem:[%s727 + $0x1a8] sm:$0xf]
        %v2757 = vld [vmem:[%s727 + $0x1ac] sm:$0xf]
        %v2758 = vld [vmem:[%s727 + $0x1b0] sm:$0xf]
        %v2759 = vld [vmem:[%s727 + $0x1b4] sm:$0xf]
        %v2760 = vld [vmem:[%s727 + $0x1b8] sm:$0xf]
        %v2761 = vld [vmem:[%s727 + $0x1bc] sm:$0xf]
        %v2762 = vld [vmem:[%s727 + $0x1c0] sm:$0xf]
        %v2763 = vld [vmem:[%s727 + $0x1c4] sm:$0xf]
        %v2764 = vld [vmem:[%s727 + $0x1c8] sm:$0xf]
        %v2765 = vld [vmem:[%s727 + $0x1cc] sm:$0xf]
        %v2766 = vld [vmem:[%s727 + $0x1d0] sm:$0xf]
        %v2767 = vld [vmem:[%s727 + $0x1d4] sm:$0xf]
        %v2768 = vld [vmem:[%s727 + $0x1d8] sm:$0xf]
        %v2769 = vld [vmem:[%s727 + $0x1dc] sm:$0xf]
        %v2770 = vld [vmem:[%s727 + $0x1e0] sm:$0xf]
        %v2771 = vld [vmem:[%s727 + $0x1e4] sm:$0xf]
        %v2772 = vld [vmem:[%s727 + $0x1e8] sm:$0xf]
        %v2773 = vld [vmem:[%s727 + $0x1ec] sm:$0xf]
        %v2774 = vld [vmem:[%s727 + $0x1f0] sm:$0xf]
        %v2775 = vld [vmem:[%s727 + $0x1f4] sm:$0xf]
        %v2776 = vld [vmem:[%s727 + $0x1f8] sm:$0xf]
        %v2777 = vld [vmem:[%s727 + $0x1fc] sm:$0xf]
        %v2778 = vld [vmem:[%s727 + $0x200] sm:$0xf]
        %v2779 = vld [vmem:[%s727 + $0x204] sm:$0xf]
        %v2780 = vld [vmem:[%s727 + $0x208] sm:$0xf]
        %v2781 = vld [vmem:[%s727 + $0x20c] sm:$0xf]
        %v2782 = vld [vmem:[%s727 + $0x210] sm:$0xf]
        %v2783 = vld [vmem:[%s727 + $0x214] sm:$0xf]
        %v2784 = vld [vmem:[%s727 + $0x218] sm:$0xf]
        %v2785 = vld [vmem:[%s727 + $0x21c] sm:$0xf]
        %v2786 = vld [vmem:[%s727 + $0x220] sm:$0xf]
        %v2787 = vld [vmem:[%s727 + $0x224] sm:$0xf]
        %v2788 = vld [vmem:[%s727 + $0x228] sm:$0xf]
        %v2789 = vld [vmem:[%s727 + $0x22c] sm:$0xf]
        %v2790 = vld [vmem:[%s727 + $0x230] sm:$0xf]
        %v2791 = vld [vmem:[%s727 + $0x234] sm:$0xf]
        %v2792 = vld [vmem:[%s727 + $0x238] sm:$0xf]
        %v2793 = vld [vmem:[%s727 + $0x23c] sm:$0xf]
        %v2794 = vld [vmem:[%s727 + $0x240] sm:$0xf]
        %v2795 = vld [vmem:[%s727 + $0x244] sm:$0xf]
        %v2796 = vld [vmem:[%s727 + $0x248] sm:$0xf]
        %v2797 = vld [vmem:[%s727 + $0x24c] sm:$0xf]
        %v2798 = vld [vmem:[%s727 + $0x250] sm:$0xf]
        %v2799 = vld [vmem:[%s727 + $0x254] sm:$0xf]
        %v2800 = vld [vmem:[%s727 + $0x258] sm:$0xf]
        %v2801 = vld [vmem:[%s727 + $0x25c] sm:$0xf]
        %v2802 = vld [vmem:[%s727 + $0x260] sm:$0xf]
        %v2803 = vld [vmem:[%s727 + $0x264] sm:$0xf]
        %v2804 = vld [vmem:[%s727 + $0x268] sm:$0xf]
        %v2805 = vld [vmem:[%s727 + $0x26c] sm:$0xf]
        %v2806 = vld [vmem:[%s727 + $0x270] sm:$0xf]
        %v2807 = vld [vmem:[%s727 + $0x274] sm:$0xf]
        %v2808 = vld [vmem:[%s727 + $0x278] sm:$0xf]
        %v2809 = vld [vmem:[%s727 + $0x27c] sm:$0xf]
        %v2810 = vld [vmem:[%s727 + $0x280] sm:$0xf]
        %v2811 = vld [vmem:[%s727 + $0x284] sm:$0xf]
        %v2812 = vld [vmem:[%s727 + $0x288] sm:$0xf]
        %v2813 = vld [vmem:[%s727 + $0x28c] sm:$0xf]
        %v2814 = vld [vmem:[%s727 + $0x290] sm:$0xf]
        %v2815 = vld [vmem:[%s727 + $0x294] sm:$0xf]
        %v2816 = vld [vmem:[%s727 + $0x298] sm:$0xf]
        %v2817 = vld [vmem:[%s727 + $0x29c] sm:$0xf]
        %v2818 = vld [vmem:[%s727 + $0x2a0] sm:$0xf]
        %v2819 = vld [vmem:[%s727 + $0x2a4] sm:$0xf]
        %v2820 = vld [vmem:[%s727 + $0x2a8] sm:$0xf]
        %v2821 = vld [vmem:[%s727 + $0x2ac] sm:$0xf]
        %v2822 = vld [vmem:[%s727 + $0x2b0] sm:$0xf]
        %v2823 = vld [vmem:[%s727 + $0x2b4] sm:$0xf]
        %v2824 = vld [vmem:[%s727 + $0x2b8] sm:$0xf]
        %v2825 = vld [vmem:[%s727 + $0x2bc] sm:$0xf]
        %v2826 = vld [vmem:[%s727 + $0x2c0] sm:$0xf]
        %v2827 = vld [vmem:[%s727 + $0x2c4] sm:$0xf]
        %v2828 = vld [vmem:[%s727 + $0x2c8] sm:$0xf]
        %v2829 = vld [vmem:[%s727 + $0x2cc] sm:$0xf]
        %v2830 = vld [vmem:[%s727 + $0x2d0] sm:$0xf]
        %v2831 = vld [vmem:[%s727 + $0x2d4] sm:$0xf]
        %v2832 = vld [vmem:[%s727 + $0x2d8] sm:$0xf]
        %v2833 = vld [vmem:[%s727 + $0x2dc] sm:$0xf]
        %v2834 = vld [vmem:[%s727 + $0x2e0] sm:$0xf]
        %v2835 = vld [vmem:[%s727 + $0x2e4] sm:$0xf]
        %v2836 = vld [vmem:[%s727 + $0x2e8] sm:$0xf]
        %v2837 = vld [vmem:[%s727 + $0x2ec] sm:$0xf]
        %v2838 = vld [vmem:[%s727 + $0x2f0] sm:$0xf]
        %v2839 = vld [vmem:[%s727 + $0x2f4] sm:$0xf]
        %v2840 = vld [vmem:[%s727 + $0x2f8] sm:$0xf]
        %v2841 = vld [vmem:[%s727 + $0x2fc] sm:$0xf]
        %v2842 = vld [vmem:[%s727 + $0x300] sm:$0xf]
        %v2843 = vld [vmem:[%s727 + $0x304] sm:$0xf]
        %v2844 = vld [vmem:[%s727 + $0x308] sm:$0xf]
        %v2845 = vld [vmem:[%s727 + $0x30c] sm:$0xf]
        %v2846 = vld [vmem:[%s727 + $0x310] sm:$0xf]
        %v2847 = vld [vmem:[%s727 + $0x314] sm:$0xf]
        %v2848 = vld [vmem:[%s727 + $0x318] sm:$0xf]
        %v2849 = vld [vmem:[%s727 + $0x31c] sm:$0xf]
        %v2850 = vld [vmem:[%s727 + $0x320] sm:$0xf]
        %v2851 = vld [vmem:[%s727 + $0x324] sm:$0xf]
        %v2852 = vld [vmem:[%s727 + $0x328] sm:$0xf]
        %v2853 = vld [vmem:[%s727 + $0x32c] sm:$0xf]
        %v2854 = vld [vmem:[%s727 + $0x330] sm:$0xf]
        %v2855 = vld [vmem:[%s727 + $0x334] sm:$0xf]
        %v2856 = vld [vmem:[%s727 + $0x338] sm:$0xf]
        %v2857 = vld [vmem:[%s727 + $0x33c] sm:$0xf]
        %v2858 = vld [vmem:[%s727 + $0x340] sm:$0xf]
        %v2859 = vld [vmem:[%s727 + $0x344] sm:$0xf]
        %v2860 = vld [vmem:[%s727 + $0x348] sm:$0xf]
        %v2861 = vld [vmem:[%s727 + $0x34c] sm:$0xf]
        %v2862 = vld [vmem:[%s727 + $0x350] sm:$0xf]
        %v2863 = vld [vmem:[%s727 + $0x354] sm:$0xf]
        %v2864 = vld [vmem:[%s727 + $0x358] sm:$0xf]
        %v2865 = vld [vmem:[%s727 + $0x35c] sm:$0xf]
        %v2866 = vld [vmem:[%s727 + $0x360] sm:$0xf]
        %v2867 = vld [vmem:[%s727 + $0x364] sm:$0xf]
        %v2868 = vld [vmem:[%s727 + $0x368] sm:$0xf]
        %v2869 = vld [vmem:[%s727 + $0x36c] sm:$0xf]
        %v2870 = vld [vmem:[%s727 + $0x370] sm:$0xf]
        %v2871 = vld [vmem:[%s727 + $0x374] sm:$0xf]
        %v2872 = vld [vmem:[%s727 + $0x378] sm:$0xf]
        %v2873 = vld [vmem:[%s727 + $0x37c] sm:$0xf]
        %v2874 = vld [vmem:[%s727 + $0x380] sm:$0xf]
        %v2875 = vld [vmem:[%s727 + $0x384] sm:$0xf]
        %v2876 = vld [vmem:[%s727 + $0x388] sm:$0xf]
        %v2877 = vld [vmem:[%s727 + $0x38c] sm:$0xf]
        %v2878 = vld [vmem:[%s727 + $0x390] sm:$0xf]
        %v2879 = vld [vmem:[%s727 + $0x394] sm:$0xf]
        %v2880 = vld [vmem:[%s727 + $0x398] sm:$0xf]
        %v2881 = vld [vmem:[%s727 + $0x39c] sm:$0xf]
        %v2882 = vld [vmem:[%s727 + $0x3a0] sm:$0xf]
        %v2883 = vld [vmem:[%s727 + $0x3a4] sm:$0xf]
        %v2884 = vld [vmem:[%s727 + $0x3a8] sm:$0xf]
        %v2885 = vld [vmem:[%s727 + $0x3ac] sm:$0xf]
        %v2886 = vld [vmem:[%s727 + $0x3b0] sm:$0xf]
        %v2887 = vld [vmem:[%s727 + $0x3b4] sm:$0xf]
        %v2888 = vld [vmem:[%s727 + $0x3b8] sm:$0xf]
        %v2889 = vld [vmem:[%s727 + $0x3bc] sm:$0xf]
        %v2890 = vld [vmem:[%s727 + $0x3c0] sm:$0xf]
        %v2891 = vld [vmem:[%s727 + $0x3c4] sm:$0xf]
        %v2892 = vld [vmem:[%s727 + $0x3c8] sm:$0xf]
        %v2893 = vld [vmem:[%s727 + $0x3cc] sm:$0xf]
        %v2894 = vld [vmem:[%s727 + $0x3d0] sm:$0xf]
        %v2895 = vld [vmem:[%s727 + $0x3d4] sm:$0xf]
        %v2896 = vld [vmem:[%s727 + $0x3d8] sm:$0xf]
        %v2897 = vld [vmem:[%s727 + $0x3dc] sm:$0xf]
        %v2898 = vld [vmem:[%s727 + $0x3e0] sm:$0xf]
        %v2899 = vld [vmem:[%s727 + $0x3e4] sm:$0xf]
        %v2900 = vld [vmem:[%s727 + $0x3e8] sm:$0xf]
        %v2901 = vld [vmem:[%s727 + $0x3ec] sm:$0xf]
        %v2902 = vld [vmem:[%s727 + $0x3f0] sm:$0xf]
        %v2903 = vld [vmem:[%s727 + $0x3f4] sm:$0xf]
        %v2904 = vld [vmem:[%s727 + $0x3f8] sm:$0xf]
        %v2905 = vld [vmem:[%s727 + $0x3fc] sm:$0xf]
        %v2906 = vld [vmem:[%s731] sm:$0xff]
        %v2907 = vld [vmem:[%s731 + $0x8] sm:$0xff]
        %v2910 = vlaneseq
        %v2911 = vshrl.u32 %v2910, 7
        %v2912 = vsub.s32 0, %v2911
        %v2913 = vrot.slane %v2906, %v2912
        %v2914 = vlaneseq
        %v2915 = vshrl.u32 %v2914, 7
        %v2916 = vsub.s32 1, %v2915
        %v2917 = vrot.slane %v2906, %v2916
        %v2918 = vlaneseq
        %v2919 = vshrl.u32 %v2918, 7
        %v2920 = vsub.s32 2, %v2919
        %v2921 = vrot.slane %v2906, %v2920
        %v2922 = vlaneseq
        %v2923 = vshrl.u32 %v2922, 7
        %v2924 = vsub.s32 3, %v2923
        %v2925 = vrot.slane %v2906, %v2924
        %v2926 = vlaneseq
        %v2927 = vshrl.u32 %v2926, 7
        %v2928 = vsub.s32 4, %v2927
        %v2929 = vrot.slane %v2906, %v2928
        %v2930 = vlaneseq
        %v2931 = vshrl.u32 %v2930, 7
        %v2932 = vsub.s32 5, %v2931
        %v2933 = vrot.slane %v2906, %v2932
        %v2934 = vlaneseq
        %v2935 = vshrl.u32 %v2934, 7
        %v2936 = vsub.s32 6, %v2935
        %v2937 = vrot.slane %v2906, %v2936
        %v2938 = vlaneseq
        %v2939 = vshrl.u32 %v2938, 7
        %v2940 = vsub.s32 7, %v2939
        %v2941 = vrot.slane %v2906, %v2940
        %v2942 = vlaneseq
        %v2943 = vshrl.u32 %v2942, 7
        %v2944 = vsub.s32 0, %v2943
        %v2945 = vrot.slane %v2907, %v2944
        %v2946 = vlaneseq
        %v2947 = vshrl.u32 %v2946, 7
        %v2948 = vsub.s32 1, %v2947
        %v2949 = vrot.slane %v2907, %v2948
        %v2950 = vlaneseq
        %v2951 = vshrl.u32 %v2950, 7
        %v2952 = vsub.s32 2, %v2951
        %v2953 = vrot.slane %v2907, %v2952
        %v2954 = vlaneseq
        %v2955 = vshrl.u32 %v2954, 7
        %v2956 = vsub.s32 3, %v2955
        %v2957 = vrot.slane %v2907, %v2956
        %v2958 = vlaneseq
        %v2959 = vshrl.u32 %v2958, 7
        %v2960 = vsub.s32 4, %v2959
        %v2961 = vrot.slane %v2907, %v2960
        %v2962 = vlaneseq
        %v2963 = vshrl.u32 %v2962, 7
        %v2964 = vsub.s32 5, %v2963
        %v2965 = vrot.slane %v2907, %v2964
        %v2966 = vlaneseq
        %v2967 = vshrl.u32 %v2966, 7
        %v2968 = vsub.s32 6, %v2967
        %v2969 = vrot.slane %v2907, %v2968
        %v2970 = vlaneseq
        %v2971 = vshrl.u32 %v2970, 7
        %v2972 = vsub.s32 7, %v2971
        %v2973 = vrot.slane %v2907, %v2972
        %v3246 = vunpack.c.l.b16 %v2650
        %v3247 = vunpack.c.l.b16 %v2651
        %v3248 = vunpack.c.l.b16 %v2652
        %v3249 = vunpack.c.l.b16 %v2653
        %v3250 = vunpack.c.l.b16 %v2654
        %v3251 = vunpack.c.l.b16 %v2655
        %v3252 = vunpack.c.l.b16 %v2656
        %v3253 = vunpack.c.l.b16 %v2657
        %v3254 = vunpack.c.l.b16 %v2658
        %v3255 = vunpack.c.l.b16 %v2659
        %v3256 = vunpack.c.l.b16 %v2660
        %v3257 = vunpack.c.l.b16 %v2661
        %v3258 = vunpack.c.l.b16 %v2662
        %v3259 = vunpack.c.l.b16 %v2663
        %v3260 = vunpack.c.l.b16 %v2664
        %v3261 = vunpack.c.l.b16 %v2665
        %v3262 = vunpack.c.l.b16 %v2666
        %v3263 = vunpack.c.l.b16 %v2667
        %v3264 = vunpack.c.l.b16 %v2668
        %v3265 = vunpack.c.l.b16 %v2669
        %v3266 = vunpack.c.l.b16 %v2670
        %v3267 = vunpack.c.l.b16 %v2671
        %v3268 = vunpack.c.l.b16 %v2672
        %v3269 = vunpack.c.l.b16 %v2673
        %v3270 = vunpack.c.l.b16 %v2674
        %v3271 = vunpack.c.l.b16 %v2675
        %v3272 = vunpack.c.l.b16 %v2676
        %v3273 = vunpack.c.l.b16 %v2677
        %v3274 = vunpack.c.l.b16 %v2678
        %v3275 = vunpack.c.l.b16 %v2679
        %v3276 = vunpack.c.l.b16 %v2680
        %v3277 = vunpack.c.l.b16 %v2681
        %v3278 = vunpack.c.l.b16 %v2682
        %v3279 = vunpack.c.l.b16 %v2683
        %v3280 = vunpack.c.l.b16 %v2684
        %v3281 = vunpack.c.l.b16 %v2685
        %v3282 = vunpack.c.l.b16 %v2686
        %v3283 = vunpack.c.l.b16 %v2687
        %v3284 = vunpack.c.l.b16 %v2688
        %v3285 = vunpack.c.l.b16 %v2689
        %v3286 = vunpack.c.l.b16 %v2690
        %v3287 = vunpack.c.l.b16 %v2691
        %v3288 = vunpack.c.l.b16 %v2692
        %v3289 = vunpack.c.l.b16 %v2693
        %v3290 = vunpack.c.l.b16 %v2694
        %v3291 = vunpack.c.l.b16 %v2695
        %v3292 = vunpack.c.l.b16 %v2696
        %v3293 = vunpack.c.l.b16 %v2697
        %v3294 = vunpack.c.l.b16 %v2698
        %v3295 = vunpack.c.l.b16 %v2699
        %v3296 = vunpack.c.l.b16 %v2700
        %v3297 = vunpack.c.l.b16 %v2701
        %v3298 = vunpack.c.l.b16 %v2702
        %v3299 = vunpack.c.l.b16 %v2703
        %v3300 = vunpack.c.l.b16 %v2704
        %v3301 = vunpack.c.l.b16 %v2705
        %v3302 = vunpack.c.l.b16 %v2706
        %v3303 = vunpack.c.l.b16 %v2707
        %v3304 = vunpack.c.l.b16 %v2708
        %v3305 = vunpack.c.l.b16 %v2709
        %v3306 = vunpack.c.l.b16 %v2710
        %v3307 = vunpack.c.l.b16 %v2711
        %v3308 = vunpack.c.l.b16 %v2712
        %v3309 = vunpack.c.l.b16 %v2713
        %v3310 = vunpack.c.l.b16 %v2714
        %v3311 = vunpack.c.l.b16 %v2715
        %v3312 = vunpack.c.l.b16 %v2716
        %v3313 = vunpack.c.l.b16 %v2717
        %v3314 = vunpack.c.l.b16 %v2718
        %v3315 = vunpack.c.l.b16 %v2719
        %v3316 = vunpack.c.l.b16 %v2720
        %v3317 = vunpack.c.l.b16 %v2721
        %v3318 = vunpack.c.l.b16 %v2722
        %v3319 = vunpack.c.l.b16 %v2723
        %v3320 = vunpack.c.l.b16 %v2724
        %v3321 = vunpack.c.l.b16 %v2725
        %v3322 = vunpack.c.l.b16 %v2726
        %v3323 = vunpack.c.l.b16 %v2727
        %v3324 = vunpack.c.l.b16 %v2728
        %v3325 = vunpack.c.l.b16 %v2729
        %v3326 = vunpack.c.l.b16 %v2730
        %v3327 = vunpack.c.l.b16 %v2731
        %v3328 = vunpack.c.l.b16 %v2732
        %v3329 = vunpack.c.l.b16 %v2733
        %v3330 = vunpack.c.l.b16 %v2734
        %v3331 = vunpack.c.l.b16 %v2735
        %v3332 = vunpack.c.l.b16 %v2736
        %v3333 = vunpack.c.l.b16 %v2737
        %v3334 = vunpack.c.l.b16 %v2738
        %v3335 = vunpack.c.l.b16 %v2739
        %v3336 = vunpack.c.l.b16 %v2740
        %v3337 = vunpack.c.l.b16 %v2741
        %v3338 = vunpack.c.l.b16 %v2742
        %v3339 = vunpack.c.l.b16 %v2743
        %v3340 = vunpack.c.l.b16 %v2744
        %v3341 = vunpack.c.l.b16 %v2745
        %v3342 = vunpack.c.l.b16 %v2746
        %v3343 = vunpack.c.l.b16 %v2747
        %v3344 = vunpack.c.l.b16 %v2748
        %v3345 = vunpack.c.l.b16 %v2749
        %v3346 = vunpack.c.l.b16 %v2750
        %v3347 = vunpack.c.l.b16 %v2751
        %v3348 = vunpack.c.l.b16 %v2752
        %v3349 = vunpack.c.l.b16 %v2753
        %v3350 = vunpack.c.l.b16 %v2754
        %v3351 = vunpack.c.l.b16 %v2755
        %v3352 = vunpack.c.l.b16 %v2756
        %v3353 = vunpack.c.l.b16 %v2757
        %v3354 = vunpack.c.l.b16 %v2758
        %v3355 = vunpack.c.l.b16 %v2759
        %v3356 = vunpack.c.l.b16 %v2760
        %v3357 = vunpack.c.l.b16 %v2761
        %v3358 = vunpack.c.l.b16 %v2762
        %v3359 = vunpack.c.l.b16 %v2763
        %v3360 = vunpack.c.l.b16 %v2764
        %v3361 = vunpack.c.l.b16 %v2765
        %v3362 = vunpack.c.l.b16 %v2766
        %v3363 = vunpack.c.l.b16 %v2767
        %v3364 = vunpack.c.l.b16 %v2768
        %v3365 = vunpack.c.l.b16 %v2769
        %v3366 = vunpack.c.l.b16 %v2770
        %v3367 = vunpack.c.l.b16 %v2771
        %v3368 = vunpack.c.l.b16 %v2772
        %v3369 = vunpack.c.l.b16 %v2773
        %v3370 = vunpack.c.l.b16 %v2774
        %v3371 = vunpack.c.l.b16 %v2775
        %v3372 = vunpack.c.l.b16 %v2776
        %v3373 = vunpack.c.l.b16 %v2777
        %v3374 = vunpack.c.l.b16 %v2778
        %v3375 = vunpack.c.l.b16 %v2779
        %v3376 = vunpack.c.l.b16 %v2780
        %v3377 = vunpack.c.l.b16 %v2781
        %v3378 = vunpack.c.l.b16 %v2782
        %v3379 = vunpack.c.l.b16 %v2783
        %v3380 = vunpack.c.l.b16 %v2784
        %v3381 = vunpack.c.l.b16 %v2785
        %v3382 = vunpack.c.l.b16 %v2786
        %v3383 = vunpack.c.l.b16 %v2787
        %v3384 = vunpack.c.l.b16 %v2788
        %v3385 = vunpack.c.l.b16 %v2789
        %v3386 = vunpack.c.l.b16 %v2790
        %v3387 = vunpack.c.l.b16 %v2791
        %v3388 = vunpack.c.l.b16 %v2792
        %v3389 = vunpack.c.l.b16 %v2793
        %v3390 = vunpack.c.l.b16 %v2794
        %v3391 = vunpack.c.l.b16 %v2795
        %v3392 = vunpack.c.l.b16 %v2796
        %v3393 = vunpack.c.l.b16 %v2797
        %v3394 = vunpack.c.l.b16 %v2798
        %v3395 = vunpack.c.l.b16 %v2799
        %v3396 = vunpack.c.l.b16 %v2800
        %v3397 = vunpack.c.l.b16 %v2801
        %v3398 = vunpack.c.l.b16 %v2802
        %v3399 = vunpack.c.l.b16 %v2803
        %v3400 = vunpack.c.l.b16 %v2804
        %v3401 = vunpack.c.l.b16 %v2805
        %v3402 = vunpack.c.l.b16 %v2806
        %v3403 = vunpack.c.l.b16 %v2807
        %v3404 = vunpack.c.l.b16 %v2808
        %v3405 = vunpack.c.l.b16 %v2809
        %v3406 = vunpack.c.l.b16 %v2810
        %v3407 = vunpack.c.l.b16 %v2811
        %v3408 = vunpack.c.l.b16 %v2812
        %v3409 = vunpack.c.l.b16 %v2813
        %v3410 = vunpack.c.l.b16 %v2814
        %v3411 = vunpack.c.l.b16 %v2815
        %v3412 = vunpack.c.l.b16 %v2816
        %v3413 = vunpack.c.l.b16 %v2817
        %v3414 = vunpack.c.l.b16 %v2818
        %v3415 = vunpack.c.l.b16 %v2819
        %v3416 = vunpack.c.l.b16 %v2820
        %v3417 = vunpack.c.l.b16 %v2821
        %v3418 = vunpack.c.l.b16 %v2822
        %v3419 = vunpack.c.l.b16 %v2823
        %v3420 = vunpack.c.l.b16 %v2824
        %v3421 = vunpack.c.l.b16 %v2825
        %v3422 = vunpack.c.l.b16 %v2826
        %v3423 = vunpack.c.l.b16 %v2827
        %v3424 = vunpack.c.l.b16 %v2828
        %v3425 = vunpack.c.l.b16 %v2829
        %v3426 = vunpack.c.l.b16 %v2830
        %v3427 = vunpack.c.l.b16 %v2831
        %v3428 = vunpack.c.l.b16 %v2832
        %v3429 = vunpack.c.l.b16 %v2833
        %v3430 = vunpack.c.l.b16 %v2834
        %v3431 = vunpack.c.l.b16 %v2835
        %v3432 = vunpack.c.l.b16 %v2836
        %v3433 = vunpack.c.l.b16 %v2837
        %v3434 = vunpack.c.l.b16 %v2838
        %v3435 = vunpack.c.l.b16 %v2839
        %v3436 = vunpack.c.l.b16 %v2840
        %v3437 = vunpack.c.l.b16 %v2841
        %v3438 = vunpack.c.l.b16 %v2842
        %v3439 = vunpack.c.l.b16 %v2843
        %v3440 = vunpack.c.l.b16 %v2844
        %v3441 = vunpack.c.l.b16 %v2845
        %v3442 = vunpack.c.l.b16 %v2846
        %v3443 = vunpack.c.l.b16 %v2847
        %v3444 = vunpack.c.l.b16 %v2848
        %v3445 = vunpack.c.l.b16 %v2849
        %v3446 = vunpack.c.l.b16 %v2850
        %v3447 = vunpack.c.l.b16 %v2851
        %v3448 = vunpack.c.l.b16 %v2852
        %v3449 = vunpack.c.l.b16 %v2853
        %v3450 = vunpack.c.l.b16 %v2854
        %v3451 = vunpack.c.l.b16 %v2855
        %v3452 = vunpack.c.l.b16 %v2856
        %v3453 = vunpack.c.l.b16 %v2857
        %v3454 = vunpack.c.l.b16 %v2858
        %v3455 = vunpack.c.l.b16 %v2859
        %v3456 = vunpack.c.l.b16 %v2860
        %v3457 = vunpack.c.l.b16 %v2861
        %v3458 = vunpack.c.l.b16 %v2862
        %v3459 = vunpack.c.l.b16 %v2863
        %v3460 = vunpack.c.l.b16 %v2864
        %v3461 = vunpack.c.l.b16 %v2865
        %v3462 = vunpack.c.l.b16 %v2866
        %v3463 = vunpack.c.l.b16 %v2867
        %v3464 = vunpack.c.l.b16 %v2868
        %v3465 = vunpack.c.l.b16 %v2869
        %v3466 = vunpack.c.l.b16 %v2870
        %v3467 = vunpack.c.l.b16 %v2871
        %v3468 = vunpack.c.l.b16 %v2872
        %v3469 = vunpack.c.l.b16 %v2873
        %v3470 = vunpack.c.l.b16 %v2874
        %v3471 = vunpack.c.l.b16 %v2875
        %v3472 = vunpack.c.l.b16 %v2876
        %v3473 = vunpack.c.l.b16 %v2877
        %v3474 = vunpack.c.l.b16 %v2878
        %v3475 = vunpack.c.l.b16 %v2879
        %v3476 = vunpack.c.l.b16 %v2880
        %v3477 = vunpack.c.l.b16 %v2881
        %v3478 = vunpack.c.l.b16 %v2882
        %v3479 = vunpack.c.l.b16 %v2883
        %v3480 = vunpack.c.l.b16 %v2884
        %v3481 = vunpack.c.l.b16 %v2885
        %v3482 = vunpack.c.l.b16 %v2886
        %v3483 = vunpack.c.l.b16 %v2887
        %v3484 = vunpack.c.l.b16 %v2888
        %v3485 = vunpack.c.l.b16 %v2889
        %v3486 = vunpack.c.l.b16 %v2890
        %v3487 = vunpack.c.l.b16 %v2891
        %v3488 = vunpack.c.l.b16 %v2892
        %v3489 = vunpack.c.l.b16 %v2893
        %v3490 = vunpack.c.l.b16 %v2894
        %v3491 = vunpack.c.l.b16 %v2895
        %v3492 = vunpack.c.l.b16 %v2896
        %v3493 = vunpack.c.l.b16 %v2897
        %v3494 = vunpack.c.l.b16 %v2898
        %v3495 = vunpack.c.l.b16 %v2899
        %v3496 = vunpack.c.l.b16 %v2900
        %v3497 = vunpack.c.l.b16 %v2901
        %v3498 = vunpack.c.l.b16 %v2902
        %v3499 = vunpack.c.l.b16 %v2903
        %v3500 = vunpack.c.l.b16 %v2904
        %v3501 = vunpack.c.l.b16 %v2905
        %v3502 = vpack.c.b16 %v3247, %v3246
        %v3503 = vpack.c.b16 %v3249, %v3248
        %v3504 = vpack.c.b16 %v3251, %v3250
        %v3505 = vpack.c.b16 %v3253, %v3252
        %v3506 = vpack.c.b16 %v3255, %v3254
        %v3507 = vpack.c.b16 %v3257, %v3256
        %v3508 = vpack.c.b16 %v3259, %v3258
        %v3509 = vpack.c.b16 %v3261, %v3260
        %v3510 = vpack.c.b16 %v3263, %v3262
        %v3511 = vpack.c.b16 %v3265, %v3264
        %v3512 = vpack.c.b16 %v3267, %v3266
        %v3513 = vpack.c.b16 %v3269, %v3268
        %v3514 = vpack.c.b16 %v3271, %v3270
        %v3515 = vpack.c.b16 %v3273, %v3272
        %v3516 = vpack.c.b16 %v3275, %v3274
        %v3517 = vpack.c.b16 %v3277, %v3276
        %v3518 = vpack.c.b16 %v3279, %v3278
        %v3519 = vpack.c.b16 %v3281, %v3280
        %v3520 = vpack.c.b16 %v3283, %v3282
        %v3521 = vpack.c.b16 %v3285, %v3284
        %v3522 = vpack.c.b16 %v3287, %v3286
        %v3523 = vpack.c.b16 %v3289, %v3288
        %v3524 = vpack.c.b16 %v3291, %v3290
        %v3525 = vpack.c.b16 %v3293, %v3292
        %v3526 = vpack.c.b16 %v3295, %v3294
        %v3527 = vpack.c.b16 %v3297, %v3296
        %v3528 = vpack.c.b16 %v3299, %v3298
        %v3529 = vpack.c.b16 %v3301, %v3300
        %v3530 = vpack.c.b16 %v3303, %v3302
        %v3531 = vpack.c.b16 %v3305, %v3304
        %v3532 = vpack.c.b16 %v3307, %v3306
        %v3533 = vpack.c.b16 %v3309, %v3308
        %v3534 = vpack.c.b16 %v3311, %v3310
        %v3535 = vpack.c.b16 %v3313, %v3312
        %v3536 = vpack.c.b16 %v3315, %v3314
        %v3537 = vpack.c.b16 %v3317, %v3316
        %v3538 = vpack.c.b16 %v3319, %v3318
        %v3539 = vpack.c.b16 %v3321, %v3320
        %v3540 = vpack.c.b16 %v3323, %v3322
        %v3541 = vpack.c.b16 %v3325, %v3324
        %v3542 = vpack.c.b16 %v3327, %v3326
        %v3543 = vpack.c.b16 %v3329, %v3328
        %v3544 = vpack.c.b16 %v3331, %v3330
        %v3545 = vpack.c.b16 %v3333, %v3332
        %v3546 = vpack.c.b16 %v3335, %v3334
        %v3547 = vpack.c.b16 %v3337, %v3336
        %v3548 = vpack.c.b16 %v3339, %v3338
        %v3549 = vpack.c.b16 %v3341, %v3340
        %v3550 = vpack.c.b16 %v3343, %v3342
        %v3551 = vpack.c.b16 %v3345, %v3344
        %v3552 = vpack.c.b16 %v3347, %v3346
        %v3553 = vpack.c.b16 %v3349, %v3348
        %v3554 = vpack.c.b16 %v3351, %v3350
        %v3555 = vpack.c.b16 %v3353, %v3352
        %v3556 = vpack.c.b16 %v3355, %v3354
        %v3557 = vpack.c.b16 %v3357, %v3356
        %v3558 = vpack.c.b16 %v3359, %v3358
        %v3559 = vpack.c.b16 %v3361, %v3360
        %v3560 = vpack.c.b16 %v3363, %v3362
        %v3561 = vpack.c.b16 %v3365, %v3364
        %v3562 = vpack.c.b16 %v3367, %v3366
        %v3563 = vpack.c.b16 %v3369, %v3368
        %v3564 = vpack.c.b16 %v3371, %v3370
        %v3565 = vpack.c.b16 %v3373, %v3372
        %v3566 = vpack.c.b16 %v3375, %v3374
        %v3567 = vpack.c.b16 %v3377, %v3376
        %v3568 = vpack.c.b16 %v3379, %v3378
        %v3569 = vpack.c.b16 %v3381, %v3380
        %v3570 = vpack.c.b16 %v3383, %v3382
        %v3571 = vpack.c.b16 %v3385, %v3384
        %v3572 = vpack.c.b16 %v3387, %v3386
        %v3573 = vpack.c.b16 %v3389, %v3388
        %v3574 = vpack.c.b16 %v3391, %v3390
        %v3575 = vpack.c.b16 %v3393, %v3392
        %v3576 = vpack.c.b16 %v3395, %v3394
        %v3577 = vpack.c.b16 %v3397, %v3396
        %v3578 = vpack.c.b16 %v3399, %v3398
        %v3579 = vpack.c.b16 %v3401, %v3400
        %v3580 = vpack.c.b16 %v3403, %v3402
        %v3581 = vpack.c.b16 %v3405, %v3404
        %v3582 = vpack.c.b16 %v3407, %v3406
        %v3583 = vpack.c.b16 %v3409, %v3408
        %v3584 = vpack.c.b16 %v3411, %v3410
        %v3585 = vpack.c.b16 %v3413, %v3412
        %v3586 = vpack.c.b16 %v3415, %v3414
        %v3587 = vpack.c.b16 %v3417, %v3416
        %v3588 = vpack.c.b16 %v3419, %v3418
        %v3589 = vpack.c.b16 %v3421, %v3420
        %v3590 = vpack.c.b16 %v3423, %v3422
        %v3591 = vpack.c.b16 %v3425, %v3424
        %v3592 = vpack.c.b16 %v3427, %v3426
        %v3593 = vpack.c.b16 %v3429, %v3428
        %v3594 = vpack.c.b16 %v3431, %v3430
        %v3595 = vpack.c.b16 %v3433, %v3432
        %v3596 = vpack.c.b16 %v3435, %v3434
        %v3597 = vpack.c.b16 %v3437, %v3436
        %v3598 = vpack.c.b16 %v3439, %v3438
        %v3599 = vpack.c.b16 %v3441, %v3440
        %v3600 = vpack.c.b16 %v3443, %v3442
        %v3601 = vpack.c.b16 %v3445, %v3444
        %v3602 = vpack.c.b16 %v3447, %v3446
        %v3603 = vpack.c.b16 %v3449, %v3448
        %v3604 = vpack.c.b16 %v3451, %v3450
        %v3605 = vpack.c.b16 %v3453, %v3452
        %v3606 = vpack.c.b16 %v3455, %v3454
        %v3607 = vpack.c.b16 %v3457, %v3456
        %v3608 = vpack.c.b16 %v3459, %v3458
        %v3609 = vpack.c.b16 %v3461, %v3460
        %v3610 = vpack.c.b16 %v3463, %v3462
        %v3611 = vpack.c.b16 %v3465, %v3464
        %v3612 = vpack.c.b16 %v3467, %v3466
        %v3613 = vpack.c.b16 %v3469, %v3468
        %v3614 = vpack.c.b16 %v3471, %v3470
        %v3615 = vpack.c.b16 %v3473, %v3472
        %v3616 = vpack.c.b16 %v3475, %v3474
        %v3617 = vpack.c.b16 %v3477, %v3476
        %v3618 = vpack.c.b16 %v3479, %v3478
        %v3619 = vpack.c.b16 %v3481, %v3480
        %v3620 = vpack.c.b16 %v3483, %v3482
        %v3621 = vpack.c.b16 %v3485, %v3484
        %v3622 = vpack.c.b16 %v3487, %v3486
        %v3623 = vpack.c.b16 %v3489, %v3488
        %v3624 = vpack.c.b16 %v3491, %v3490
        %v3625 = vpack.c.b16 %v3493, %v3492
        %v3626 = vpack.c.b16 %v3495, %v3494
        %v3627 = vpack.c.b16 %v3497, %v3496
        %v3628 = vpack.c.b16 %v3499, %v3498
        %v3629 = vpack.c.b16 %v3501, %v3500
        %v3631 = vsel %vm886, %v2649, 0
        %v3634 = vsel %vm886, %v3502, 0
        %v3637 = vsel %vm886, %v3503, 0
        %v3640 = vsel %vm886, %v3504, 0
        %v3643 = vsel %vm886, %v3505, 0
        %v3646 = vsel %vm886, %v3506, 0
        %v3649 = vsel %vm886, %v3507, 0
        %v3652 = vsel %vm886, %v3508, 0
        %v3655 = vsel %vm886, %v3509, 0
        %v3658 = vsel %vm886, %v3510, 0
        %v3661 = vsel %vm886, %v3511, 0
        %v3664 = vsel %vm886, %v3512, 0
        %v3667 = vsel %vm886, %v3513, 0
        %v3670 = vsel %vm886, %v3514, 0
        %v3673 = vsel %vm886, %v3515, 0
        %v3676 = vsel %vm886, %v3516, 0
        %v3679 = vsel %vm886, %v3517, 0
        %v3682 = vsel %vm886, %v3518, 0
        %v3685 = vsel %vm886, %v3519, 0
        %v3688 = vsel %vm886, %v3520, 0
        %v3691 = vsel %vm886, %v3521, 0
        %v3694 = vsel %vm886, %v3522, 0
        %v3697 = vsel %vm886, %v3523, 0
        %v3700 = vsel %vm886, %v3524, 0
        %v3703 = vsel %vm886, %v3525, 0
        %v3706 = vsel %vm886, %v3526, 0
        %v3709 = vsel %vm886, %v3527, 0
        %v3712 = vsel %vm886, %v3528, 0
        %v3715 = vsel %vm886, %v3529, 0
        %v3718 = vsel %vm886, %v3530, 0
        %v3721 = vsel %vm886, %v3531, 0
        %v3724 = vsel %vm886, %v3532, 0
        %v3727 = vsel %vm886, %v3533, 0
        %v3730 = vsel %vm886, %v3534, 0
        %v3733 = vsel %vm886, %v3535, 0
        %v3736 = vsel %vm886, %v3536, 0
        %v3739 = vsel %vm886, %v3537, 0
        %v3742 = vsel %vm886, %v3538, 0
        %v3745 = vsel %vm886, %v3539, 0
        %v3748 = vsel %vm886, %v3540, 0
        %v3751 = vsel %vm886, %v3541, 0
        %v3754 = vsel %vm886, %v3542, 0
        %v3757 = vsel %vm886, %v3543, 0
        %v3760 = vsel %vm886, %v3544, 0
        %v3763 = vsel %vm886, %v3545, 0
        %v3766 = vsel %vm886, %v3546, 0
        %v3769 = vsel %vm886, %v3547, 0
        %v3772 = vsel %vm886, %v3548, 0
        %v3775 = vsel %vm886, %v3549, 0
        %v3778 = vsel %vm886, %v3550, 0
        %v3781 = vsel %vm886, %v3551, 0
        %v3784 = vsel %vm886, %v3552, 0
        %v3787 = vsel %vm886, %v3553, 0
        %v3790 = vsel %vm886, %v3554, 0
        %v3793 = vsel %vm886, %v3555, 0
        %v3796 = vsel %vm886, %v3556, 0
        %v3799 = vsel %vm886, %v3557, 0
        %v3802 = vsel %vm886, %v3558, 0
        %v3805 = vsel %vm886, %v3559, 0
        %v3808 = vsel %vm886, %v3560, 0
        %v3811 = vsel %vm886, %v3561, 0
        %v3814 = vsel %vm886, %v3562, 0
        %v3817 = vsel %vm886, %v3563, 0
        %v3820 = vsel %vm886, %v3564, 0
        %v3823 = vsel %vm886, %v3565, 0
        %v3826 = vsel %vm886, %v3566, 0
        %v3829 = vsel %vm886, %v3567, 0
        %v3832 = vsel %vm886, %v3568, 0
        %v3835 = vsel %vm886, %v3569, 0
        %v3838 = vsel %vm886, %v3570, 0
        %v3841 = vsel %vm886, %v3571, 0
        %v3844 = vsel %vm886, %v3572, 0
        %v3847 = vsel %vm886, %v3573, 0
        %v3850 = vsel %vm886, %v3574, 0
        %v3853 = vsel %vm886, %v3575, 0
        %v3856 = vsel %vm886, %v3576, 0
        %v3859 = vsel %vm886, %v3577, 0
        %v3862 = vsel %vm886, %v3578, 0
        %v3865 = vsel %vm886, %v3579, 0
        %v3868 = vsel %vm886, %v3580, 0
        %v3871 = vsel %vm886, %v3581, 0
        %v3874 = vsel %vm886, %v3582, 0
        %v3877 = vsel %vm886, %v3583, 0
        %v3880 = vsel %vm886, %v3584, 0
        %v3883 = vsel %vm886, %v3585, 0
        %v3886 = vsel %vm886, %v3586, 0
        %v3889 = vsel %vm886, %v3587, 0
        %v3892 = vsel %vm886, %v3588, 0
        %v3895 = vsel %vm886, %v3589, 0
        %v3898 = vsel %vm886, %v3590, 0
        %v3901 = vsel %vm886, %v3591, 0
        %v3904 = vsel %vm886, %v3592, 0
        %v3907 = vsel %vm886, %v3593, 0
        %v3910 = vsel %vm886, %v3594, 0
        %v3913 = vsel %vm886, %v3595, 0
        %v3916 = vsel %vm886, %v3596, 0
        %v3919 = vsel %vm886, %v3597, 0
        %v3922 = vsel %vm886, %v3598, 0
        %v3925 = vsel %vm886, %v3599, 0
        %v3928 = vsel %vm886, %v3600, 0
        %v3931 = vsel %vm886, %v3601, 0
        %v3934 = vsel %vm886, %v3602, 0
        %v3937 = vsel %vm886, %v3603, 0
        %v3940 = vsel %vm886, %v3604, 0
        %v3943 = vsel %vm886, %v3605, 0
        %v3946 = vsel %vm886, %v3606, 0
        %v3949 = vsel %vm886, %v3607, 0
        %v3952 = vsel %vm886, %v3608, 0
        %v3955 = vsel %vm886, %v3609, 0
        %v3958 = vsel %vm886, %v3610, 0
        %v3961 = vsel %vm886, %v3611, 0
        %v3964 = vsel %vm886, %v3612, 0
        %v3967 = vsel %vm886, %v3613, 0
        %v3970 = vsel %vm886, %v3614, 0
        %v3973 = vsel %vm886, %v3615, 0
        %v3976 = vsel %vm886, %v3616, 0
        %v3979 = vsel %vm886, %v3617, 0
        %v3982 = vsel %vm886, %v3618, 0
        %v3985 = vsel %vm886, %v3619, 0
        %v3988 = vsel %vm886, %v3620, 0
        %v3991 = vsel %vm886, %v3621, 0
        %v3994 = vsel %vm886, %v3622, 0
        %v3997 = vsel %vm886, %v3623, 0
        %v4000 = vsel %vm886, %v3624, 0
        %v4003 = vsel %vm886, %v3625, 0
        %v4006 = vsel %vm886, %v3626, 0
        %v4009 = vsel %vm886, %v3627, 0
        %v4012 = vsel %vm886, %v3628, 0
        %v4015 = vsel %vm886, %v3629, 0
        %4017 = vmatprep.subr.bf16.mxu0 0
        %4018 = vmatpush1.bf16.xpose.msra.mxu0 %v3634
        %4019 = vmatprep.subr.bf16.mxu0 0
        %4020 = vmatpush1.bf16.xpose.msra.mxu0 %v3637
        %4021 = vmatprep.subr.bf16.mxu0 0
        %4022 = vmatpush1.bf16.xpose.msra.mxu0 %v3640
        %4023 = vmatprep.subr.bf16.mxu0 0
        %4024 = vmatpush1.bf16.xpose.msra.mxu0 %v3643
        %4025 = vmatprep.subr.bf16.mxu0 0
        %4026 = vmatpush1.bf16.xpose.msra.mxu0 %v3646
        %4027 = vmatprep.subr.bf16.mxu0 0
        %4028 = vmatpush1.bf16.xpose.msra.mxu0 %v3649
        %4029 = vmatprep.subr.bf16.mxu0 0
        %4030 = vmatpush1.bf16.xpose.msra.mxu0 %v3652
        %4031 = vmatprep.subr.bf16.mxu0 0
        %4032 = vmatpush1.bf16.xpose.msra.mxu0 %v3655
        %4033 = vmatprep.subr.bf16.mxu0 0
        %4034 = vmatpush1.bf16.xpose.msra.mxu0 %v3658
        %4035 = vmatprep.subr.bf16.mxu0 0
        %4036 = vmatpush1.bf16.xpose.msra.mxu0 %v3661
        %4037 = vmatprep.subr.bf16.mxu0 0
        %4038 = vmatpush1.bf16.xpose.msra.mxu0 %v3664
        %4039 = vmatprep.subr.bf16.mxu0 0
        %4040 = vmatpush1.bf16.xpose.msra.mxu0 %v3667
        %4041 = vmatprep.subr.bf16.mxu0 0
        %4042 = vmatpush1.bf16.xpose.msra.mxu0 %v3670
        %4043 = vmatprep.subr.bf16.mxu0 0
        %4044 = vmatpush1.bf16.xpose.msra.mxu0 %v3673
        %4045 = vmatprep.subr.bf16.mxu0 0
        %4046 = vmatpush1.bf16.xpose.msra.mxu0 %v3676
        %4047 = vmatprep.subr.bf16.mxu0 0
        %4048 = vmatpush1.bf16.xpose.msra.mxu0 %v3679
        %4049 = vmatprep.mubr.bf16.mxu0 0
        %4050 = vmatmul.mubr.bf16.gmra.mrb[0].mxu0 %v3631
        %v4051 = vpop.f32.mrb[0].mxu0
        %v4052 = vadd.f32 %v2913, %v4051
        %v4053 = vpop.f32.mrb[0].mxu0
        %v4054 = vadd.f32 %v2917, %v4053
        %v4055 = vpop.f32.mrb[0].mxu0
        %v4056 = vadd.f32 %v2913, %v4055
        %v4057 = vpop.f32.mrb[0].mxu0
        %v4058 = vadd.f32 %v2917, %v4057
        %4059 = vdwg.mxu0
        %4060 = vmatprep.subr.bf16.mxu0 0
        %4061 = vmatpush1.bf16.xpose.msra.mxu0 %v3682
        %4062 = vmatprep.subr.bf16.mxu0 0
        %4063 = vmatpush1.bf16.xpose.msra.mxu0 %v3685
        %4064 = vmatprep.subr.bf16.mxu0 0
        %4065 = vmatpush1.bf16.xpose.msra.mxu0 %v3688
        %4066 = vmatprep.subr.bf16.mxu0 0
        %4067 = vmatpush1.bf16.xpose.msra.mxu0 %v3691
        %4068 = vmatprep.subr.bf16.mxu0 0
        %4069 = vmatpush1.bf16.xpose.msra.mxu0 %v3694
        %4070 = vmatprep.subr.bf16.mxu0 0
        %4071 = vmatpush1.bf16.xpose.msra.mxu0 %v3697
        %4072 = vmatprep.subr.bf16.mxu0 0
        %4073 = vmatpush1.bf16.xpose.msra.mxu0 %v3700
        %4074 = vmatprep.subr.bf16.mxu0 0
        %4075 = vmatpush1.bf16.xpose.msra.mxu0 %v3703
        %4076 = vmatprep.subr.bf16.mxu0 0
        %4077 = vmatpush1.bf16.xpose.msra.mxu0 %v3706
        %4078 = vmatprep.subr.bf16.mxu0 0
        %4079 = vmatpush1.bf16.xpose.msra.mxu0 %v3709
        %4080 = vmatprep.subr.bf16.mxu0 0
        %4081 = vmatpush1.bf16.xpose.msra.mxu0 %v3712
        %4082 = vmatprep.subr.bf16.mxu0 0
        %4083 = vmatpush1.bf16.xpose.msra.mxu0 %v3715
        %4084 = vmatprep.subr.bf16.mxu0 0
        %4085 = vmatpush1.bf16.xpose.msra.mxu0 %v3718
        %4086 = vmatprep.subr.bf16.mxu0 0
        %4087 = vmatpush1.bf16.xpose.msra.mxu0 %v3721
        %4088 = vmatprep.subr.bf16.mxu0 0
        %4089 = vmatpush1.bf16.xpose.msra.mxu0 %v3724
        %4090 = vmatprep.subr.bf16.mxu0 0
        %4091 = vmatpush1.bf16.xpose.msra.mxu0 %v3727
        %4092 = vmatprep.mubr.bf16.mxu0 0
        %4093 = vmatmul.mubr.bf16.gmra.mrb[0].mxu0 %v3631
        %v4094 = vpop.f32.mrb[0].mxu0
        %v4095 = vadd.f32 %v2921, %v4094
        %v4096 = vpop.f32.mrb[0].mxu0
        %v4097 = vadd.f32 %v2925, %v4096
        %v4098 = vpop.f32.mrb[0].mxu0
        %v4099 = vadd.f32 %v2921, %v4098
        %v4100 = vpop.f32.mrb[0].mxu0
        %v4101 = vadd.f32 %v2925, %v4100
        %4102 = vdwg.mxu0
        %4103 = vmatprep.subr.bf16.mxu0 0
        %4104 = vmatpush1.bf16.xpose.msra.mxu0 %v3730
        %4105 = vmatprep.subr.bf16.mxu0 0
        %4106 = vmatpush1.bf16.xpose.msra.mxu0 %v3733
        %4107 = vmatprep.subr.bf16.mxu0 0
        %4108 = vmatpush1.bf16.xpose.msra.mxu0 %v3736
        %4109 = vmatprep.subr.bf16.mxu0 0
        %4110 = vmatpush1.bf16.xpose.msra.mxu0 %v3739
        %4111 = vmatprep.subr.bf16.mxu0 0
        %4112 = vmatpush1.bf16.xpose.msra.mxu0 %v3742
        %4113 = vmatprep.subr.bf16.mxu0 0
        %4114 = vmatpush1.bf16.xpose.msra.mxu0 %v3745
        %4115 = vmatprep.subr.bf16.mxu0 0
        %4116 = vmatpush1.bf16.xpose.msra.mxu0 %v3748
        %4117 = vmatprep.subr.bf16.mxu0 0
        %4118 = vmatpush1.bf16.xpose.msra.mxu0 %v3751
        %4119 = vmatprep.subr.bf16.mxu0 0
        %4120 = vmatpush1.bf16.xpose.msra.mxu0 %v3754
        %4121 = vmatprep.subr.bf16.mxu0 0
        %4122 = vmatpush1.bf16.xpose.msra.mxu0 %v3757
        %4123 = vmatprep.subr.bf16.mxu0 0
        %4124 = vmatpush1.bf16.xpose.msra.mxu0 %v3760
        %4125 = vmatprep.subr.bf16.mxu0 0
        %4126 = vmatpush1.bf16.xpose.msra.mxu0 %v3763
        %4127 = vmatprep.subr.bf16.mxu0 0
        %4128 = vmatpush1.bf16.xpose.msra.mxu0 %v3766
        %4129 = vmatprep.subr.bf16.mxu0 0
        %4130 = vmatpush1.bf16.xpose.msra.mxu0 %v3769
        %4131 = vmatprep.subr.bf16.mxu0 0
        %4132 = vmatpush1.bf16.xpose.msra.mxu0 %v3772
        %4133 = vmatprep.subr.bf16.mxu0 0
        %4134 = vmatpush1.bf16.xpose.msra.mxu0 %v3775
        %4135 = vmatprep.mubr.bf16.mxu0 0
        %4136 = vmatmul.mubr.bf16.gmra.mrb[0].mxu0 %v3631
        %v4137 = vpop.f32.mrb[0].mxu0
        %v4138 = vadd.f32 %v2929, %v4137
        %v4139 = vpop.f32.mrb[0].mxu0
        %v4140 = vadd.f32 %v2933, %v4139
        %v4141 = vpop.f32.mrb[0].mxu0
        %v4142 = vadd.f32 %v2929, %v4141
        %v4143 = vpop.f32.mrb[0].mxu0
        %v4144 = vadd.f32 %v2933, %v4143
        %4145 = vdwg.mxu0
        %4146 = vmatprep.subr.bf16.mxu0 0
        %4147 = vmatpush1.bf16.xpose.msra.mxu0 %v3778
        %4148 = vmatprep.subr.bf16.mxu0 0
        %4149 = vmatpush1.bf16.xpose.msra.mxu0 %v3781
        %4150 = vmatprep.subr.bf16.mxu0 0
        %4151 = vmatpush1.bf16.xpose.msra.mxu0 %v3784
        %4152 = vmatprep.subr.bf16.mxu0 0
        %4153 = vmatpush1.bf16.xpose.msra.mxu0 %v3787
        %4154 = vmatprep.subr.bf16.mxu0 0
        %4155 = vmatpush1.bf16.xpose.msra.mxu0 %v3790
        %4156 = vmatprep.subr.bf16.mxu0 0
        %4157 = vmatpush1.bf16.xpose.msra.mxu0 %v3793
        %4158 = vmatprep.subr.bf16.mxu0 0
        %4159 = vmatpush1.bf16.xpose.msra.mxu0 %v3796
        %4160 = vmatprep.subr.bf16.mxu0 0
        %4161 = vmatpush1.bf16.xpose.msra.mxu0 %v3799
        %4162 = vmatprep.subr.bf16.mxu0 0
        %4163 = vmatpush1.bf16.xpose.msra.mxu0 %v3802
        %4164 = vmatprep.subr.bf16.mxu0 0
        %4165 = vmatpush1.bf16.xpose.msra.mxu0 %v3805
        %4166 = vmatprep.subr.bf16.mxu0 0
        %4167 = vmatpush1.bf16.xpose.msra.mxu0 %v3808
        %4168 = vmatprep.subr.bf16.mxu0 0
        %4169 = vmatpush1.bf16.xpose.msra.mxu0 %v3811
        %4170 = vmatprep.subr.bf16.mxu0 0
        %4171 = vmatpush1.bf16.xpose.msra.mxu0 %v3814
        %4172 = vmatprep.subr.bf16.mxu0 0
        %4173 = vmatpush1.bf16.xpose.msra.mxu0 %v3817
        %4174 = vmatprep.subr.bf16.mxu0 0
        %4175 = vmatpush1.bf16.xpose.msra.mxu0 %v3820
        %4176 = vmatprep.subr.bf16.mxu0 0
        %4177 = vmatpush1.bf16.xpose.msra.mxu0 %v3823
        %4178 = vmatprep.mubr.bf16.mxu0 0
        %4179 = vmatmul.mubr.bf16.gmra.mrb[0].mxu0 %v3631
        %v4180 = vpop.f32.mrb[0].mxu0
        %v4181 = vadd.f32 %v2937, %v4180
        %v4182 = vpop.f32.mrb[0].mxu0
        %v4183 = vadd.f32 %v2941, %v4182
        %v4184 = vpop.f32.mrb[0].mxu0
        %v4185 = vadd.f32 %v2937, %v4184
        %v4186 = vpop.f32.mrb[0].mxu0
        %v4187 = vadd.f32 %v2941, %v4186
        %4188 = vdwg.mxu0
        %4189 = vmatprep.subr.bf16.mxu0 0
        %4190 = vmatpush1.bf16.xpose.msra.mxu0 %v3826
        %4191 = vmatprep.subr.bf16.mxu0 0
        %4192 = vmatpush1.bf16.xpose.msra.mxu0 %v3829
        %4193 = vmatprep.subr.bf16.mxu0 0
        %4194 = vmatpush1.bf16.xpose.msra.mxu0 %v3832
        %4195 = vmatprep.subr.bf16.mxu0 0
        %4196 = vmatpush1.bf16.xpose.msra.mxu0 %v3835
        %4197 = vmatprep.subr.bf16.mxu0 0
        %4198 = vmatpush1.bf16.xpose.msra.mxu0 %v3838
        %4199 = vmatprep.subr.bf16.mxu0 0
        %4200 = vmatpush1.bf16.xpose.msra.mxu0 %v3841
        %4201 = vmatprep.subr.bf16.mxu0 0
        %4202 = vmatpush1.bf16.xpose.msra.mxu0 %v3844
        %4203 = vmatprep.subr.bf16.mxu0 0
        %4204 = vmatpush1.bf16.xpose.msra.mxu0 %v3847
        %4205 = vmatprep.subr.bf16.mxu0 0
        %4206 = vmatpush1.bf16.xpose.msra.mxu0 %v3850
        %4207 = vmatprep.subr.bf16.mxu0 0
        %4208 = vmatpush1.bf16.xpose.msra.mxu0 %v3853
        %4209 = vmatprep.subr.bf16.mxu0 0
        %4210 = vmatpush1.bf16.xpose.msra.mxu0 %v3856
        %4211 = vmatprep.subr.bf16.mxu0 0
        %4212 = vmatpush1.bf16.xpose.msra.mxu0 %v3859
        %4213 = vmatprep.subr.bf16.mxu0 0
        %4214 = vmatpush1.bf16.xpose.msra.mxu0 %v3862
        %4215 = vmatprep.subr.bf16.mxu0 0
        %4216 = vmatpush1.bf16.xpose.msra.mxu0 %v3865
        %4217 = vmatprep.subr.bf16.mxu0 0
        %4218 = vmatpush1.bf16.xpose.msra.mxu0 %v3868
        %4219 = vmatprep.subr.bf16.mxu0 0
        %4220 = vmatpush1.bf16.xpose.msra.mxu0 %v3871
        %4221 = vmatprep.mubr.bf16.mxu0 0
        %4222 = vmatmul.mubr.bf16.gmra.mrb[0].mxu0 %v3631
        %v4223 = vpop.f32.mrb[0].mxu0
        %v4224 = vadd.f32 %v2945, %v4223
        %v4225 = vpop.f32.mrb[0].mxu0
        %v4226 = vadd.f32 %v2949, %v4225
        %v4227 = vpop.f32.mrb[0].mxu0
        %v4228 = vadd.f32 %v2945, %v4227
        %v4229 = vpop.f32.mrb[0].mxu0
        %v4230 = vadd.f32 %v2949, %v4229
        %4231 = vdwg.mxu0
        %4232 = vmatprep.subr.bf16.mxu0 0
        %4233 = vmatpush1.bf16.xpose.msra.mxu0 %v3874
        %4234 = vmatprep.subr.bf16.mxu0 0
        %4235 = vmatpush1.bf16.xpose.msra.mxu0 %v3877
        %4236 = vmatprep.subr.bf16.mxu0 0
        %4237 = vmatpush1.bf16.xpose.msra.mxu0 %v3880
        %4238 = vmatprep.subr.bf16.mxu0 0
        %4239 = vmatpush1.bf16.xpose.msra.mxu0 %v3883
        %4240 = vmatprep.subr.bf16.mxu0 0
        %4241 = vmatpush1.bf16.xpose.msra.mxu0 %v3886
        %4242 = vmatprep.subr.bf16.mxu0 0
        %4243 = vmatpush1.bf16.xpose.msra.mxu0 %v3889
        %4244 = vmatprep.subr.bf16.mxu0 0
        %4245 = vmatpush1.bf16.xpose.msra.mxu0 %v3892
        %4246 = vmatprep.subr.bf16.mxu0 0
        %4247 = vmatpush1.bf16.xpose.msra.mxu0 %v3895
        %4248 = vmatprep.subr.bf16.mxu0 0
        %4249 = vmatpush1.bf16.xpose.msra.mxu0 %v3898
        %4250 = vmatprep.subr.bf16.mxu0 0
        %4251 = vmatpush1.bf16.xpose.msra.mxu0 %v3901
        %4252 = vmatprep.subr.bf16.mxu0 0
        %4253 = vmatpush1.bf16.xpose.msra.mxu0 %v3904
        %4254 = vmatprep.subr.bf16.mxu0 0
        %4255 = vmatpush1.bf16.xpose.msra.mxu0 %v3907
        %4256 = vmatprep.subr.bf16.mxu0 0
        %4257 = vmatpush1.bf16.xpose.msra.mxu0 %v3910
        %4258 = vmatprep.subr.bf16.mxu0 0
        %4259 = vmatpush1.bf16.xpose.msra.mxu0 %v3913
        %4260 = vmatprep.subr.bf16.mxu0 0
        %4261 = vmatpush1.bf16.xpose.msra.mxu0 %v3916
        %4262 = vmatprep.subr.bf16.mxu0 0
        %4263 = vmatpush1.bf16.xpose.msra.mxu0 %v3919
        %4264 = vmatprep.mubr.bf16.mxu0 0
        %4265 = vmatmul.mubr.bf16.gmra.mrb[0].mxu0 %v3631
        %v4266 = vpop.f32.mrb[0].mxu0
        %v4267 = vadd.f32 %v2953, %v4266
        %v4268 = vpop.f32.mrb[0].mxu0
        %v4269 = vadd.f32 %v2957, %v4268
        %v4270 = vpop.f32.mrb[0].mxu0
        %v4271 = vadd.f32 %v2953, %v4270
        %v4272 = vpop.f32.mrb[0].mxu0
        %v4273 = vadd.f32 %v2957, %v4272
        %4274 = vdwg.mxu0
        %4275 = vmatprep.subr.bf16.mxu0 0
        %4276 = vmatpush1.bf16.xpose.msra.mxu0 %v3922
        %4277 = vmatprep.subr.bf16.mxu0 0
        %4278 = vmatpush1.bf16.xpose.msra.mxu0 %v3925
        %4279 = vmatprep.subr.bf16.mxu0 0
        %4280 = vmatpush1.bf16.xpose.msra.mxu0 %v3928
        %4281 = vmatprep.subr.bf16.mxu0 0
        %4282 = vmatpush1.bf16.xpose.msra.mxu0 %v3931
        %4283 = vmatprep.subr.bf16.mxu0 0
        %4284 = vmatpush1.bf16.xpose.msra.mxu0 %v3934
        %4285 = vmatprep.subr.bf16.mxu0 0
        %4286 = vmatpush1.bf16.xpose.msra.mxu0 %v3937
        %4287 = vmatprep.subr.bf16.mxu0 0
        %4288 = vmatpush1.bf16.xpose.msra.mxu0 %v3940
        %4289 = vmatprep.subr.bf16.mxu0 0
        %4290 = vmatpush1.bf16.xpose.msra.mxu0 %v3943
        %4291 = vmatprep.subr.bf16.mxu0 0
        %4292 = vmatpush1.bf16.xpose.msra.mxu0 %v3946
        %4293 = vmatprep.subr.bf16.mxu0 0
        %4294 = vmatpush1.bf16.xpose.msra.mxu0 %v3949
        %4295 = vmatprep.subr.bf16.mxu0 0
        %4296 = vmatpush1.bf16.xpose.msra.mxu0 %v3952
        %4297 = vmatprep.subr.bf16.mxu0 0
        %4298 = vmatpush1.bf16.xpose.msra.mxu0 %v3955
        %4299 = vmatprep.subr.bf16.mxu0 0
        %4300 = vmatpush1.bf16.xpose.msra.mxu0 %v3958
        %4301 = vmatprep.subr.bf16.mxu0 0
        %4302 = vmatpush1.bf16.xpose.msra.mxu0 %v3961
        %4303 = vmatprep.subr.bf16.mxu0 0
        %4304 = vmatpush1.bf16.xpose.msra.mxu0 %v3964
        %4305 = vmatprep.subr.bf16.mxu0 0
        %4306 = vmatpush1.bf16.xpose.msra.mxu0 %v3967
        %4307 = vmatprep.mubr.bf16.mxu0 0
        %4308 = vmatmul.mubr.bf16.gmra.mrb[0].mxu0 %v3631
        %v4309 = vpop.f32.mrb[0].mxu0
        %v4310 = vadd.f32 %v2961, %v4309
        %v4311 = vpop.f32.mrb[0].mxu0
        %v4312 = vadd.f32 %v2965, %v4311
        %v4313 = vpop.f32.mrb[0].mxu0
        %v4314 = vadd.f32 %v2961, %v4313
        %v4315 = vpop.f32.mrb[0].mxu0
        %v4316 = vadd.f32 %v2965, %v4315
        %4317 = vdwg.mxu0
        %4318 = vmatprep.subr.bf16.mxu0 0
        %4319 = vmatpush1.bf16.xpose.msra.mxu0 %v3970
        %4320 = vmatprep.subr.bf16.mxu0 0
        %4321 = vmatpush1.bf16.xpose.msra.mxu0 %v3973
        %4322 = vmatprep.subr.bf16.mxu0 0
        %4323 = vmatpush1.bf16.xpose.msra.mxu0 %v3976
        %4324 = vmatprep.subr.bf16.mxu0 0
        %4325 = vmatpush1.bf16.xpose.msra.mxu0 %v3979
        %4326 = vmatprep.subr.bf16.mxu0 0
        %4327 = vmatpush1.bf16.xpose.msra.mxu0 %v3982
        %4328 = vmatprep.subr.bf16.mxu0 0
        %4329 = vmatpush1.bf16.xpose.msra.mxu0 %v3985
        %4330 = vmatprep.subr.bf16.mxu0 0
        %4331 = vmatpush1.bf16.xpose.msra.mxu0 %v3988
        %4332 = vmatprep.subr.bf16.mxu0 0
        %4333 = vmatpush1.bf16.xpose.msra.mxu0 %v3991
        %4334 = vmatprep.subr.bf16.mxu0 0
        %4335 = vmatpush1.bf16.xpose.msra.mxu0 %v3994
        %4336 = vmatprep.subr.bf16.mxu0 0
        %4337 = vmatpush1.bf16.xpose.msra.mxu0 %v3997
        %4338 = vmatprep.subr.bf16.mxu0 0
        %4339 = vmatpush1.bf16.xpose.msra.mxu0 %v4000
        %4340 = vmatprep.subr.bf16.mxu0 0
        %4341 = vmatpush1.bf16.xpose.msra.mxu0 %v4003
        %4342 = vmatprep.subr.bf16.mxu0 0
        %4343 = vmatpush1.bf16.xpose.msra.mxu0 %v4006
        %4344 = vmatprep.subr.bf16.mxu0 0
        %4345 = vmatpush1.bf16.xpose.msra.mxu0 %v4009
        %4346 = vmatprep.subr.bf16.mxu0 0
        %4347 = vmatpush1.bf16.xpose.msra.mxu0 %v4012
        %4348 = vmatprep.subr.bf16.mxu0 0
        %4349 = vmatpush1.bf16.xpose.msra.mxu0 %v4015
        %4350 = vmatprep.mubr.bf16.mxu0 0
        %4351 = vmatmul.mubr.bf16.gmra.mrb[0].mxu0 %v3631
        %v4352 = vpop.f32.mrb[0].mxu0
        %v4353 = vadd.f32 %v2969, %v4352
        %v4354 = vpop.f32.mrb[0].mxu0
        %v4355 = vadd.f32 %v2973, %v4354
        %v4356 = vpop.f32.mrb[0].mxu0
        %v4357 = vadd.f32 %v2969, %v4356
        %v4358 = vpop.f32.mrb[0].mxu0
        %v4359 = vadd.f32 %v2973, %v4358
        %4360 = vdwg.mxu0
        %v4361 = vmax.f32 %v4052, 0.0
        %v4362 = vmax.f32 %v4054, 0.0
        %v4363 = vmax.f32 %v4095, 0.0
        %v4364 = vmax.f32 %v4097, 0.0
        %v4365 = vmax.f32 %v4138, 0.0
        %v4366 = vmax.f32 %v4140, 0.0
        %v4367 = vmax.f32 %v4181, 0.0
        %v4368 = vmax.f32 %v4183, 0.0
        %v4369 = vmax.f32 %v4224, 0.0
        %v4370 = vmax.f32 %v4226, 0.0
        %v4371 = vmax.f32 %v4267, 0.0
        %v4372 = vmax.f32 %v4269, 0.0
        %v4373 = vmax.f32 %v4310, 0.0
        %v4374 = vmax.f32 %v4312, 0.0
        %v4375 = vmax.f32 %v4353, 0.0
        %v4376 = vmax.f32 %v4355, 0.0
        %v4377 = vmax.f32 %v4056, 0.0
        %v4378 = vmax.f32 %v4058, 0.0
        %v4379 = vmax.f32 %v4099, 0.0
        %v4380 = vmax.f32 %v4101, 0.0
        %v4381 = vmax.f32 %v4142, 0.0
        %v4382 = vmax.f32 %v4144, 0.0
        %v4383 = vmax.f32 %v4185, 0.0
        %v4384 = vmax.f32 %v4187, 0.0
        %v4385 = vmax.f32 %v4228, 0.0
        %v4386 = vmax.f32 %v4230, 0.0
        %v4387 = vmax.f32 %v4271, 0.0
        %v4388 = vmax.f32 %v4273, 0.0
        %v4389 = vmax.f32 %v4314, 0.0
        %v4390 = vmax.f32 %v4316, 0.0
        %v4391 = vmax.f32 %v4357, 0.0
        %v4392 = vmax.f32 %v4359, 0.0
        %v4393 = vpack.c.bf16 %v4377, %v4361
        %v4394 = vpack.c.bf16 %v4378, %v4362
        %v4395 = vpack.c.bf16 %v4379, %v4363
        %v4396 = vpack.c.bf16 %v4380, %v4364
        %v4397 = vpack.c.bf16 %v4381, %v4365
        %v4398 = vpack.c.bf16 %v4382, %v4366
        %v4399 = vpack.c.bf16 %v4383, %v4367
        %v4400 = vpack.c.bf16 %v4384, %v4368
        %v4401 = vpack.c.bf16 %v4385, %v4369
        %v4402 = vpack.c.bf16 %v4386, %v4370
        %v4403 = vpack.c.bf16 %v4387, %v4371
        %v4404 = vpack.c.bf16 %v4388, %v4372
        %v4405 = vpack.c.bf16 %v4389, %v4373
        %v4406 = vpack.c.bf16 %v4390, %v4374
        %v4407 = vpack.c.bf16 %v4391, %v4375
        %v4408 = vpack.c.bf16 %v4392, %v4376
        %v4409 = vld [vmem:[%s736] sm:$0xff]
        %v4410 = vld [vmem:[%s736 + $0x8] sm:$0xff]
        %v4411 = vld [vmem:[%s736 + $0x10] sm:$0xff]
        %v4412 = vld [vmem:[%s736 + $0x18] sm:$0xff]
        %v4413 = vld [vmem:[%s736 + $0x20] sm:$0xff]
        %v4414 = vld [vmem:[%s736 + $0x28] sm:$0xff]
        %v4415 = vld [vmem:[%s736 + $0x30] sm:$0xff]
        %v4416 = vld [vmem:[%s736 + $0x38] sm:$0xff]
        %v4417 = vld [vmem:[%s736 + $0x40] sm:$0xff]
        %v4418 = vld [vmem:[%s736 + $0x48] sm:$0xff]
        %v4419 = vld [vmem:[%s736 + $0x50] sm:$0xff]
        %v4420 = vld [vmem:[%s736 + $0x58] sm:$0xff]
        %v4421 = vld [vmem:[%s736 + $0x60] sm:$0xff]
        %v4422 = vld [vmem:[%s736 + $0x68] sm:$0xff]
        %v4423 = vld [vmem:[%s736 + $0x70] sm:$0xff]
        %v4424 = vld [vmem:[%s736 + $0x78] sm:$0xff]
        %v4425 = vld [vmem:[%s736 + $0x80] sm:$0xff]
        %v4426 = vld [vmem:[%s736 + $0x88] sm:$0xff]
        %v4427 = vld [vmem:[%s736 + $0x90] sm:$0xff]
        %v4428 = vld [vmem:[%s736 + $0x98] sm:$0xff]
        %v4429 = vld [vmem:[%s736 + $0xa0] sm:$0xff]
        %v4430 = vld [vmem:[%s736 + $0xa8] sm:$0xff]
        %v4431 = vld [vmem:[%s736 + $0xb0] sm:$0xff]
        %v4432 = vld [vmem:[%s736 + $0xb8] sm:$0xff]
        %v4433 = vld [vmem:[%s736 + $0xc0] sm:$0xff]
        %v4434 = vld [vmem:[%s736 + $0xc8] sm:$0xff]
        %v4435 = vld [vmem:[%s736 + $0xd0] sm:$0xff]
        %v4436 = vld [vmem:[%s736 + $0xd8] sm:$0xff]
        %v4437 = vld [vmem:[%s736 + $0xe0] sm:$0xff]
        %v4438 = vld [vmem:[%s736 + $0xe8] sm:$0xff]
        %v4439 = vld [vmem:[%s736 + $0xf0] sm:$0xff]
        %v4440 = vld [vmem:[%s736 + $0xf8] sm:$0xff]
        %v4441 = vld [vmem:[%s739] sm:$0x1]
        %v4443 = vlaneseq
        %v4444 = vshrl.u32 %v4443, 7
        %v4445 = vsub.s32 0, %v4444
        %v4446 = vrot.slane %v4441, %v4445
        %v4480 = vunpack.c.l.b16 %v4409
        %v4481 = vunpack.c.h.b16 %v4409
        %v4482 = vunpack.c.l.b16 %v4410
        %v4483 = vunpack.c.h.b16 %v4410
        %v4484 = vunpack.c.l.b16 %v4411
        %v4485 = vunpack.c.h.b16 %v4411
        %v4486 = vunpack.c.l.b16 %v4412
        %v4487 = vunpack.c.h.b16 %v4412
        %v4488 = vunpack.c.l.b16 %v4413
        %v4489 = vunpack.c.h.b16 %v4413
        %v4490 = vunpack.c.l.b16 %v4414
        %v4491 = vunpack.c.h.b16 %v4414
        %v4492 = vunpack.c.l.b16 %v4415
        %v4493 = vunpack.c.h.b16 %v4415
        %v4494 = vunpack.c.l.b16 %v4416
        %v4495 = vunpack.c.h.b16 %v4416
        %v4496 = vunpack.c.l.b16 %v4417
        %v4497 = vunpack.c.h.b16 %v4417
        %v4498 = vunpack.c.l.b16 %v4418
        %v4499 = vunpack.c.h.b16 %v4418
        %v4500 = vunpack.c.l.b16 %v4419
        %v4501 = vunpack.c.h.b16 %v4419
        %v4502 = vunpack.c.l.b16 %v4420
        %v4503 = vunpack.c.h.b16 %v4420
        %v4504 = vunpack.c.l.b16 %v4421
        %v4505 = vunpack.c.h.b16 %v4421
        %v4506 = vunpack.c.l.b16 %v4422
        %v4507 = vunpack.c.h.b16 %v4422
        %v4508 = vunpack.c.l.b16 %v4423
        %v4509 = vunpack.c.h.b16 %v4423
        %v4510 = vunpack.c.l.b16 %v4424
        %v4511 = vunpack.c.h.b16 %v4424
        %v4512 = vunpack.c.l.b16 %v4425
        %v4513 = vunpack.c.h.b16 %v4425
        %v4514 = vunpack.c.l.b16 %v4426
        %v4515 = vunpack.c.h.b16 %v4426
        %v4516 = vunpack.c.l.b16 %v4427
        %v4517 = vunpack.c.h.b16 %v4427
        %v4518 = vunpack.c.l.b16 %v4428
        %v4519 = vunpack.c.h.b16 %v4428
        %v4520 = vunpack.c.l.b16 %v4429
        %v4521 = vunpack.c.h.b16 %v4429
        %v4522 = vunpack.c.l.b16 %v4430
        %v4523 = vunpack.c.h.b16 %v4430
        %v4524 = vunpack.c.l.b16 %v4431
        %v4525 = vunpack.c.h.b16 %v4431
        %v4526 = vunpack.c.l.b16 %v4432
        %v4527 = vunpack.c.h.b16 %v4432
        %v4528 = vunpack.c.l.b16 %v4433
        %v4529 = vunpack.c.h.b16 %v4433
        %v4530 = vunpack.c.l.b16 %v4434
        %v4531 = vunpack.c.h.b16 %v4434
        %v4532 = vunpack.c.l.b16 %v4435
        %v4533 = vunpack.c.h.b16 %v4435
        %v4534 = vunpack.c.l.b16 %v4436
        %v4535 = vunpack.c.h.b16 %v4436
        %v4536 = vunpack.c.l.b16 %v4437
        %v4537 = vunpack.c.h.b16 %v4437
        %v4538 = vunpack.c.l.b16 %v4438
        %v4539 = vunpack.c.h.b16 %v4438
        %v4540 = vunpack.c.l.b16 %v4439
        %v4541 = vunpack.c.h.b16 %v4439
        %v4542 = vunpack.c.l.b16 %v4440
        %v4543 = vunpack.c.h.b16 %v4440
        %v4544 = vpack.c.b16 %v4496, %v4480
        %v4545 = vpack.c.b16 %v4497, %v4481
        %v4546 = vpack.c.b16 %v4498, %v4482
        %v4547 = vpack.c.b16 %v4499, %v4483
        %v4548 = vpack.c.b16 %v4500, %v4484
        %v4549 = vpack.c.b16 %v4501, %v4485
        %v4550 = vpack.c.b16 %v4502, %v4486
        %v4551 = vpack.c.b16 %v4503, %v4487
        %v4552 = vpack.c.b16 %v4504, %v4488
        %v4553 = vpack.c.b16 %v4505, %v4489
        %v4554 = vpack.c.b16 %v4506, %v4490
        %v4555 = vpack.c.b16 %v4507, %v4491
        %v4556 = vpack.c.b16 %v4508, %v4492
        %v4557 = vpack.c.b16 %v4509, %v4493
        %v4558 = vpack.c.b16 %v4510, %v4494
        %v4559 = vpack.c.b16 %v4511, %v4495
        %v4560 = vpack.c.b16 %v4528, %v4512
        %v4561 = vpack.c.b16 %v4529, %v4513
        %v4562 = vpack.c.b16 %v4530, %v4514
        %v4563 = vpack.c.b16 %v4531, %v4515
        %v4564 = vpack.c.b16 %v4532, %v4516
        %v4565 = vpack.c.b16 %v4533, %v4517
        %v4566 = vpack.c.b16 %v4534, %v4518
        %v4567 = vpack.c.b16 %v4535, %v4519
        %v4568 = vpack.c.b16 %v4536, %v4520
        %v4569 = vpack.c.b16 %v4537, %v4521
        %v4570 = vpack.c.b16 %v4538, %v4522
        %v4571 = vpack.c.b16 %v4539, %v4523
        %v4572 = vpack.c.b16 %v4540, %v4524
        %v4573 = vpack.c.b16 %v4541, %v4525
        %v4574 = vpack.c.b16 %v4542, %v4526
        %v4575 = vpack.c.b16 %v4543, %v4527
        %4608 = vmatprep.subr.bf16.mxu0 %v4545
        %4609 = vmatpush1.bf16.xpose.msra.mxu0 %v4544
        %4610 = vmatprep.subr.bf16.mxu0 %v4561
        %4611 = vmatpush1.bf16.xpose.msra.mxu0 %v4560
        %4612 = vmatprep.subr.bf16.mxu0 0
        %4613 = vmatpush1.bf16.xpose.msra.mxu0 0
        %4614 = vmatprep.subr.bf16.mxu0 0
        %4615 = vmatpush1.bf16.xpose.msra.mxu0 0
        %4616 = vmatprep.subr.bf16.mxu0 0
        %4617 = vmatpush1.bf16.xpose.msra.mxu0 0
        %4618 = vmatprep.subr.bf16.mxu0 0
        %4619 = vmatpush1.bf16.xpose.msra.mxu0 0
        %4620 = vmatprep.subr.bf16.mxu0 0
        %4621 = vmatpush1.bf16.xpose.msra.mxu0 0
        %4622 = vmatprep.subr.bf16.mxu0 0
        %4623 = vmatpush1.bf16.xpose.msra.mxu0 0
        %4624 = vmatprep.subr.bf16.mxu0 0
        %4625 = vmatpush1.bf16.xpose.msra.mxu0 0
        %4626 = vmatprep.subr.bf16.mxu0 0
        %4627 = vmatpush1.bf16.xpose.msra.mxu0 0
        %4628 = vmatprep.subr.bf16.mxu0 0
        %4629 = vmatpush1.bf16.xpose.msra.mxu0 0
        %4630 = vmatprep.subr.bf16.mxu0 0
        %4631 = vmatpush1.bf16.xpose.msra.mxu0 0
        %4632 = vmatprep.subr.bf16.mxu0 0
        %4633 = vmatpush1.bf16.xpose.msra.mxu0 0
        %4634 = vmatprep.subr.bf16.mxu0 0
        %4635 = vmatpush1.bf16.xpose.msra.mxu0 0
        %4636 = vmatprep.subr.bf16.mxu0 0
        %4637 = vmatpush1.bf16.xpose.msra.mxu0 0
        %4638 = vmatprep.subr.bf16.mxu0 0
        %4639 = vmatpush1.bf16.xpose.msra.mxu0 0
        %4640 = vmatprep.mubr.bf16.mxu0 %v4394
        %4641 = vmatmul.mubr.bf16.gmra.mrb[0].mxu0 %v4393
        %v4642 = vpop.f32.mrb[0].mxu0
        %v4643 = vadd.f32 %v4446, %v4642
        %v4644 = vpop.f32.mrb[0].mxu0
        %v4645 = vpop.f32.mrb[0].mxu0
        %v4646 = vadd.f32 %v4446, %v4645
        %v4647 = vpop.f32.mrb[0].mxu0
        %4648 = vdwg.mxu0
        %4649 = vmatprep.subr.bf16.mxu0 %v4547
        %4650 = vmatpush1.bf16.xpose.msra.mxu0 %v4546
        %4651 = vmatprep.subr.bf16.mxu0 %v4563
        %4652 = vmatpush1.bf16.xpose.msra.mxu0 %v4562
        %4653 = vmatprep.subr.bf16.mxu0 0
        %4654 = vmatpush1.bf16.xpose.msra.mxu0 0
        %4655 = vmatprep.subr.bf16.mxu0 0
        %4656 = vmatpush1.bf16.xpose.msra.mxu0 0
        %4657 = vmatprep.subr.bf16.mxu0 0
        %4658 = vmatpush1.bf16.xpose.msra.mxu0 0
        %4659 = vmatprep.subr.bf16.mxu0 0
        %4660 = vmatpush1.bf16.xpose.msra.mxu0 0
        %4661 = vmatprep.subr.bf16.mxu0 0
        %4662 = vmatpush1.bf16.xpose.msra.mxu0 0
        %4663 = vmatprep.subr.bf16.mxu0 0
        %4664 = vmatpush1.bf16.xpose.msra.mxu0 0
        %4665 = vmatprep.subr.bf16.mxu0 0
        %4666 = vmatpush1.bf16.xpose.msra.mxu0 0
        %4667 = vmatprep.subr.bf16.mxu0 0
        %4668 = vmatpush1.bf16.xpose.msra.mxu0 0
        %4669 = vmatprep.subr.bf16.mxu0 0
        %4670 = vmatpush1.bf16.xpose.msra.mxu0 0
        %4671 = vmatprep.subr.bf16.mxu0 0
        %4672 = vmatpush1.bf16.xpose.msra.mxu0 0
        %4673 = vmatprep.subr.bf16.mxu0 0
        %4674 = vmatpush1.bf16.xpose.msra.mxu0 0
        %4675 = vmatprep.subr.bf16.mxu0 0
        %4676 = vmatpush1.bf16.xpose.msra.mxu0 0
        %4677 = vmatprep.subr.bf16.mxu0 0
        %4678 = vmatpush1.bf16.xpose.msra.mxu0 0
        %4679 = vmatprep.subr.bf16.mxu0 0
        %4680 = vmatpush1.bf16.xpose.msra.mxu0 0
        %4681 = vmatprep.mubr.bf16.mxu0 %v4396
        %4682 = vmatmul.mubr.bf16.gmra.mrb[0].mxu0 %v4395
        %v4683 = vpop.f32.mrb[0].mxu0
        %v4684 = vadd.f32 %v4643, %v4683
        %v4685 = vpop.f32.mrb[0].mxu0
        %v4686 = vpop.f32.mrb[0].mxu0
        %v4687 = vadd.f32 %v4646, %v4686
        %v4688 = vpop.f32.mrb[0].mxu0
        %4689 = vdwg.mxu0
        %4690 = vmatprep.subr.bf16.mxu0 %v4549
        %4691 = vmatpush1.bf16.xpose.msra.mxu0 %v4548
        %4692 = vmatprep.subr.bf16.mxu0 %v4565
        %4693 = vmatpush1.bf16.xpose.msra.mxu0 %v4564
        %4694 = vmatprep.subr.bf16.mxu0 0
        %4695 = vmatpush1.bf16.xpose.msra.mxu0 0
        %4696 = vmatprep.subr.bf16.mxu0 0
        %4697 = vmatpush1.bf16.xpose.msra.mxu0 0
        %4698 = vmatprep.subr.bf16.mxu0 0
        %4699 = vmatpush1.bf16.xpose.msra.mxu0 0
        %4700 = vmatprep.subr.bf16.mxu0 0
        %4701 = vmatpush1.bf16.xpose.msra.mxu0 0
        %4702 = vmatprep.subr.bf16.mxu0 0
        %4703 = vmatpush1.bf16.xpose.msra.mxu0 0
        %4704 = vmatprep.subr.bf16.mxu0 0
        %4705 = vmatpush1.bf16.xpose.msra.mxu0 0
        %4706 = vmatprep.subr.bf16.mxu0 0
        %4707 = vmatpush1.bf16.xpose.msra.mxu0 0
        %4708 = vmatprep.subr.bf16.mxu0 0
        %4709 = vmatpush1.bf16.xpose.msra.mxu0 0
        %4710 = vmatprep.subr.bf16.mxu0 0
        %4711 = vmatpush1.bf16.xpose.msra.mxu0 0
        %4712 = vmatprep.subr.bf16.mxu0 0
        %4713 = vmatpush1.bf16.xpose.msra.mxu0 0
        %4714 = vmatprep.subr.bf16.mxu0 0
        %4715 = vmatpush1.bf16.xpose.msra.mxu0 0
        %4716 = vmatprep.subr.bf16.mxu0 0
        %4717 = vmatpush1.bf16.xpose.msra.mxu0 0
        %4718 = vmatprep.subr.bf16.mxu0 0
        %4719 = vmatpush1.bf16.xpose.msra.mxu0 0
        %4720 = vmatprep.subr.bf16.mxu0 0
        %4721 = vmatpush1.bf16.xpose.msra.mxu0 0
        %4722 = vmatprep.mubr.bf16.mxu0 %v4398
        %4723 = vmatmul.mubr.bf16.gmra.mrb[0].mxu0 %v4397
        %v4724 = vpop.f32.mrb[0].mxu0
        %v4725 = vadd.f32 %v4684, %v4724
        %v4726 = vpop.f32.mrb[0].mxu0
        %v4727 = vpop.f32.mrb[0].mxu0
        %v4728 = vadd.f32 %v4687, %v4727
        %v4729 = vpop.f32.mrb[0].mxu0
        %4730 = vdwg.mxu0
        %4731 = vmatprep.subr.bf16.mxu0 %v4551
        %4732 = vmatpush1.bf16.xpose.msra.mxu0 %v4550
        %4733 = vmatprep.subr.bf16.mxu0 %v4567
        %4734 = vmatpush1.bf16.xpose.msra.mxu0 %v4566
        %4735 = vmatprep.subr.bf16.mxu0 0
        %4736 = vmatpush1.bf16.xpose.msra.mxu0 0
        %4737 = vmatprep.subr.bf16.mxu0 0
        %4738 = vmatpush1.bf16.xpose.msra.mxu0 0
        %4739 = vmatprep.subr.bf16.mxu0 0
        %4740 = vmatpush1.bf16.xpose.msra.mxu0 0
        %4741 = vmatprep.subr.bf16.mxu0 0
        %4742 = vmatpush1.bf16.xpose.msra.mxu0 0
        %4743 = vmatprep.subr.bf16.mxu0 0
        %4744 = vmatpush1.bf16.xpose.msra.mxu0 0
        %4745 = vmatprep.subr.bf16.mxu0 0
        %4746 = vmatpush1.bf16.xpose.msra.mxu0 0
        %4747 = vmatprep.subr.bf16.mxu0 0
        %4748 = vmatpush1.bf16.xpose.msra.mxu0 0
        %4749 = vmatprep.subr.bf16.mxu0 0
        %4750 = vmatpush1.bf16.xpose.msra.mxu0 0
        %4751 = vmatprep.subr.bf16.mxu0 0
        %4752 = vmatpush1.bf16.xpose.msra.mxu0 0
        %4753 = vmatprep.subr.bf16.mxu0 0
        %4754 = vmatpush1.bf16.xpose.msra.mxu0 0
        %4755 = vmatprep.subr.bf16.mxu0 0
        %4756 = vmatpush1.bf16.xpose.msra.mxu0 0
        %4757 = vmatprep.subr.bf16.mxu0 0
        %4758 = vmatpush1.bf16.xpose.msra.mxu0 0
        %4759 = vmatprep.subr.bf16.mxu0 0
        %4760 = vmatpush1.bf16.xpose.msra.mxu0 0
        %4761 = vmatprep.subr.bf16.mxu0 0
        %4762 = vmatpush1.bf16.xpose.msra.mxu0 0
        %4763 = vmatprep.mubr.bf16.mxu0 %v4400
        %4764 = vmatmul.mubr.bf16.gmra.mrb[0].mxu0 %v4399
        %v4765 = vpop.f32.mrb[0].mxu0
        %v4766 = vadd.f32 %v4725, %v4765
        %v4767 = vpop.f32.mrb[0].mxu0
        %v4768 = vpop.f32.mrb[0].mxu0
        %v4769 = vadd.f32 %v4728, %v4768
        %v4770 = vpop.f32.mrb[0].mxu0
        %4771 = vdwg.mxu0
        %4772 = vmatprep.subr.bf16.mxu0 %v4553
        %4773 = vmatpush1.bf16.xpose.msra.mxu0 %v4552
        %4774 = vmatprep.subr.bf16.mxu0 %v4569
        %4775 = vmatpush1.bf16.xpose.msra.mxu0 %v4568
        %4776 = vmatprep.subr.bf16.mxu0 0
        %4777 = vmatpush1.bf16.xpose.msra.mxu0 0
        %4778 = vmatprep.subr.bf16.mxu0 0
        %4779 = vmatpush1.bf16.xpose.msra.mxu0 0
        %4780 = vmatprep.subr.bf16.mxu0 0
        %4781 = vmatpush1.bf16.xpose.msra.mxu0 0
        %4782 = vmatprep.subr.bf16.mxu0 0
        %4783 = vmatpush1.bf16.xpose.msra.mxu0 0
        %4784 = vmatprep.subr.bf16.mxu0 0
        %4785 = vmatpush1.bf16.xpose.msra.mxu0 0
        %4786 = vmatprep.subr.bf16.mxu0 0
        %4787 = vmatpush1.bf16.xpose.msra.mxu0 0
        %4788 = vmatprep.subr.bf16.mxu0 0
        %4789 = vmatpush1.bf16.xpose.msra.mxu0 0
        %4790 = vmatprep.subr.bf16.mxu0 0
        %4791 = vmatpush1.bf16.xpose.msra.mxu0 0
        %4792 = vmatprep.subr.bf16.mxu0 0
        %4793 = vmatpush1.bf16.xpose.msra.mxu0 0
        %4794 = vmatprep.subr.bf16.mxu0 0
        %4795 = vmatpush1.bf16.xpose.msra.mxu0 0
        %4796 = vmatprep.subr.bf16.mxu0 0
        %4797 = vmatpush1.bf16.xpose.msra.mxu0 0
        %4798 = vmatprep.subr.bf16.mxu0 0
        %4799 = vmatpush1.bf16.xpose.msra.mxu0 0
        %4800 = vmatprep.subr.bf16.mxu0 0
        %4801 = vmatpush1.bf16.xpose.msra.mxu0 0
        %4802 = vmatprep.subr.bf16.mxu0 0
        %4803 = vmatpush1.bf16.xpose.msra.mxu0 0
        %4804 = vmatprep.mubr.bf16.mxu0 %v4402
        %4805 = vmatmul.mubr.bf16.gmra.mrb[0].mxu0 %v4401
        %v4806 = vpop.f32.mrb[0].mxu0
        %v4807 = vadd.f32 %v4766, %v4806
        %v4808 = vpop.f32.mrb[0].mxu0
        %v4809 = vpop.f32.mrb[0].mxu0
        %v4810 = vadd.f32 %v4769, %v4809
        %v4811 = vpop.f32.mrb[0].mxu0
        %4812 = vdwg.mxu0
        %4813 = vmatprep.subr.bf16.mxu0 %v4555
        %4814 = vmatpush1.bf16.xpose.msra.mxu0 %v4554
        %4815 = vmatprep.subr.bf16.mxu0 %v4571
        %4816 = vmatpush1.bf16.xpose.msra.mxu0 %v4570
        %4817 = vmatprep.subr.bf16.mxu0 0
        %4818 = vmatpush1.bf16.xpose.msra.mxu0 0
        %4819 = vmatprep.subr.bf16.mxu0 0
        %4820 = vmatpush1.bf16.xpose.msra.mxu0 0
        %4821 = vmatprep.subr.bf16.mxu0 0
        %4822 = vmatpush1.bf16.xpose.msra.mxu0 0
        %4823 = vmatprep.subr.bf16.mxu0 0
        %4824 = vmatpush1.bf16.xpose.msra.mxu0 0
        %4825 = vmatprep.subr.bf16.mxu0 0
        %4826 = vmatpush1.bf16.xpose.msra.mxu0 0
        %4827 = vmatprep.subr.bf16.mxu0 0
        %4828 = vmatpush1.bf16.xpose.msra.mxu0 0
        %4829 = vmatprep.subr.bf16.mxu0 0
        %4830 = vmatpush1.bf16.xpose.msra.mxu0 0
        %4831 = vmatprep.subr.bf16.mxu0 0
        %4832 = vmatpush1.bf16.xpose.msra.mxu0 0
        %4833 = vmatprep.subr.bf16.mxu0 0
        %4834 = vmatpush1.bf16.xpose.msra.mxu0 0
        %4835 = vmatprep.subr.bf16.mxu0 0
        %4836 = vmatpush1.bf16.xpose.msra.mxu0 0
        %4837 = vmatprep.subr.bf16.mxu0 0
        %4838 = vmatpush1.bf16.xpose.msra.mxu0 0
        %4839 = vmatprep.subr.bf16.mxu0 0
        %4840 = vmatpush1.bf16.xpose.msra.mxu0 0
        %4841 = vmatprep.subr.bf16.mxu0 0
        %4842 = vmatpush1.bf16.xpose.msra.mxu0 0
        %4843 = vmatprep.subr.bf16.mxu0 0
        %4844 = vmatpush1.bf16.xpose.msra.mxu0 0
        %4845 = vmatprep.mubr.bf16.mxu0 %v4404
        %4846 = vmatmul.mubr.bf16.gmra.mrb[0].mxu0 %v4403
        %v4847 = vpop.f32.mrb[0].mxu0
        %v4848 = vadd.f32 %v4807, %v4847
        %v4849 = vpop.f32.mrb[0].mxu0
        %v4850 = vpop.f32.mrb[0].mxu0
        %v4851 = vadd.f32 %v4810, %v4850
        %v4852 = vpop.f32.mrb[0].mxu0
        %4853 = vdwg.mxu0
        %4854 = vmatprep.subr.bf16.mxu0 %v4557
        %4855 = vmatpush1.bf16.xpose.msra.mxu0 %v4556
        %4856 = vmatprep.subr.bf16.mxu0 %v4573
        %4857 = vmatpush1.bf16.xpose.msra.mxu0 %v4572
        %4858 = vmatprep.subr.bf16.mxu0 0
        %4859 = vmatpush1.bf16.xpose.msra.mxu0 0
        %4860 = vmatprep.subr.bf16.mxu0 0
        %4861 = vmatpush1.bf16.xpose.msra.mxu0 0
        %4862 = vmatprep.subr.bf16.mxu0 0
        %4863 = vmatpush1.bf16.xpose.msra.mxu0 0
        %4864 = vmatprep.subr.bf16.mxu0 0
        %4865 = vmatpush1.bf16.xpose.msra.mxu0 0
        %4866 = vmatprep.subr.bf16.mxu0 0
        %4867 = vmatpush1.bf16.xpose.msra.mxu0 0
        %4868 = vmatprep.subr.bf16.mxu0 0
        %4869 = vmatpush1.bf16.xpose.msra.mxu0 0
        %4870 = vmatprep.subr.bf16.mxu0 0
        %4871 = vmatpush1.bf16.xpose.msra.mxu0 0
        %4872 = vmatprep.subr.bf16.mxu0 0
        %4873 = vmatpush1.bf16.xpose.msra.mxu0 0
        %4874 = vmatprep.subr.bf16.mxu0 0
        %4875 = vmatpush1.bf16.xpose.msra.mxu0 0
        %4876 = vmatprep.subr.bf16.mxu0 0
        %4877 = vmatpush1.bf16.xpose.msra.mxu0 0
        %4878 = vmatprep.subr.bf16.mxu0 0
        %4879 = vmatpush1.bf16.xpose.msra.mxu0 0
        %4880 = vmatprep.subr.bf16.mxu0 0
        %4881 = vmatpush1.bf16.xpose.msra.mxu0 0
        %4882 = vmatprep.subr.bf16.mxu0 0
        %4883 = vmatpush1.bf16.xpose.msra.mxu0 0
        %4884 = vmatprep.subr.bf16.mxu0 0
        %4885 = vmatpush1.bf16.xpose.msra.mxu0 0
        %4886 = vmatprep.mubr.bf16.mxu0 %v4406
        %4887 = vmatmul.mubr.bf16.gmra.mrb[0].mxu0 %v4405
        %v4888 = vpop.f32.mrb[0].mxu0
        %v4889 = vadd.f32 %v4848, %v4888
        %v4890 = vpop.f32.mrb[0].mxu0
        %v4891 = vpop.f32.mrb[0].mxu0
        %v4892 = vadd.f32 %v4851, %v4891
        %v4893 = vpop.f32.mrb[0].mxu0
        %4894 = vdwg.mxu0
        %4895 = vmatprep.subr.bf16.mxu0 %v4559
        %4896 = vmatpush1.bf16.xpose.msra.mxu0 %v4558
        %4897 = vmatprep.subr.bf16.mxu0 %v4575
        %4898 = vmatpush1.bf16.xpose.msra.mxu0 %v4574
        %4899 = vmatprep.subr.bf16.mxu0 0
        %4900 = vmatpush1.bf16.xpose.msra.mxu0 0
        %4901 = vmatprep.subr.bf16.mxu0 0
        %4902 = vmatpush1.bf16.xpose.msra.mxu0 0
        %4903 = vmatprep.subr.bf16.mxu0 0
        %4904 = vmatpush1.bf16.xpose.msra.mxu0 0
        %4905 = vmatprep.subr.bf16.mxu0 0
        %4906 = vmatpush1.bf16.xpose.msra.mxu0 0
        %4907 = vmatprep.subr.bf16.mxu0 0
        %4908 = vmatpush1.bf16.xpose.msra.mxu0 0
        %4909 = vmatprep.subr.bf16.mxu0 0
        %4910 = vmatpush1.bf16.xpose.msra.mxu0 0
        %4911 = vmatprep.subr.bf16.mxu0 0
        %4912 = vmatpush1.bf16.xpose.msra.mxu0 0
        %4913 = vmatprep.subr.bf16.mxu0 0
        %4914 = vmatpush1.bf16.xpose.msra.mxu0 0
        %4915 = vmatprep.subr.bf16.mxu0 0
        %4916 = vmatpush1.bf16.xpose.msra.mxu0 0
        %4917 = vmatprep.subr.bf16.mxu0 0
        %4918 = vmatpush1.bf16.xpose.msra.mxu0 0
        %4919 = vmatprep.subr.bf16.mxu0 0
        %4920 = vmatpush1.bf16.xpose.msra.mxu0 0
        %4921 = vmatprep.subr.bf16.mxu0 0
        %4922 = vmatpush1.bf16.xpose.msra.mxu0 0
        %4923 = vmatprep.subr.bf16.mxu0 0
        %4924 = vmatpush1.bf16.xpose.msra.mxu0 0
        %4925 = vmatprep.subr.bf16.mxu0 0
        %4926 = vmatpush1.bf16.xpose.msra.mxu0 0
        %4927 = vmatprep.mubr.bf16.mxu0 %v4408
        %4928 = vmatmul.mubr.bf16.gmra.mrb[0].mxu0 %v4407
        %v4929 = vpop.f32.mrb[0].mxu0
        %v4930 = vadd.f32 %v4889, %v4929
        %v4931 = vpop.f32.mrb[0].mxu0
        %v4932 = vpop.f32.mrb[0].mxu0
        %v4933 = vadd.f32 %v4892, %v4932
        %v4934 = vpop.f32.mrb[0].mxu0
        %4935 = vdwg.mxu0
        %v4936 = vadd.f32 %v2647, %v4930
        %v4937 = vadd.f32 %v2648, %v4933
        %v4938 = vld [vmem:[%s719] sm:$0x1]
        %v4939 = vld [vmem:[%s722] sm:$0x1]
        %v4940 = vsel %vm886, %v4936, 0.0
        %4941 = vadd.xlane.f32.xlu0 %v4940
        %v4942 = vpop.xlane.xlu0 %4941
        %v4943 = vsel %vm886, %v4937, 0.0
        %4944 = vadd.xlane.f32.xlu0 %v4943
        %v4945 = vpop.xlane.xlu0 %4944
        %v4946 = vmul.f32 %v4942, %v2612
        %v4947 = vmul.f32 %v4945, %v2612
        %v4948 = vsub.f32 %v4936, %v4946
        %v4949 = vsub.f32 %v4937, %v4947
        %v4950 = vmul.f32 %v4948, %v4948
        %v4951 = vmul.f32 %v4949, %v4949
        %v4952 = vsel %vm886, %v4950, 0.0
        %4953 = vadd.xlane.f32.xlu0 %v4952
        %v4954 = vpop.xlane.xlu0 %4953
        %v4955 = vsel %vm886, %v4951, 0.0
        %4956 = vadd.xlane.f32.xlu0 %v4955
        %v4957 = vpop.xlane.xlu0 %4956
        %v4958 = vmul.f32 %v4954, %v2612
        %v4959 = vmul.f32 %v4957, %v2612
        %v4960 = vadd.f32 %v4958, 1e-05
        %v4961 = vadd.f32 %v4959, 1e-05
        %v4962 = vrsqrt.pop %v4960
        %v4963 = vrsqrt.pop %v4961
        %v4964 = vmul.f32 %v4948, %v4962
        %v4965 = vmul.f32 %v4949, %v4963
        %v4967 = vlaneseq
        %v4968 = vshrl.u32 %v4967, 7
        %v4969 = vsub.s32 0, %v4968
        %v4970 = vrot.slane %v4938, %v4969
        %v4972 = vmul.f32 %v4964, %v4970
        %v4973 = vmul.f32 %v4965, %v4970
        %v4975 = vlaneseq
        %v4976 = vshrl.u32 %v4975, 7
        %v4977 = vsub.s32 0, %v4976
        %v4978 = vrot.slane %v4939, %v4977
        %v4980 = vadd.f32 %v4972, %v4978
        %v4981 = vadd.f32 %v4973, %v4978
        %4982 = vst.msk [vmem:[#allocation2] sm:$0xff] %vm886, %v4980
        %4983 = vst.msk [vmem:[#allocation2 + $0x8] sm:$0xff] %vm886, %v4981
        %p4984 = scmp.eq.s32.totalorder %s30, 1
        // Predicated region
        $region97: #{tpu_custom_call.1} parent=91 // pred_check
          %p4985 = pneg %p4984
        $region98: #{tpu_custom_call.1} parent=91 // pred_check_branch
          %4987 = sbr.rel (%p4985) target = $region100
        $region99: #{tpu_custom_call.1} parent=91 // pred_region
          %v4988 = vld [vmem:[#allocation2 + $0x7] sm:$0x1]
          %v4989 = vld [vmem:[#allocation2 + $0xf] sm:$0x1]
          %v4990 = vpack.c.bf16 %v4988, %v4988
          %v4991 = vpack.c.bf16 %v4989, %v4989
          %v4992 = vld [vmem:[%s16] sm:$0x3]
          %v4993 = vld [vmem:[%s17] sm:$0x1]
          %v4995 = vlaneseq
          %v4996 = vshrl.u32 %v4995, 7
          %v4997 = vsub.s32 0, %v4996
          %v4998 = vrot.slane %v4993, %v4997
          %v5002 = vunpack.c.l.b16 %v4990
          %v5003 = vunpack.c.l.b16 %v4991
          %v5004 = vrot.slane %v5003, 7
          %vm5005 = vcmask 1041409
          %v5006 = vsel %vm5005, %v5004, %v5002
          %v5007 = vpack.c.b16 %v5006, %v5006
          %v5009 = vsel %vm886, %v5007, 0
          %v5012 = vsel %vm886, %v4992, 0
          %5014 = vmatprep.subr.bf16.mxu0 0
          %5015 = vmatpush1.bf16.xpose.msra.mxu0 %v5012
          %5016 = vmatprep.subr.bf16.mxu0 0
          %5017 = vmatpush1.bf16.xpose.msra.mxu0 0
          %5018 = vmatprep.subr.bf16.mxu0 0
          %5019 = vmatpush1.bf16.xpose.msra.mxu0 0
          %5020 = vmatprep.subr.bf16.mxu0 0
          %5021 = vmatpush1.bf16.xpose.msra.mxu0 0
          %5022 = vmatprep.subr.bf16.mxu0 0
          %5023 = vmatpush1.bf16.xpose.msra.mxu0 0
          %5024 = vmatprep.subr.bf16.mxu0 0
          %5025 = vmatpush1.bf16.xpose.msra.mxu0 0
          %5026 = vmatprep.subr.bf16.mxu0 0
          %5027 = vmatpush1.bf16.xpose.msra.mxu0 0
          %5028 = vmatprep.subr.bf16.mxu0 0
          %5029 = vmatpush1.bf16.xpose.msra.mxu0 0
          %5030 = vmatprep.subr.bf16.mxu0 0
          %5031 = vmatpush1.bf16.xpose.msra.mxu0 0
          %5032 = vmatprep.subr.bf16.mxu0 0
          %5033 = vmatpush1.bf16.xpose.msra.mxu0 0
          %5034 = vmatprep.subr.bf16.mxu0 0
          %5035 = vmatpush1.bf16.xpose.msra.mxu0 0
          %5036 = vmatprep.subr.bf16.mxu0 0
          %5037 = vmatpush1.bf16.xpose.msra.mxu0 0
          %5038 = vmatprep.subr.bf16.mxu0 0
          %5039 = vmatpush1.bf16.xpose.msra.mxu0 0
          %5040 = vmatprep.subr.bf16.mxu0 0
          %5041 = vmatpush1.bf16.xpose.msra.mxu0 0
          %5042 = vmatprep.subr.bf16.mxu0 0
          %5043 = vmatpush1.bf16.xpose.msra.mxu0 0
          %5044 = vmatprep.subr.bf16.mxu0 0
          %5045 = vmatpush1.bf16.xpose.msra.mxu0 0
          %5046 = vmatprep.mubr.bf16.mxu0 0
          %5047 = vmatmul.mubr.bf16.gmra.mrb[0].mxu0 %v5009
          %v5048 = vpop.f32.mrb[0].mxu0
          %v5049 = vadd.f32 %v4998, %v5048
          %v5050 = vpop.f32.mrb[0].mxu0
          %v5051 = vpop.f32.mrb[0].mxu0
          %v5052 = vpop.f32.mrb[0].mxu0
          %5053 = vdwg.mxu0
          %vm5054 = vcmask 25600
          %5055 = vst.msk [vmem:[#allocation3] sm:$0x3] %vm5054, %v5049
        $region100: #{tpu_custom_call.1} parent=91 // pred_fallthru
          _
        // Predicated region
        $region101: #{tpu_custom_call.1} parent=91 // pred_check
          %p5056 = pneg %p481
        $region102: #{tpu_custom_call.1} parent=91 // pred_check_branch
          %5058 = sbr.rel (%p5056) target = $region104
        $region103: #{tpu_custom_call.1} parent=91 // pred_region
          %s5060 = ssub.s32 32, 32
          %5061 = vsyncadd [#allocation4], %s5060
          %s5063 = sshll.u32 [#allocation3], 4
          %s5064 = int_to_ptr.vmem [resolvable:$true] %s5063
          %5066 = dma.vmem_to_hbm [thread:$0]  %s5064, 32, %s18, [#allocation4]
        $region104: #{tpu_custom_call.1} parent=91 // pred_fallthru
          _
        // Predicated region
        $region105: #{tpu_custom_call.1} parent=91 // pred_check
          %p5067 = pneg %p481
        $region106: #{tpu_custom_call.1} parent=91 // pred_check_branch
          %5069 = sbr.rel (%p5067) target = $region108
        $region107: #{tpu_custom_call.1} parent=91 // pred_region
          %5070 = dma.done [#allocation4], 32
        $region108: #{tpu_custom_call.1} parent=91 // pred_fallthru
          _
      $region92: #{tpu_custom_call.1} parent=5 // pred_fallthru
        _
      %p5071 = scmp.le.s32.totalorder 2, %s25
      // Predicated region
      $region109: #{tpu_custom_call.1} parent=5 // pred_check
        %p5072 = pneg %p5071
      $region110: #{tpu_custom_call.1} parent=5 // pred_check_branch
        %5074 = sbr.rel (%p5072) target = $region112
      $region111: #{tpu_custom_call.1} parent=5 // pred_region
        %s5075 = ssub.s32 %s25, 2
      $region112: #{tpu_custom_call.1} parent=5 // pred_fallthru
        _
    $region6: #{tpu_custom_call.1} parent=1 // loop_footer
      %s29 = sadd.s32 1, %s25
    $region7: #{tpu_custom_call.1} parent=1 // loop_footer_branch
      %24 = sbr.rel target = $region3
    $region8: #{tpu_custom_call.1} parent=1 // loop_exit
      _
    %5076 = vsyncpa [#allocation4], 1
    %s5077 = scalar_lea.sflag [#allocation4], 1
    %5078 = vsyncpa %s5077, 1

</llo_original>
